<compile_context>
chip_gen: v7x
topology: tpu7x:2x2x1
jax: 0.10.0
libtpu: 0.0.40
codegen_flags: <defaults>
</compile_context>

<pallas_src>
import functools

import numpy as np
import jax
import jax.numpy as jnp
from jax.experimental import pallas as pl
from jax.experimental.pallas import tpu as pltpu


USE_BF16_MXU = True          # bf16 MXU operands + bf16 intermediates, f32 accumulation
LANE = 128                   # feature dims padded to multiples of this
_VMEM_CAP = 48 * 1024 * 1024  # stay under v7x's 64 MiB physical VMEM
_XW_RESIDENT_BUDGET = 20 * 1024 * 1024


def _round_up(n, m):
    return (n + m - 1) // m * m


def _isz(dt):
    return int(np.dtype(dt).itemsize)


def _vmem_limit(bytes_needed):
    """Per-call VMEM limit: actual tile footprint + headroom, capped for v7x."""
    return int(min(max(int(bytes_needed * 1.25) + (2 << 20), 16 << 20), _VMEM_CAP))


def _choose_tiles(n):
    """Return (n_pad, tile_m, tile_k) for the node dimension."""
    if n <= 1024:
        # Small graphs: two row tiles (both TCs busy on v7x), one k step.
        n_pad = _round_up(max(n, 16), 16)
        return n_pad, n_pad // 2, n_pad
    n_pad = _round_up(n, 512)
    return n_pad, 512, 512


def _divisor_tile(n, candidates):
    for c in candidates:
        if c <= n and n % c == 0:
            return c
    return n


# ----------------------------------------------------------------------------
# Kernel 1: scaled feature transform   XW_s = d_inv_sqrt * (X @ W)
#   X may be a column sub-block of a wider activation (x_col_block).
# ----------------------------------------------------------------------------
def _linear_scale_kernel(x_ref, w_ref, d_ref, o_ref):
    xw = jnp.dot(x_ref[...], w_ref[...], preferred_element_type=jnp.float32)
    o_ref[...] = (d_ref[...] * xw).astype(o_ref.dtype)


def linear_scaled(x, w, d, *, tile_m, out_dtype, x_col_block=0):
    n_pad = x.shape[0]
    fin, fout = w.shape
    ni = n_pad // tile_m
    flops = 2 * n_pad * fin * fout
    bytes_accessed = (n_pad * fin * _isz(x.dtype) + w.size * _isz(w.dtype)
                      + n_pad * fout * _isz(out_dtype) + n_pad * 4)
    vmem = _vmem_limit(
        2 * tile_m * fin * _isz(x.dtype)
        + 2 * w.size * _isz(w.dtype)
        + 2 * tile_m * fout * _isz(out_dtype)
        + 2 * tile_m * 4)
    return pl.pallas_call(
        _linear_scale_kernel,
        out_shape=jax.ShapeDtypeStruct((n_pad, fout), out_dtype),
        grid_spec=pltpu.PrefetchScalarGridSpec(
            num_scalar_prefetch=0,
            grid=(ni,),
            in_specs=[
                pl.BlockSpec((tile_m, fin), lambda i: (i, x_col_block)),
                pl.BlockSpec((fin, fout), lambda i: (0, 0)),
                pl.BlockSpec((tile_m, 1), lambda i: (i, 0)),
            ],
            out_specs=pl.BlockSpec((tile_m, fout), lambda i: (i, 0)),
        ),
        compiler_params=pltpu.CompilerParams(
            dimension_semantics=("parallel",),
            vmem_limit_bytes=vmem,
        ),
        cost_estimate=pl.CostEstimate(flops=flops, transcendentals=0,
                                      bytes_accessed=bytes_accessed),
    )(x, w, d)


# ----------------------------------------------------------------------------
# Kernel 2: propagate   Y = relu?( d_inv_sqrt * (A_plus_I @ XW_s) + b )
# Grid (i: output row tiles [parallel], k: node contraction [arbitrary]).
# XW is either VMEM-resident (constant index_map, sliced in-kernel) or
# streamed in (TILE_K, fout) blocks when it doesn't fit.
# ----------------------------------------------------------------------------
def _propagate_resident_kernel(a_ref, xw_ref, d_ref, b_ref, o_ref, acc_ref,
                               *, relu, tile_k):
    k = pl.program_id(1)

    @pl.when(k == 0)
    def _():
        acc_ref[...] = jnp.zeros_like(acc_ref)

    start = pl.multiple_of(k * tile_k, tile_k)
    xw = xw_ref[pl.ds(start, tile_k), :]
    acc_ref[...] += jnp.dot(a_ref[...], xw, preferred_element_type=jnp.float32)

    @pl.when(k == pl.num_programs(1) - 1)
    def _():
        y = d_ref[...] * acc_ref[...] + b_ref[...]
        if relu:
            y = jnp.maximum(y, 0.0)
        o_ref[...] = y.astype(o_ref.dtype)


def _propagate_stream_kernel(a_ref, xw_ref, d_ref, b_ref, o_ref, acc_ref, *, relu):
    @pl.when(pl.program_id(1) == 0)
    def _():
        acc_ref[...] = jnp.zeros_like(acc_ref)

    acc_ref[...] += jnp.dot(a_ref[...], xw_ref[...],
                            preferred_element_type=jnp.float32)

    @pl.when(pl.program_id(1) == pl.num_programs(1) - 1)
    def _():
        y = d_ref[...] * acc_ref[...] + b_ref[...]
        if relu:
            y = jnp.maximum(y, 0.0)
        o_ref[...] = y.astype(o_ref.dtype)


def propagate(a, xw, d, b, *, relu, tile_m, tile_k, out_dtype):
    n_pad = a.shape[0]
    fout = xw.shape[1]
    ni = n_pad // tile_m
    nk = n_pad // tile_k
    xw_isz = _isz(xw.dtype)

    resident = (2 * n_pad * fout * xw_isz) <= _XW_RESIDENT_BUDGET
    if resident:
        xw_spec = pl.BlockSpec((n_pad, fout), lambda i, k: (0, 0))
        kernel = functools.partial(_propagate_resident_kernel,
                                   relu=relu, tile_k=tile_k)
        xw_vmem = 2 * n_pad * fout * xw_isz
        xw_hbm = n_pad * fout * xw_isz
    else:
        xw_spec = pl.BlockSpec((tile_k, fout), lambda i, k: (k, 0))
        kernel = functools.partial(_propagate_stream_kernel, relu=relu)
        xw_vmem = 2 * tile_k * fout * xw_isz
        xw_hbm = ni * n_pad * fout * xw_isz

    flops = 2 * n_pad * n_pad * fout
    bytes_accessed = (n_pad * n_pad * _isz(a.dtype) + xw_hbm
                      + n_pad * fout * _isz(out_dtype) + n_pad * 4 + fout * 4)
    vmem = _vmem_limit(
        2 * tile_m * tile_k * _isz(a.dtype)          # A double buffer
        + xw_vmem                                     # XW (resident or streamed)
        + 2 * tile_m * fout * _isz(out_dtype)         # output double buffer
        + tile_m * fout * 4                           # f32 accumulator
        + 2 * tile_m * 4 + 2 * fout * 4)              # d, bias
    return pl.pallas_call(
        kernel,
        out_shape=jax.ShapeDtypeStruct((n_pad, fout), out_dtype),
        grid_spec=pltpu.PrefetchScalarGridSpec(
            num_scalar_prefetch=0,
            grid=(ni, nk),
            in_specs=[
                pl.BlockSpec((tile_m, tile_k), lambda i, k: (i, k)),   # A tile
                xw_spec,                                               # XW
                pl.BlockSpec((tile_m, 1), lambda i, k: (i, 0)),        # d rows
                pl.BlockSpec((1, fout), lambda i, k: (0, 0)),          # bias
            ],
            out_specs=pl.BlockSpec((tile_m, fout), lambda i, k: (i, 0)),
            scratch_shapes=[pltpu.VMEM((tile_m, fout), jnp.float32)],
        ),
        compiler_params=pltpu.CompilerParams(
            dimension_semantics=("parallel", "arbitrary"),
            vmem_limit_bytes=vmem,
        ),
        cost_estimate=pl.CostEstimate(flops=flops, transcendentals=0,
                                      bytes_accessed=bytes_accessed),
    )(a, xw, d, b)


# ----------------------------------------------------------------------------
# Kernel 3: structure decoder output  A_hat = Zs Zs^T
# Zs is read as a column sub-block (col_block) of the fused activation, so no
# HBM slice copy is materialized.  dot_general contracts dim 1 of both
# operands (no explicit transpose).
# ----------------------------------------------------------------------------
def _zzt_kernel(zi_ref, zj_ref, o_ref):
    o_ref[...] = jax.lax.dot_general(
        zi_ref[...], zj_ref[...],
        dimension_numbers=(((1,), (1,)), ((), ())),
        preferred_element_type=jnp.float32,
    ).astype(o_ref.dtype)


def zzt(z_src, *, feat, col_block, tile_i, tile_j, out_dtype=jnp.float32):
    n_pad = z_src.shape[0]
    ni = n_pad // tile_i
    nj = n_pad // tile_j
    z_isz = _isz(z_src.dtype)
    flops = 2 * n_pad * n_pad * feat
    bytes_accessed = ((ni + nj) * n_pad * feat * z_isz
                      + n_pad * n_pad * _isz(out_dtype))
    vmem = _vmem_limit(2 * (tile_i + tile_j) * feat * z_isz
                       + 2 * tile_i * tile_j * _isz(out_dtype))
    return pl.pallas_call(
        _zzt_kernel,
        out_shape=jax.ShapeDtypeStruct((n_pad, n_pad), out_dtype),
        grid_spec=pltpu.PrefetchScalarGridSpec(
            num_scalar_prefetch=0,
            grid=(ni, nj),
            in_specs=[
                pl.BlockSpec((tile_i, feat), lambda i, j: (i, col_block)),
                pl.BlockSpec((tile_j, feat), lambda i, j: (j, col_block)),
            ],
            out_specs=pl.BlockSpec((tile_i, tile_j), lambda i, j: (i, j)),
        ),
        compiler_params=pltpu.CompilerParams(
            dimension_semantics=("parallel", "parallel"),
            vmem_limit_bytes=vmem,
        ),
        cost_estimate=pl.CostEstimate(flops=flops, transcendentals=0,
                                      bytes_accessed=bytes_accessed),
    )(z_src, z_src)


# ----------------------------------------------------------------------------
# Wrapper: GraphAutoencoder forward
# ----------------------------------------------------------------------------
def graph_autoencoder_forward(x, edge_index, params):
    """x: [N, Fin] float32, edge_index: [2, E] int32, params: dict of W/b."""
    N, Fin = x.shape
    f32 = jnp.float32
    bf16 = jnp.bfloat16
    mxu_dtype = bf16 if USE_BF16_MXU else f32   # MXU operands / intermediates

    n_pad, tm, tk = _choose_tiles(N)
    fin_pad = _round_up(Fin, LANE)

    # ---- graph glue (PyG gcn_norm semantics: duplicate edges sum, self loops
    #      added only for nodes lacking one).  Degrees via segment-sums so no
    #      dense f32 A is ever materialized; A+I is built directly in bf16
    #      (exact while summed duplicate-edge multiplicity <= 256). ----
    src = edge_index[0].astype(jnp.int32)
    dst = edge_index[1].astype(jnp.int32)
    num_e = src.shape[0]
    ones_e = jnp.ones((num_e,), f32)
    deg_edges = jnp.zeros((n_pad,), f32).at[dst].add(ones_e)
    self_cnt = jnp.zeros((n_pad,), f32).at[dst].add(
        jnp.where(src == dst, 1.0, 0.0))
    idx = jnp.arange(n_pad)
    need_self = (self_cnt == 0.0) & (idx < N)
    deg = deg_edges + need_self.astype(f32)
    d_inv_sqrt = jnp.where(deg > 0.0, jax.lax.rsqrt(jnp.maximum(deg, 1.0e-12)), 0.0)
    d = d_inv_sqrt.reshape(n_pad, 1).astype(f32)

    a = jnp.zeros((n_pad, n_pad), mxu_dtype).at[dst, src].add(
        jnp.ones((num_e,), mxu_dtype))
    a = a.at[idx, idx].add(need_self.astype(mxu_dtype))

    # ---- zero-pad features / weights / biases to lane-dense shapes ----
    def pad2(w, r, c, dt):
        w = w.astype(f32)
        out = jnp.zeros((r, c), f32).at[: w.shape[0], : w.shape[1]].set(w)
        return out.astype(dt)

    x_pad = pad2(x, n_pad, fin_pad, mxu_dtype)
    w1 = pad2(params["w1"], fin_pad, 128, mxu_dtype); b1 = pad2(params["b1"], 1, 128, f32)
    w2 = pad2(params["w2"], 128, 128, mxu_dtype);     b2 = pad2(params["b2"], 1, 128, f32)
    w4 = pad2(params["w4"], 128, fin_pad, mxu_dtype); b4 = pad2(params["b4"], 1, fin_pad, f32)
    # Fused z-consumers: attr_decoder.conv1 (64->128) || struct_decoder.conv (64->64)
    w3 = pad2(params["w3"], 128, 128, mxu_dtype);     b3 = pad2(params["b3"], 1, 128, f32)
    w5 = pad2(params["w5"], 128, 128, mxu_dtype);     b5 = pad2(params["b5"], 1, 128, f32)
    w35 = jnp.concatenate([w3, w5], axis=1)            # (128, 256)
    b35 = jnp.concatenate([b3, b5], axis=1)            # (1, 256)

    def gcn(h, w, b, relu, out_dtype, x_col_block=0):
        xw = linear_scaled(h, w, d, tile_m=tm, out_dtype=mxu_dtype,
                           x_col_block=x_col_block)
        return propagate(a, xw, d, b, relu=relu, tile_m=tm, tile_k=tk,
                         out_dtype=out_dtype)

    # ---- Encoder: in_dim -> 128 -> relu -> 64 -> relu ----
    h1 = gcn(x_pad, w1, b1, True, mxu_dtype)
    z = gcn(h1, w2, b2, True, mxu_dtype)

    # ---- Fused attr_decoder.conv1 + struct_decoder.conv: one pass over A ----
    # cols [0:128] = relu(GCN(z; w3)), cols [128:256] = relu(GCN(z; w5))
    h2zs = gcn(z, w35, b35, True, mxu_dtype)

    # ---- Attribute decoder tail: 128 -> in_dim (no relu), f32 output ----
    x_hat = gcn(h2zs, w4, b4, False, f32, x_col_block=0)

    # ---- Structure decoder tail: A_hat = Zs Zs^T (column block 1 of h2zs) ----
    tj = _divisor_tile(n_pad, (512, 256, 128))
    a_hat = zzt(h2zs, feat=128, col_block=1, tile_i=tm, tile_j=tj,
                out_dtype=f32)

    z_out = z[:N, :64].astype(f32)
    return x_hat[:N, :Fin], a_hat[:N, :N], z_out


# ----------------------------------------------------------------------------
# Deterministic parameter init (glorot-uniform-ish, zero bias)
# ----------------------------------------------------------------------------
def init_params(in_dim, key):
    dims = [
        ("w1", "b1", in_dim, 128),   # encoder.conv1
        ("w2", "b2", 128, 64),       # encoder.conv2
        ("w3", "b3", 64, 128),       # attr_decoder.conv1
        ("w4", "b4", 128, in_dim),   # attr_decoder.conv2
        ("w5", "b5", 64, 64),        # struct_decoder.conv
    ]
    params = {}
    keys = jax.random.split(key, len(dims))
    for k, (wn, bn, fin, fout) in zip(keys, dims):
        limit = jnp.sqrt(6.0 / (fin + fout))
        params[wn] = jax.random.uniform(
            k, (fin, fout), jnp.float32, minval=-limit, maxval=limit
        )
        params[bn] = jnp.zeros((1, fout), jnp.float32)
    return params


if __name__ == "__main__":
    N = 8        # number of graph nodes
    IN_DIM = 16  # node feature dimension
    E = 16       # number of edges

    key = jax.random.PRNGKey(0)
    k_x, k_src, k_dst, k_params = jax.random.split(key, 4)

    x = jax.random.normal(k_x, (N, IN_DIM), jnp.float32)
    src = jax.random.randint(k_src, (E,), 0, N, jnp.int32)
    dst = jax.random.randint(k_dst, (E,), 0, N, jnp.int32)
    edge_index = jnp.stack([src, dst], axis=0)

    params = init_params(IN_DIM, k_params)

    fwd = jax.jit(functools.partial(graph_autoencoder_forward, params=params))
    x_hat, a_hat, z = fwd(x, edge_index)
    jax.block_until_ready((x_hat, a_hat, z))

    assert x_hat.shape == (N, IN_DIM) and x_hat.dtype == jnp.float32
    assert a_hat.shape == (N, N) and a_hat.dtype == jnp.float32
    assert z.shape == (N, 64) and z.dtype == jnp.float32

    print("KERNEL_OK")
</pallas_src>

<mosaic_0001>
module attributes {stable_mosaic.version = 11 : i64} {
  func.func private @main(%arg0: i32) attributes {dimension_semantics = [#tpu.dimension_semantics<core_parallel>], iteration_bounds = array<i64: 2>, tpu.core_type = #tpu.core_type<sc_scalar_subcore>, window_params = []} {
    return
  }
}

module attributes {stable_mosaic.version = 11 : i64} {
  func.func private @main(%arg0: i32) attributes {dimension_semantics = [#tpu.dimension_semantics<core_parallel>], iteration_bounds = array<i64: 2>, tpu.core_type = #tpu.core_type<sc_scalar_subcore>, window_params = []} {
    return
  }
}

module attributes {stable_mosaic.version = 11 : i64} {
  func.func @_propagate_resident_kernel(%arg0: i32, %arg1: i32, %arg2: memref<8x16xbf16, #tpu.memory_space<vmem>>, %arg3: memref<16x128xbf16, #tpu.memory_space<vmem>>, %arg4: memref<8x1xf32, #tpu.memory_space<vmem>>, %arg5: memref<1x128xf32, #tpu.memory_space<vmem>>, %arg6: memref<8x128xbf16, #tpu.memory_space<vmem>>, %arg7: memref<8x128xf32, #tpu.memory_space<vmem>>) attributes {dimension_semantics = [#tpu.dimension_semantics<parallel>, #tpu.dimension_semantics<arbitrary>], iteration_bounds = array<i64: 2, 1>, scalar_prefetch = 0 : i64, scratch_operands = 1 : i64, tpu.core_type = #tpu.core_type<tc>, window_params = [{transform_indices = @transform_0, window_bounds = array<i64: 8, 16>}, {pipeline_mode = #tpu.pipeline_mode<synchronous>, transform_indices = @transform_1, window_bounds = array<i64: 16, 128>}, {transform_indices = @transform_2, window_bounds = array<i64: 8, 1>}, {pipeline_mode = #tpu.pipeline_mode<synchronous>, transform_indices = @transform_3, window_bounds = array<i64: 1, 128>}, {transform_indices = @transform_4, window_bounds = array<i64: 8, 128>}]} {
    %c0_i32 = arith.constant 0 : i32
    %0 = arith.cmpi eq, %arg1, %c0_i32 : i32
    %1 = arith.extui %0 : i1 to i32
    %c0_i32_0 = arith.constant 0 : i32
    %2 = arith.cmpi ne, %1, %c0_i32_0 : i32
    scf.if %2 {
      %cst_9 = arith.constant 0.000000e+00 : f32
      %15 = vector.broadcast %cst_9 : f32 to vector<8x128xf32>
      %c0_10 = arith.constant 0 : index
      %c0_11 = arith.constant 0 : index
      %16 = vector.load %arg7[%c0_10, %c0_11] : memref<8x128xf32, #tpu.memory_space<vmem>>, vector<8x128xf32>
      tpu.vector_store %arg7[%c0_10, %c0_11], %15 {strides = array<i32>} : memref<8x128xf32, #tpu.memory_space<vmem>>, vector<8x128xf32>,
    } else {
    }
    %c16_i32 = arith.constant 16 : i32
    %3 = arith.muli %arg1, %c16_i32 : i32
    %4 = tpu.assume_multiple %3, 16 : i32
    %5 = arith.index_cast %4 : i32 to index
    %c0 = arith.constant 0 : index
    %6 = vector.load %arg3[%5, %c0] : memref<16x128xbf16, #tpu.memory_space<vmem>>, vector<16x128xbf16>
    %c0_1 = arith.constant 0 : index
    %c0_2 = arith.constant 0 : index
    %7 = vector.load %arg7[%c0_1, %c0_2] : memref<8x128xf32, #tpu.memory_space<vmem>>, vector<8x128xf32>
    %c0_3 = arith.constant 0 : index
    %c0_4 = arith.constant 0 : index
    %8 = vector.load %arg2[%c0_3, %c0_4] : memref<8x16xbf16, #tpu.memory_space<vmem>>, vector<8x16xbf16>
    %cst = arith.constant dense<0.000000e+00> : vector<8x128xf32>
    %9 = tpu.matmul %8, %6, %cst {dimension_numbers = #tpu.dot_dimension_numbers<[1], [0], [0], [1], [0, 0, 1, 1], [], []>} : vector<8x16xbf16>, vector<16x128xbf16>, vector<8x128xf32> -> vector<8x128xf32>
    %10 = arith.addf %7, %9 : vector<8x128xf32>
    %c0_5 = arith.constant 0 : index
    %c0_6 = arith.constant 0 : index
    %11 = vector.load %arg7[%c0_5, %c0_6] : memref<8x128xf32, #tpu.memory_space<vmem>>, vector<8x128xf32>
    tpu.vector_store %arg7[%c0_5, %c0_6], %10 {strides = array<i32>} : memref<8x128xf32, #tpu.memory_space<vmem>>, vector<8x128xf32>,
    %c0_i32_7 = arith.constant 0 : i32
    %12 = arith.cmpi eq, %arg1, %c0_i32_7 : i32
    %13 = arith.extui %12 : i1 to i32
    %c0_i32_8 = arith.constant 0 : i32
    %14 = arith.cmpi ne, %13, %c0_i32_8 : i32
    scf.if %14 {
      %c0_9 = arith.constant 0 : index
      %c0_10 = arith.constant 0 : index
      %15 = vector.load %arg4[%c0_9, %c0_10] : memref<8x1xf32, #tpu.memory_space<vmem>>, vector<8x1xf32>
      %c0_11 = arith.constant 0 : index
      %c0_12 = arith.constant 0 : index
      %16 = vector.load %arg7[%c0_11, %c0_12] : memref<8x128xf32, #tpu.memory_space<vmem>>, vector<8x128xf32>
      %17 = vector.broadcast %15 : vector<8x1xf32> to vector<8x128xf32>
      %18 = arith.mulf %17, %16 : vector<8x128xf32>
      %c0_13 = arith.constant 0 : index
      %c0_14 = arith.constant 0 : index
      %19 = vector.load %arg5[%c0_13, %c0_14] : memref<1x128xf32, #tpu.memory_space<vmem>>, vector<1x128xf32>
      %20 = vector.broadcast %19 : vector<1x128xf32> to vector<8x128xf32>
      %21 = arith.addf %18, %20 : vector<8x128xf32>
      %cst_15 = arith.constant 0.000000e+00 : f32
      %22 = vector.broadcast %cst_15 : f32 to vector<8x128xf32>
      %23 = arith.maximumf %21, %22 : vector<8x128xf32>
      %24 = arith.truncf %23 : vector<8x128xf32> to vector<8x128xbf16>
      %c0_16 = arith.constant 0 : index
      %c0_17 = arith.constant 0 : index
      %25 = vector.load %arg6[%c0_16, %c0_17] : memref<8x128xbf16, #tpu.memory_space<vmem>>, vector<8x128xbf16>
      tpu.vector_store %arg6[%c0_16, %c0_17], %24 {strides = array<i32>} : memref<8x128xbf16, #tpu.memory_space<vmem>>, vector<8x128xbf16>,
    } else {
    }
    return
  }
  func.func @transform_0(%arg0: i32, %arg1: i32) -> (i32, i32) {
    %c0_i32 = arith.constant 0 : i32
    return %arg0, %arg1 : i32, i32
  }
  func.func @transform_1(%arg0: i32, %arg1: i32) -> (i32, i32) {
    %c0_i32 = arith.constant 0 : i32
    %c0_i32_0 = arith.constant 0 : i32
    %c0_i32_1 = arith.constant 0 : i32
    return %c0_i32, %c0_i32_0 : i32, i32
  }
  func.func @transform_2(%arg0: i32, %arg1: i32) -> (i32, i32) {
    %c0_i32 = arith.constant 0 : i32
    %c0_i32_0 = arith.constant 0 : i32
    return %arg0, %c0_i32 : i32, i32
  }
  func.func @transform_3(%arg0: i32, %arg1: i32) -> (i32, i32) {
    %c0_i32 = arith.constant 0 : i32
    %c0_i32_0 = arith.constant 0 : i32
    %c0_i32_1 = arith.constant 0 : i32
    return %c0_i32, %c0_i32_0 : i32, i32
  }
  func.func @transform_4(%arg0: i32, %arg1: i32) -> (i32, i32) {
    %c0_i32 = arith.constant 0 : i32
    %c0_i32_0 = arith.constant 0 : i32
    return %arg0, %c0_i32 : i32, i32
  }
}

module attributes {stable_mosaic.version = 11 : i64} {
  func.func @_linear_scale_kernel(%arg0: i32, %arg1: memref<8x128xbf16, #tpu.memory_space<vmem>>, %arg2: memref<128x128xbf16, #tpu.memory_space<vmem>>, %arg3: memref<8x1xf32, #tpu.memory_space<vmem>>, %arg4: memref<8x128xbf16, #tpu.memory_space<vmem>>) attributes {dimension_semantics = [#tpu.dimension_semantics<parallel>], iteration_bounds = array<i64: 2>, scalar_prefetch = 0 : i64, scratch_operands = 0 : i64, tpu.core_type = #tpu.core_type<tc>, window_params = [{transform_indices = @transform_0, window_bounds = array<i64: 8, 128>}, {pipeline_mode = #tpu.pipeline_mode<synchronous>, transform_indices = @transform_1, window_bounds = array<i64: 128, 128>}, {transform_indices = @transform_2, window_bounds = array<i64: 8, 1>}, {transform_indices = @transform_3, window_bounds = array<i64: 8, 128>}]} {
    %c0 = arith.constant 0 : index
    %c0_0 = arith.constant 0 : index
    %0 = vector.load %arg1[%c0, %c0_0] : memref<8x128xbf16, #tpu.memory_space<vmem>>, vector<8x128xbf16>
    %c0_1 = arith.constant 0 : index
    %c0_2 = arith.constant 0 : index
    %1 = vector.load %arg2[%c0_1, %c0_2] : memref<128x128xbf16, #tpu.memory_space<vmem>>, vector<128x128xbf16>
    %cst = arith.constant dense<0.000000e+00> : vector<8x128xf32>
    %2 = tpu.matmul %0, %1, %cst {dimension_numbers = #tpu.dot_dimension_numbers<[1], [0], [0], [1], [0, 0, 1, 1], [], []>} : vector<8x128xbf16>, vector<128x128xbf16>, vector<8x128xf32> -> vector<8x128xf32>
    %c0_3 = arith.constant 0 : index
    %c0_4 = arith.constant 0 : index
    %3 = vector.load %arg3[%c0_3, %c0_4] : memref<8x1xf32, #tpu.memory_space<vmem>>, vector<8x1xf32>
    %4 = vector.broadcast %3 : vector<8x1xf32> to vector<8x128xf32>
    %5 = arith.mulf %4, %2 : vector<8x128xf32>
    %6 = arith.truncf %5 : vector<8x128xf32> to vector<8x128xbf16>
    %c0_5 = arith.constant 0 : index
    %c0_6 = arith.constant 0 : index
    %7 = vector.load %arg4[%c0_5, %c0_6] : memref<8x128xbf16, #tpu.memory_space<vmem>>, vector<8x128xbf16>
    tpu.vector_store %arg4[%c0_5, %c0_6], %6 {strides = array<i32>} : memref<8x128xbf16, #tpu.memory_space<vmem>>, vector<8x128xbf16>,
    return
  }
  func.func @transform_0(%arg0: i32) -> (i32, i32) {
    %c0_i32 = arith.constant 0 : i32
    %c0_i32_0 = arith.constant 0 : i32
    return %arg0, %c0_i32 : i32, i32
  }
  func.func @transform_1(%arg0: i32) -> (i32, i32) {
    %c0_i32 = arith.constant 0 : i32
    %c0_i32_0 = arith.constant 0 : i32
    %c0_i32_1 = arith.constant 0 : i32
    return %c0_i32, %c0_i32_0 : i32, i32
  }
  func.func @transform_2(%arg0: i32) -> (i32, i32) {
    %c0_i32 = arith.constant 0 : i32
    %c0_i32_0 = arith.constant 0 : i32
    return %arg0, %c0_i32 : i32, i32
  }
  func.func @transform_3(%arg0: i32) -> (i32, i32) {
    %c0_i32 = arith.constant 0 : i32
    %c0_i32_0 = arith.constant 0 : i32
    return %arg0, %c0_i32 : i32, i32
  }
}

module attributes {stable_mosaic.version = 11 : i64} {
  func.func @_linear_scale_kernel(%arg0: i32, %arg1: memref<8x128xbf16, #tpu.memory_space<vmem>>, %arg2: memref<128x256xbf16, #tpu.memory_space<vmem>>, %arg3: memref<8x1xf32, #tpu.memory_space<vmem>>, %arg4: memref<8x256xbf16, #tpu.memory_space<vmem>>) attributes {dimension_semantics = [#tpu.dimension_semantics<parallel>], iteration_bounds = array<i64: 2>, scalar_prefetch = 0 : i64, scratch_operands = 0 : i64, tpu.core_type = #tpu.core_type<tc>, window_params = [{transform_indices = @transform_0, window_bounds = array<i64: 8, 128>}, {pipeline_mode = #tpu.pipeline_mode<synchronous>, transform_indices = @transform_1, window_bounds = array<i64: 128, 256>}, {transform_indices = @transform_2, window_bounds = array<i64: 8, 1>}, {transform_indices = @transform_3, window_bounds = array<i64: 8, 256>}]} {
    %c0 = arith.constant 0 : index
    %c0_0 = arith.constant 0 : index
    %0 = vector.load %arg1[%c0, %c0_0] : memref<8x128xbf16, #tpu.memory_space<vmem>>, vector<8x128xbf16>
    %c0_1 = arith.constant 0 : index
    %c0_2 = arith.constant 0 : index
    %1 = vector.load %arg2[%c0_1, %c0_2] : memref<128x256xbf16, #tpu.memory_space<vmem>>, vector<128x256xbf16>
    %cst = arith.constant dense<0.000000e+00> : vector<8x256xf32>
    %2 = tpu.matmul %0, %1, %cst {dimension_numbers = #tpu.dot_dimension_numbers<[1], [0], [0], [1], [0, 0, 1, 1], [], []>} : vector<8x128xbf16>, vector<128x256xbf16>, vector<8x256xf32> -> vector<8x256xf32>
    %c0_3 = arith.constant 0 : index
    %c0_4 = arith.constant 0 : index
    %3 = vector.load %arg3[%c0_3, %c0_4] : memref<8x1xf32, #tpu.memory_space<vmem>>, vector<8x1xf32>
    %4 = vector.broadcast %3 : vector<8x1xf32> to vector<8x256xf32>
    %5 = arith.mulf %4, %2 : vector<8x256xf32>
    %6 = arith.truncf %5 : vector<8x256xf32> to vector<8x256xbf16>
    %c0_5 = arith.constant 0 : index
    %c0_6 = arith.constant 0 : index
    %7 = vector.load %arg4[%c0_5, %c0_6] : memref<8x256xbf16, #tpu.memory_space<vmem>>, vector<8x256xbf16>
    tpu.vector_store %arg4[%c0_5, %c0_6], %6 {strides = array<i32>} : memref<8x256xbf16, #tpu.memory_space<vmem>>, vector<8x256xbf16>,
    return
  }
  func.func @transform_0(%arg0: i32) -> (i32, i32) {
    %c0_i32 = arith.constant 0 : i32
    %c0_i32_0 = arith.constant 0 : i32
    return %arg0, %c0_i32 : i32, i32
  }
  func.func @transform_1(%arg0: i32) -> (i32, i32) {
    %c0_i32 = arith.constant 0 : i32
    %c0_i32_0 = arith.constant 0 : i32
    %c0_i32_1 = arith.constant 0 : i32
    return %c0_i32, %c0_i32_0 : i32, i32
  }
  func.func @transform_2(%arg0: i32) -> (i32, i32) {
    %c0_i32 = arith.constant 0 : i32
    %c0_i32_0 = arith.constant 0 : i32
    return %arg0, %c0_i32 : i32, i32
  }
  func.func @transform_3(%arg0: i32) -> (i32, i32) {
    %c0_i32 = arith.constant 0 : i32
    %c0_i32_0 = arith.constant 0 : i32
    return %arg0, %c0_i32 : i32, i32
  }
}

module attributes {stable_mosaic.version = 11 : i64} {
  func.func @_linear_scale_kernel(%arg0: i32, %arg1: memref<8x128xbf16, #tpu.memory_space<vmem>>, %arg2: memref<128x128xbf16, #tpu.memory_space<vmem>>, %arg3: memref<8x1xf32, #tpu.memory_space<vmem>>, %arg4: memref<8x128xbf16, #tpu.memory_space<vmem>>) attributes {dimension_semantics = [#tpu.dimension_semantics<parallel>], iteration_bounds = array<i64: 2>, scalar_prefetch = 0 : i64, scratch_operands = 0 : i64, tpu.core_type = #tpu.core_type<tc>, window_params = [{transform_indices = @transform_0, window_bounds = array<i64: 8, 128>}, {pipeline_mode = #tpu.pipeline_mode<synchronous>, transform_indices = @transform_1, window_bounds = array<i64: 128, 128>}, {transform_indices = @transform_2, window_bounds = array<i64: 8, 1>}, {transform_indices = @transform_3, window_bounds = array<i64: 8, 128>}]} {
    %c0 = arith.constant 0 : index
    %c0_0 = arith.constant 0 : index
    %0 = vector.load %arg1[%c0, %c0_0] : memref<8x128xbf16, #tpu.memory_space<vmem>>, vector<8x128xbf16>
    %c0_1 = arith.constant 0 : index
    %c0_2 = arith.constant 0 : index
    %1 = vector.load %arg2[%c0_1, %c0_2] : memref<128x128xbf16, #tpu.memory_space<vmem>>, vector<128x128xbf16>
    %cst = arith.constant dense<0.000000e+00> : vector<8x128xf32>
    %2 = tpu.matmul %0, %1, %cst {dimension_numbers = #tpu.dot_dimension_numbers<[1], [0], [0], [1], [0, 0, 1, 1], [], []>} : vector<8x128xbf16>, vector<128x128xbf16>, vector<8x128xf32> -> vector<8x128xf32>
    %c0_3 = arith.constant 0 : index
    %c0_4 = arith.constant 0 : index
    %3 = vector.load %arg3[%c0_3, %c0_4] : memref<8x1xf32, #tpu.memory_space<vmem>>, vector<8x1xf32>
    %4 = vector.broadcast %3 : vector<8x1xf32> to vector<8x128xf32>
    %5 = arith.mulf %4, %2 : vector<8x128xf32>
    %6 = arith.truncf %5 : vector<8x128xf32> to vector<8x128xbf16>
    %c0_5 = arith.constant 0 : index
    %c0_6 = arith.constant 0 : index
    %7 = vector.load %arg4[%c0_5, %c0_6] : memref<8x128xbf16, #tpu.memory_space<vmem>>, vector<8x128xbf16>
    tpu.vector_store %arg4[%c0_5, %c0_6], %6 {strides = array<i32>} : memref<8x128xbf16, #tpu.memory_space<vmem>>, vector<8x128xbf16>,
    return
  }
  func.func @transform_0(%arg0: i32) -> (i32, i32) {
    %c0_i32 = arith.constant 0 : i32
    %c0_i32_0 = arith.constant 0 : i32
    return %arg0, %c0_i32 : i32, i32
  }
  func.func @transform_1(%arg0: i32) -> (i32, i32) {
    %c0_i32 = arith.constant 0 : i32
    %c0_i32_0 = arith.constant 0 : i32
    %c0_i32_1 = arith.constant 0 : i32
    return %c0_i32, %c0_i32_0 : i32, i32
  }
  func.func @transform_2(%arg0: i32) -> (i32, i32) {
    %c0_i32 = arith.constant 0 : i32
    %c0_i32_0 = arith.constant 0 : i32
    return %arg0, %c0_i32 : i32, i32
  }
  func.func @transform_3(%arg0: i32) -> (i32, i32) {
    %c0_i32 = arith.constant 0 : i32
    %c0_i32_0 = arith.constant 0 : i32
    return %arg0, %c0_i32 : i32, i32
  }
}

module attributes {stable_mosaic.version = 11 : i64} {
  func.func @_propagate_resident_kernel(%arg0: i32, %arg1: i32, %arg2: memref<8x16xbf16, #tpu.memory_space<vmem>>, %arg3: memref<16x256xbf16, #tpu.memory_space<vmem>>, %arg4: memref<8x1xf32, #tpu.memory_space<vmem>>, %arg5: memref<1x256xf32, #tpu.memory_space<vmem>>, %arg6: memref<8x256xbf16, #tpu.memory_space<vmem>>, %arg7: memref<8x256xf32, #tpu.memory_space<vmem>>) attributes {dimension_semantics = [#tpu.dimension_semantics<parallel>, #tpu.dimension_semantics<arbitrary>], iteration_bounds = array<i64: 2, 1>, scalar_prefetch = 0 : i64, scratch_operands = 1 : i64, tpu.core_type = #tpu.core_type<tc>, window_params = [{transform_indices = @transform_0, window_bounds = array<i64: 8, 16>}, {pipeline_mode = #tpu.pipeline_mode<synchronous>, transform_indices = @transform_1, window_bounds = array<i64: 16, 256>}, {transform_indices = @transform_2, window_bounds = array<i64: 8, 1>}, {pipeline_mode = #tpu.pipeline_mode<synchronous>, transform_indices = @transform_3, window_bounds = array<i64: 1, 256>}, {transform_indices = @transform_4, window_bounds = array<i64: 8, 256>}]} {
    %c0_i32 = arith.constant 0 : i32
    %0 = arith.cmpi eq, %arg1, %c0_i32 : i32
    %1 = arith.extui %0 : i1 to i32
    %c0_i32_0 = arith.constant 0 : i32
    %2 = arith.cmpi ne, %1, %c0_i32_0 : i32
    scf.if %2 {
      %cst_9 = arith.constant 0.000000e+00 : f32
      %15 = vector.broadcast %cst_9 : f32 to vector<8x256xf32>
      %c0_10 = arith.constant 0 : index
      %c0_11 = arith.constant 0 : index
      %16 = vector.load %arg7[%c0_10, %c0_11] : memref<8x256xf32, #tpu.memory_space<vmem>>, vector<8x256xf32>
      tpu.vector_store %arg7[%c0_10, %c0_11], %15 {strides = array<i32>} : memref<8x256xf32, #tpu.memory_space<vmem>>, vector<8x256xf32>,
    } else {
    }
    %c16_i32 = arith.constant 16 : i32
    %3 = arith.muli %arg1, %c16_i32 : i32
    %4 = tpu.assume_multiple %3, 16 : i32
    %5 = arith.index_cast %4 : i32 to index
    %c0 = arith.constant 0 : index
    %6 = vector.load %arg3[%5, %c0] : memref<16x256xbf16, #tpu.memory_space<vmem>>, vector<16x256xbf16>
    %c0_1 = arith.constant 0 : index
    %c0_2 = arith.constant 0 : index
    %7 = vector.load %arg7[%c0_1, %c0_2] : memref<8x256xf32, #tpu.memory_space<vmem>>, vector<8x256xf32>
    %c0_3 = arith.constant 0 : index
    %c0_4 = arith.constant 0 : index
    %8 = vector.load %arg2[%c0_3, %c0_4] : memref<8x16xbf16, #tpu.memory_space<vmem>>, vector<8x16xbf16>
    %cst = arith.constant dense<0.000000e+00> : vector<8x256xf32>
    %9 = tpu.matmul %8, %6, %cst {dimension_numbers = #tpu.dot_dimension_numbers<[1], [0], [0], [1], [0, 0, 1, 1], [], []>} : vector<8x16xbf16>, vector<16x256xbf16>, vector<8x256xf32> -> vector<8x256xf32>
    %10 = arith.addf %7, %9 : vector<8x256xf32>
    %c0_5 = arith.constant 0 : index
    %c0_6 = arith.constant 0 : index
    %11 = vector.load %arg7[%c0_5, %c0_6] : memref<8x256xf32, #tpu.memory_space<vmem>>, vector<8x256xf32>
    tpu.vector_store %arg7[%c0_5, %c0_6], %10 {strides = array<i32>} : memref<8x256xf32, #tpu.memory_space<vmem>>, vector<8x256xf32>,
    %c0_i32_7 = arith.constant 0 : i32
    %12 = arith.cmpi eq, %arg1, %c0_i32_7 : i32
    %13 = arith.extui %12 : i1 to i32
    %c0_i32_8 = arith.constant 0 : i32
    %14 = arith.cmpi ne, %13, %c0_i32_8 : i32
    scf.if %14 {
      %c0_9 = arith.constant 0 : index
      %c0_10 = arith.constant 0 : index
      %15 = vector.load %arg4[%c0_9, %c0_10] : memref<8x1xf32, #tpu.memory_space<vmem>>, vector<8x1xf32>
      %c0_11 = arith.constant 0 : index
      %c0_12 = arith.constant 0 : index
      %16 = vector.load %arg7[%c0_11, %c0_12] : memref<8x256xf32, #tpu.memory_space<vmem>>, vector<8x256xf32>
      %17 = vector.broadcast %15 : vector<8x1xf32> to vector<8x256xf32>
      %18 = arith.mulf %17, %16 : vector<8x256xf32>
      %c0_13 = arith.constant 0 : index
      %c0_14 = arith.constant 0 : index
      %19 = vector.load %arg5[%c0_13, %c0_14] : memref<1x256xf32, #tpu.memory_space<vmem>>, vector<1x256xf32>
      %20 = vector.broadcast %19 : vector<1x256xf32> to vector<8x256xf32>
      %21 = arith.addf %18, %20 : vector<8x256xf32>
      %cst_15 = arith.constant 0.000000e+00 : f32
      %22 = vector.broadcast %cst_15 : f32 to vector<8x256xf32>
      %23 = arith.maximumf %21, %22 : vector<8x256xf32>
      %24 = arith.truncf %23 : vector<8x256xf32> to vector<8x256xbf16>
      %c0_16 = arith.constant 0 : index
      %c0_17 = arith.constant 0 : index
      %25 = vector.load %arg6[%c0_16, %c0_17] : memref<8x256xbf16, #tpu.memory_space<vmem>>, vector<8x256xbf16>
      tpu.vector_store %arg6[%c0_16, %c0_17], %24 {strides = array<i32>} : memref<8x256xbf16, #tpu.memory_space<vmem>>, vector<8x256xbf16>,
    } else {
    }
    return
  }
  func.func @transform_0(%arg0: i32, %arg1: i32) -> (i32, i32) {
    %c0_i32 = arith.constant 0 : i32
    return %arg0, %arg1 : i32, i32
  }
  func.func @transform_1(%arg0: i32, %arg1: i32) -> (i32, i32) {
    %c0_i32 = arith.constant 0 : i32
    %c0_i32_0 = arith.constant 0 : i32
    %c0_i32_1 = arith.constant 0 : i32
    return %c0_i32, %c0_i32_0 : i32, i32
  }
  func.func @transform_2(%arg0: i32, %arg1: i32) -> (i32, i32) {
    %c0_i32 = arith.constant 0 : i32
    %c0_i32_0 = arith.constant 0 : i32
    return %arg0, %c0_i32 : i32, i32
  }
  func.func @transform_3(%arg0: i32, %arg1: i32) -> (i32, i32) {
    %c0_i32 = arith.constant 0 : i32
    %c0_i32_0 = arith.constant 0 : i32
    %c0_i32_1 = arith.constant 0 : i32
    return %c0_i32, %c0_i32_0 : i32, i32
  }
  func.func @transform_4(%arg0: i32, %arg1: i32) -> (i32, i32) {
    %c0_i32 = arith.constant 0 : i32
    %c0_i32_0 = arith.constant 0 : i32
    return %arg0, %c0_i32 : i32, i32
  }
}

module attributes {stable_mosaic.version = 11 : i64} {
  func.func @_zzt_kernel(%arg0: i32, %arg1: i32, %arg2: memref<8x128xbf16, #tpu.memory_space<vmem>>, %arg3: memref<16x128xbf16, #tpu.memory_space<vmem>>, %arg4: memref<8x16xf32, #tpu.memory_space<vmem>>) attributes {dimension_semantics = [#tpu.dimension_semantics<parallel>, #tpu.dimension_semantics<parallel>], iteration_bounds = array<i64: 2, 1>, scalar_prefetch = 0 : i64, scratch_operands = 0 : i64, tpu.core_type = #tpu.core_type<tc>, window_params = [{transform_indices = @transform_0, window_bounds = array<i64: 8, 128>}, {transform_indices = @transform_1, window_bounds = array<i64: 16, 128>}, {transform_indices = @transform_2, window_bounds = array<i64: 8, 16>}]} {
    %c0 = arith.constant 0 : index
    %c0_0 = arith.constant 0 : index
    %0 = vector.load %arg2[%c0, %c0_0] : memref<8x128xbf16, #tpu.memory_space<vmem>>, vector<8x128xbf16>
    %c0_1 = arith.constant 0 : index
    %c0_2 = arith.constant 0 : index
    %1 = vector.load %arg3[%c0_1, %c0_2] : memref<16x128xbf16, #tpu.memory_space<vmem>>, vector<16x128xbf16>
    %cst = arith.constant dense<0.000000e+00> : vector<8x16xf32>
    %2 = tpu.matmul %0, %1, %cst {dimension_numbers = #tpu.dot_dimension_numbers<[1], [1], [0], [0], [0, 0, 1, 0], [], []>} : vector<8x128xbf16>, vector<16x128xbf16>, vector<8x16xf32> -> vector<8x16xf32>
    %c0_3 = arith.constant 0 : index
    %c0_4 = arith.constant 0 : index
    %3 = vector.load %arg4[%c0_3, %c0_4] : memref<8x16xf32, #tpu.memory_space<vmem>>, vector<8x16xf32>
    tpu.vector_store %arg4[%c0_3, %c0_4], %2 {strides = array<i32>} : memref<8x16xf32, #tpu.memory_space<vmem>>, vector<8x16xf32>,
    return
  }
  func.func @transform_0(%arg0: i32, %arg1: i32) -> (i32, i32) {
    %c1_i32 = arith.constant 1 : i32
    %c0_i32 = arith.constant 0 : i32
    return %arg0, %c1_i32 : i32, i32
  }
  func.func @transform_1(%arg0: i32, %arg1: i32) -> (i32, i32) {
    %c1_i32 = arith.constant 1 : i32
    %c0_i32 = arith.constant 0 : i32
    return %arg1, %c1_i32 : i32, i32
  }
  func.func @transform_2(%arg0: i32, %arg1: i32) -> (i32, i32) {
    %c0_i32 = arith.constant 0 : i32
    return %arg0, %arg1 : i32, i32
  }
}

module attributes {stable_mosaic.version = 11 : i64} {
  func.func @_propagate_resident_kernel(%arg0: i32, %arg1: i32, %arg2: memref<8x16xbf16, #tpu.memory_space<vmem>>, %arg3: memref<16x128xbf16, #tpu.memory_space<vmem>>, %arg4: memref<8x1xf32, #tpu.memory_space<vmem>>, %arg5: memref<1x128xf32, #tpu.memory_space<vmem>>, %arg6: memref<8x128xf32, #tpu.memory_space<vmem>>, %arg7: memref<8x128xf32, #tpu.memory_space<vmem>>) attributes {dimension_semantics = [#tpu.dimension_semantics<parallel>, #tpu.dimension_semantics<arbitrary>], iteration_bounds = array<i64: 2, 1>, scalar_prefetch = 0 : i64, scratch_operands = 1 : i64, tpu.core_type = #tpu.core_type<tc>, window_params = [{transform_indices = @transform_0, window_bounds = array<i64: 8, 16>}, {pipeline_mode = #tpu.pipeline_mode<synchronous>, transform_indices = @transform_1, window_bounds = array<i64: 16, 128>}, {transform_indices = @transform_2, window_bounds = array<i64: 8, 1>}, {pipeline_mode = #tpu.pipeline_mode<synchronous>, transform_indices = @transform_3, window_bounds = array<i64: 1, 128>}, {transform_indices = @transform_4, window_bounds = array<i64: 8, 128>}]} {
    %c0_i32 = arith.constant 0 : i32
    %0 = arith.cmpi eq, %arg1, %c0_i32 : i32
    %1 = arith.extui %0 : i1 to i32
    %c0_i32_0 = arith.constant 0 : i32
    %2 = arith.cmpi ne, %1, %c0_i32_0 : i32
    scf.if %2 {
      %cst_9 = arith.constant 0.000000e+00 : f32
      %15 = vector.broadcast %cst_9 : f32 to vector<8x128xf32>
      %c0_10 = arith.constant 0 : index
      %c0_11 = arith.constant 0 : index
      %16 = vector.load %arg7[%c0_10, %c0_11] : memref<8x128xf32, #tpu.memory_space<vmem>>, vector<8x128xf32>
      tpu.vector_store %arg7[%c0_10, %c0_11], %15 {strides = array<i32>} : memref<8x128xf32, #tpu.memory_space<vmem>>, vector<8x128xf32>,
    } else {
    }
    %c16_i32 = arith.constant 16 : i32
    %3 = arith.muli %arg1, %c16_i32 : i32
    %4 = tpu.assume_multiple %3, 16 : i32
    %5 = arith.index_cast %4 : i32 to index
    %c0 = arith.constant 0 : index
    %6 = vector.load %arg3[%5, %c0] : memref<16x128xbf16, #tpu.memory_space<vmem>>, vector<16x128xbf16>
    %c0_1 = arith.constant 0 : index
    %c0_2 = arith.constant 0 : index
    %7 = vector.load %arg7[%c0_1, %c0_2] : memref<8x128xf32, #tpu.memory_space<vmem>>, vector<8x128xf32>
    %c0_3 = arith.constant 0 : index
    %c0_4 = arith.constant 0 : index
    %8 = vector.load %arg2[%c0_3, %c0_4] : memref<8x16xbf16, #tpu.memory_space<vmem>>, vector<8x16xbf16>
    %cst = arith.constant dense<0.000000e+00> : vector<8x128xf32>
    %9 = tpu.matmul %8, %6, %cst {dimension_numbers = #tpu.dot_dimension_numbers<[1], [0], [0], [1], [0, 0, 1, 1], [], []>} : vector<8x16xbf16>, vector<16x128xbf16>, vector<8x128xf32> -> vector<8x128xf32>
    %10 = arith.addf %7, %9 : vector<8x128xf32>
    %c0_5 = arith.constant 0 : index
    %c0_6 = arith.constant 0 : index
    %11 = vector.load %arg7[%c0_5, %c0_6] : memref<8x128xf32, #tpu.memory_space<vmem>>, vector<8x128xf32>
    tpu.vector_store %arg7[%c0_5, %c0_6], %10 {strides = array<i32>} : memref<8x128xf32, #tpu.memory_space<vmem>>, vector<8x128xf32>,
    %c0_i32_7 = arith.constant 0 : i32
    %12 = arith.cmpi eq, %arg1, %c0_i32_7 : i32
    %13 = arith.extui %12 : i1 to i32
    %c0_i32_8 = arith.constant 0 : i32
    %14 = arith.cmpi ne, %13, %c0_i32_8 : i32
    scf.if %14 {
      %c0_9 = arith.constant 0 : index
      %c0_10 = arith.constant 0 : index
      %15 = vector.load %arg4[%c0_9, %c0_10] : memref<8x1xf32, #tpu.memory_space<vmem>>, vector<8x1xf32>
      %c0_11 = arith.constant 0 : index
      %c0_12 = arith.constant 0 : index
      %16 = vector.load %arg7[%c0_11, %c0_12] : memref<8x128xf32, #tpu.memory_space<vmem>>, vector<8x128xf32>
      %17 = vector.broadcast %15 : vector<8x1xf32> to vector<8x128xf32>
      %18 = arith.mulf %17, %16 : vector<8x128xf32>
      %c0_13 = arith.constant 0 : index
      %c0_14 = arith.constant 0 : index
      %19 = vector.load %arg5[%c0_13, %c0_14] : memref<1x128xf32, #tpu.memory_space<vmem>>, vector<1x128xf32>
      %20 = vector.broadcast %19 : vector<1x128xf32> to vector<8x128xf32>
      %21 = arith.addf %18, %20 : vector<8x128xf32>
      %c0_15 = arith.constant 0 : index
      %c0_16 = arith.constant 0 : index
      %22 = vector.load %arg6[%c0_15, %c0_16] : memref<8x128xf32, #tpu.memory_space<vmem>>, vector<8x128xf32>
      tpu.vector_store %arg6[%c0_15, %c0_16], %21 {strides = array<i32>} : memref<8x128xf32, #tpu.memory_space<vmem>>, vector<8x128xf32>,
    } else {
    }
    return
  }
  func.func @transform_0(%arg0: i32, %arg1: i32) -> (i32, i32) {
    %c0_i32 = arith.constant 0 : i32
    return %arg0, %arg1 : i32, i32
  }
  func.func @transform_1(%arg0: i32, %arg1: i32) -> (i32, i32) {
    %c0_i32 = arith.constant 0 : i32
    %c0_i32_0 = arith.constant 0 : i32
    %c0_i32_1 = arith.constant 0 : i32
    return %c0_i32, %c0_i32_0 : i32, i32
  }
  func.func @transform_2(%arg0: i32, %arg1: i32) -> (i32, i32) {
    %c0_i32 = arith.constant 0 : i32
    %c0_i32_0 = arith.constant 0 : i32
    return %arg0, %c0_i32 : i32, i32
  }
  func.func @transform_3(%arg0: i32, %arg1: i32) -> (i32, i32) {
    %c0_i32 = arith.constant 0 : i32
    %c0_i32_0 = arith.constant 0 : i32
    %c0_i32_1 = arith.constant 0 : i32
    return %c0_i32, %c0_i32_0 : i32, i32
  }
  func.func @transform_4(%arg0: i32, %arg1: i32) -> (i32, i32) {
    %c0_i32 = arith.constant 0 : i32
    %c0_i32_0 = arith.constant 0 : i32
    return %arg0, %c0_i32 : i32, i32
  }
}

</mosaic_0001>

<llo_original>
// kernel: graph_autoencoder_forward.10
$region0: #{graph_autoencoder_forward.10}
  #allocation0 [shape = 'u32[]', space=smem, size = 0x4, offset = 0x4, fixed_abs, tag = 'smem constant byte address 0x4 - core index']
  #allocation1 [shape = 'u32[144,128]{1,0:T(1,128)}', space=vmem, size = 0x12000, scoped, tag = 'internal scratch']
  #allocation2 [shape = 'f32[8,128]{1,0:T(8,128)}', space=vmem, size = 0x1000, scoped, tag = 'scratch operand']
  %s0 = inlined_call_operand.vmem [shape: bf16[16,16], index: 0, kind: input, shape index: {}]
  %s1 = inlined_call_operand.vmem [shape: bf16[16,128], index: 1, kind: input, shape index: {}]
  %s2 = inlined_call_operand.vmem [shape: f32[16,1], index: 2, kind: input, shape index: {}]
  %s3 = inlined_call_operand.vmem [shape: f32[1,128], index: 3, kind: input, shape index: {}]
  %s4 = inlined_call_operand.vmem [shape: bf16[16,128], index: 4, kind: output, shape index: {}]
  %s5 = sld [smem:[#allocation0]]
  $region57: #{graph_autoencoder_forward.10} parent=0
    _
  %s7 = ssub.s32 1, %s5
  %s8 = scalar_select 0, %s7, %s5
  loop: start=0, step=1, limit=4
  $region2: #{graph_autoencoder_forward.10} parent=0 // loop_pre_header
    _
  $region3: #{graph_autoencoder_forward.10} parent=0 // loop_header
    %s10 = sphi 0, %s14
    %p11 = scmp.ge.s32.totalorder %s10, 4
    %s17 = sphi 0, %s29
    %s18 = sphi 0, %s25
    %s19 = sphi 0, %s17
    %s20 = sphi 0, %s18
    %s21 = sphi 0, %s19
    %s22 = sphi 0, %s20
    %s34 = sphi 0, %s36
    %s37 = sphi 0, %s34
    %s38 = sphi 0, %s37
    %s54 = sphi 0, %s38
    %s58 = sphi 0, %s58
    %s60 = sphi 0, %s58
    %s61 = sphi 0, %s60
    %s75 = sphi 0, %s61
    %s81 = sphi 0, %s83
    %s84 = sphi 0, %s81
    %s85 = sphi 0, %s84
    %s101 = sphi 0, %s85
    %s105 = sphi 0, %s105
    %s107 = sphi 0, %s105
    %s108 = sphi 0, %s107
    %s122 = sphi 0, %s108
    %s128 = sphi 0, %s130
    %s131 = sphi 0, %s128
    %s132 = sphi 0, %s131
    %s148 = sphi 0, %s132
  $region4: #{graph_autoencoder_forward.10} parent=0 // loop_header_branch
    %13 = sbr.rel (%p11) target = $region8
  $region5: #{graph_autoencoder_forward.10} parent=0 // loop_body
    %s15 = ssub.s32 %s10, 1
    %s16 = ssub.s32 %s10, 2
    %s23 = sadd.s32 1, %s18
    %p24 = scmp.ge.s32.totalorder %s23, 1
    %s25 = scalar_select %p24, 0, %s23
    %s26 = sadd.s32 1, %s17
    %s27 = scalar_select %p24, %s26, %s17
    %p28 = scmp.ge.s32.totalorder %s27, 2
    %s29 = scalar_select %p28, 0, %s27
    %s30 = ssub.s32 %s17, %s29
    %s31 = ssub.s32 %s18, %s25
    %s32 = sor.u32 %s30, %s31
    %p33 = scmp.eq.s32.totalorder %s32, 0
    %s35 = sadd.s32 %s34, 1
    %s36 = scalar_select %p33, %s34, %s35
    %p39 = pneg %p33
    %p40 = scmp.eq.s32.totalorder %s10, 1
    %p41 = por %p39, %p40
    %p42 = scmp.ne.s32.totalorder %s34, %s37
    %p43 = scmp.eq.s32.totalorder %s10, 0
    %p44 = por %p42, %p43
    %p45 = scmp.ne.s32.totalorder %s34, %s37
    %p46 = scmp.eq.s32.totalorder %s15, 1
    %p47 = por %p45, %p46
    %p48 = scmp.ne.s32.totalorder %s37, %s38
    %p49 = scmp.eq.s32.totalorder %s15, 0
    %p50 = por %p48, %p49
    %p51 = scmp.ne.s32.totalorder %s37, %s38
    %p52 = scmp.eq.s32.totalorder %s16, 1
    %p53 = por %p51, %p52
    %p55 = scmp.ne.s32.totalorder %s38, %s54
    %p56 = scmp.eq.s32.totalorder %s16, 0
    %p57 = por %p55, %p56
    %s59 = sadd.s32 %s58, 1
    %p62 = scmp.eq.s32.totalorder %s10, 1
    %p63 = scmp.ne.s32.totalorder %s58, %s60
    %p64 = scmp.eq.s32.totalorder %s10, 0
    %p65 = por %p63, %p64
    %p66 = scmp.ne.s32.totalorder %s58, %s60
    %p67 = scmp.eq.s32.totalorder %s15, 1
    %p68 = por %p66, %p67
    %p69 = scmp.ne.s32.totalorder %s60, %s61
    %p70 = scmp.eq.s32.totalorder %s15, 0
    %p71 = por %p69, %p70
    %p72 = scmp.ne.s32.totalorder %s60, %s61
    %p73 = scmp.eq.s32.totalorder %s16, 1
    %p74 = por %p72, %p73
    %p76 = scmp.ne.s32.totalorder %s61, %s75
    %p77 = scmp.eq.s32.totalorder %s16, 0
    %p78 = por %p76, %p77
    %s79 = ssub.s32 %s17, %s29
    %p80 = scmp.eq.s32.totalorder %s79, 0
    %s82 = sadd.s32 %s81, 1
    %s83 = scalar_select %p80, %s81, %s82
    %p86 = pneg %p80
    %p87 = scmp.eq.s32.totalorder %s10, 1
    %p88 = por %p86, %p87
    %p89 = scmp.ne.s32.totalorder %s81, %s84
    %p90 = scmp.eq.s32.totalorder %s10, 0
    %p91 = por %p89, %p90
    %p92 = scmp.ne.s32.totalorder %s81, %s84
    %p93 = scmp.eq.s32.totalorder %s15, 1
    %p94 = por %p92, %p93
    %p95 = scmp.ne.s32.totalorder %s84, %s85
    %p96 = scmp.eq.s32.totalorder %s15, 0
    %p97 = por %p95, %p96
    %p98 = scmp.ne.s32.totalorder %s84, %s85
    %p99 = scmp.eq.s32.totalorder %s16, 1
    %p100 = por %p98, %p99
    %p102 = scmp.ne.s32.totalorder %s85, %s101
    %p103 = scmp.eq.s32.totalorder %s16, 0
    %p104 = por %p102, %p103
    %s106 = sadd.s32 %s105, 1
    %p109 = scmp.eq.s32.totalorder %s10, 1
    %p110 = scmp.ne.s32.totalorder %s105, %s107
    %p111 = scmp.eq.s32.totalorder %s10, 0
    %p112 = por %p110, %p111
    %p113 = scmp.ne.s32.totalorder %s105, %s107
    %p114 = scmp.eq.s32.totalorder %s15, 1
    %p115 = por %p113, %p114
    %p116 = scmp.ne.s32.totalorder %s107, %s108
    %p117 = scmp.eq.s32.totalorder %s15, 0
    %p118 = por %p116, %p117
    %p119 = scmp.ne.s32.totalorder %s107, %s108
    %p120 = scmp.eq.s32.totalorder %s16, 1
    %p121 = por %p119, %p120
    %p123 = scmp.ne.s32.totalorder %s108, %s122
    %p124 = scmp.eq.s32.totalorder %s16, 0
    %p125 = por %p123, %p124
    %s126 = ssub.s32 %s17, %s29
    %p127 = scmp.eq.s32.totalorder %s126, 0
    %s129 = sadd.s32 %s128, 1
    %s130 = scalar_select %p127, %s128, %s129
    %p133 = pneg %p127
    %p134 = scmp.eq.s32.totalorder %s10, 1
    %p135 = por %p133, %p134
    %p136 = scmp.ne.s32.totalorder %s128, %s131
    %p137 = scmp.eq.s32.totalorder %s10, 0
    %p138 = por %p136, %p137
    %p139 = scmp.ne.s32.totalorder %s128, %s131
    %p140 = scmp.eq.s32.totalorder %s15, 1
    %p141 = por %p139, %p140
    %p142 = scmp.ne.s32.totalorder %s131, %s132
    %p143 = scmp.eq.s32.totalorder %s15, 0
    %p144 = por %p142, %p143
    %p145 = scmp.ne.s32.totalorder %s131, %s132
    %p146 = scmp.eq.s32.totalorder %s16, 1
    %p147 = por %p145, %p146
    %p149 = scmp.ne.s32.totalorder %s132, %s148
    %p150 = scmp.eq.s32.totalorder %s16, 0
    %p151 = por %p149, %p150
    %p152 = scmp.le.s32.totalorder 1, %s10
    %p153 = scmp.lt.s32.totalorder %s10, 3
    %p154 = pnand %p152, %p153
    %p155 = pneg %p154
    // Predicated region
    $region9: #{graph_autoencoder_forward.10} parent=5 // pred_check
      _
    $region10: #{graph_autoencoder_forward.10} parent=5 // pred_check_branch
      %157 = sbr.rel (%p154) target = $region12
    $region11: #{graph_autoencoder_forward.10} parent=5 // pred_region
      %s158 = ssub.s32 %s10, 1
      // Predicated region
      $region13: #{graph_autoencoder_forward.10} parent=11 // pred_check
        %p159 = pneg %p71
      $region14: #{graph_autoencoder_forward.10} parent=11 // pred_check_branch
        %161 = sbr.rel (%p159) target = $region16
      $region15: #{graph_autoencoder_forward.10} parent=11 // pred_region
        _
      $region16: #{graph_autoencoder_forward.10} parent=11 // pred_fallthru
        _
      // Predicated region
      $region17: #{graph_autoencoder_forward.10} parent=11 // pred_check
        %p162 = pneg %p118
      $region18: #{graph_autoencoder_forward.10} parent=11 // pred_check_branch
        %164 = sbr.rel (%p162) target = $region20
      $region19: #{graph_autoencoder_forward.10} parent=11 // pred_region
        _
      $region20: #{graph_autoencoder_forward.10} parent=11 // pred_fallthru
        _
    $region12: #{graph_autoencoder_forward.10} parent=5 // pred_fallthru
      _
    %p165 = scmp.lt.s32.totalorder %s10, 2
    // Predicated region
    $region21: #{graph_autoencoder_forward.10} parent=5 // pred_check
      %p166 = pneg %p165
    $region22: #{graph_autoencoder_forward.10} parent=5 // pred_check_branch
      %168 = sbr.rel (%p166) target = $region24
    $region23: #{graph_autoencoder_forward.10} parent=5 // pred_region
      // Predicated region
      $region25: #{graph_autoencoder_forward.10} parent=23 // pred_check
        %p169 = pneg %p44
      $region26: #{graph_autoencoder_forward.10} parent=23 // pred_check_branch
        %171 = sbr.rel (%p169) target = $region28
      $region27: #{graph_autoencoder_forward.10} parent=23 // pred_region
        %p172 = scmp.lt.s32.totalorder %s17, 1
        %s173 = scalar_select %p172, %s17, 1
        %p174 = scmp.lt.s32.totalorder %s18, 0
        %s175 = scalar_select %p174, %s18, 0
        %s176 = sadd.s32 %s175, %s173
        %s177 = smul.addr %s176, 4
        %s178 = scalar_lea.vmem %s0, %s177
      $region28: #{graph_autoencoder_forward.10} parent=23 // pred_fallthru
        _
      // Predicated region
      $region29: #{graph_autoencoder_forward.10} parent=23 // pred_check
        %p179 = pneg %p91
      $region30: #{graph_autoencoder_forward.10} parent=23 // pred_check_branch
        %181 = sbr.rel (%p179) target = $region32
      $region31: #{graph_autoencoder_forward.10} parent=23 // pred_region
        %p182 = scmp.lt.s32.totalorder %s17, 1
        %s183 = scalar_select %p182, %s17, 1
        %s184 = smul.addr %s183, 8
        %s185 = scalar_lea.vmem %s2, %s184
      $region32: #{graph_autoencoder_forward.10} parent=23 // pred_fallthru
        _
    $region24: #{graph_autoencoder_forward.10} parent=5 // pred_fallthru
      _
    %p186 = scmp.le.s32.totalorder 1, %s10
    %p187 = scmp.lt.s32.totalorder %s10, 3
    %p188 = pnand %p186, %p187
    %p189 = pneg %p188
    // Predicated region
    $region33: #{graph_autoencoder_forward.10} parent=5 // pred_check
      _
    $region34: #{graph_autoencoder_forward.10} parent=5 // pred_check_branch
      %191 = sbr.rel (%p188) target = $region36
    $region35: #{graph_autoencoder_forward.10} parent=5 // pred_region
      %s192 = ssub.s32 %s10, 1
      %p193 = scmp.lt.s32.totalorder %s19, 1
      %s194 = scalar_select %p193, %s19, 1
      %p195 = scmp.lt.s32.totalorder %s20, 0
      %s196 = scalar_select %p195, %s20, 0
      %s197 = sadd.s32 %s196, %s194
      %s198 = smul.addr %s197, 4
      %s199 = scalar_lea.vmem %s0, %s198
      %p200 = pneg %p50
      %p201 = pneg %p47
      %p202 = pneg %p71
      %p203 = pneg %p68
      %p204 = scmp.lt.s32.totalorder %s19, 1
      %s205 = scalar_select %p204, %s19, 1
      %s206 = smul.addr %s205, 8
      %s207 = scalar_lea.vmem %s2, %s206
      %p208 = pneg %p97
      %p209 = pneg %p94
      %p210 = pneg %p118
      %p211 = pneg %p115
      %p212 = pneg %p144
      %p213 = pneg %p141
      %p214 = scmp.lt.s32.totalorder %s19, 1
      %s215 = scalar_select %p214, %s19, 1
      %s216 = smul.addr %s215, 4
      %s217 = scalar_lea.vmem %s4, %s216
      %p218 = scmp.lt.s32.totalorder %s19, 1
      %s219 = scalar_select %p218, %s19, 1
      %p220 = scmp.lt.s32.totalorder %s20, 0
      %s221 = scalar_select %p220, %s20, 0
      %s222 = sadd.s32 %s221, %s219
      %s223 = smul.addr %s222, 4
      %s224 = scalar_lea.vmem %s0, %s223
      %p225 = scmp.lt.s32.totalorder %s19, 1
      %s226 = scalar_select %p225, %s19, 1
      %s227 = smul.addr %s226, 8
      %s228 = scalar_lea.vmem %s2, %s227
      %p229 = scmp.lt.s32.totalorder %s19, 1
      %s230 = scalar_select %p229, %s19, 1
      %s231 = smul.addr %s230, 4
      %s232 = scalar_lea.vmem %s4, %s231
      %p234 = scmp.eq.s32.totalorder %s20, 0
      // Predicated region
      $region37: #{graph_autoencoder_forward.10} parent=35 // pred_check
        %p235 = pneg %p234
      $region38: #{graph_autoencoder_forward.10} parent=35 // pred_check_branch
        %237 = sbr.rel (%p235) target = $region40
      $region39: #{graph_autoencoder_forward.10} parent=35 // pred_region
        %238 = vst [vmem:[#allocation2] sm:$0xff] 0.0
      $region40: #{graph_autoencoder_forward.10} parent=35 // pred_fallthru
        _
      %s239 = smul.u32 %s20, 16
      %s240 = sshra.s32 %s239, 3
      %s241 = sand.u32 %s239, 7
      %s242 = smul.addr %s240, 4
      %s243 = scalar_lea.vmem %s1, %s242
      %v244 = vld [vmem:[%s243] sm:$0xf]
      %v245 = vld [vmem:[%s243 + $0x4] sm:$0xf]
      %v246 = vld [vmem:[#allocation2] sm:$0xff]
      %v247 = vld [vmem:[%s224] sm:$0xf]
      %v250 = vunpack.c.l.b16 %v244
      %v251 = vunpack.c.l.b16 %v245
      %v252 = vpack.c.b16 %v251, %v250
      %vm254 = vcmask 130048
      %v256 = vsel %vm254, %v247, 0
      %258 = vmatprep.subr.bf16.mxu0 0
      %259 = vmatpush1.bf16.msra.mxu0 %v252
      %260 = vmatprep.subr.bf16.mxu0 0
      %261 = vmatpush1.bf16.msra.mxu0 0
      %262 = vmatprep.subr.bf16.mxu0 0
      %263 = vmatpush1.bf16.msra.mxu0 0
      %264 = vmatprep.subr.bf16.mxu0 0
      %265 = vmatpush1.bf16.msra.mxu0 0
      %266 = vmatprep.subr.bf16.mxu0 0
      %267 = vmatpush1.bf16.msra.mxu0 0
      %268 = vmatprep.subr.bf16.mxu0 0
      %269 = vmatpush1.bf16.msra.mxu0 0
      %270 = vmatprep.subr.bf16.mxu0 0
      %271 = vmatpush1.bf16.msra.mxu0 0
      %272 = vmatprep.subr.bf16.mxu0 0
      %273 = vmatpush1.bf16.msra.mxu0 0
      %274 = vmatprep.subr.bf16.mxu0 0
      %275 = vmatpush1.bf16.msra.mxu0 0
      %276 = vmatprep.subr.bf16.mxu0 0
      %277 = vmatpush1.bf16.msra.mxu0 0
      %278 = vmatprep.subr.bf16.mxu0 0
      %279 = vmatpush1.bf16.msra.mxu0 0
      %280 = vmatprep.subr.bf16.mxu0 0
      %281 = vmatpush1.bf16.msra.mxu0 0
      %282 = vmatprep.subr.bf16.mxu0 0
      %283 = vmatpush1.bf16.msra.mxu0 0
      %284 = vmatprep.subr.bf16.mxu0 0
      %285 = vmatpush1.bf16.msra.mxu0 0
      %286 = vmatprep.subr.bf16.mxu0 0
      %287 = vmatpush1.bf16.msra.mxu0 0
      %288 = vmatprep.subr.bf16.mxu0 0
      %289 = vmatpush1.bf16.msra.mxu0 0
      %290 = vmatprep.mubr.bf16.mxu0 0
      %291 = vmatmul.mubr.bf16.gmra.mrb[0].mxu0 %v256
      %v292 = vpop.f32.mrb[0].mxu0
      %v293 = vadd.f32 0.0, %v292
      %v294 = vpop.f32.mrb[0].mxu0
      %v295 = vpop.f32.mrb[0].mxu0
      %v296 = vpop.f32.mrb[0].mxu0
      %297 = vdwg.mxu0
      %v298 = vadd.f32 %v246, %v293
      %299 = vst [vmem:[#allocation2] sm:$0xff] %v298
      // Predicated region
      $region41: #{graph_autoencoder_forward.10} parent=35 // pred_check
        %p300 = pneg %p234
      $region42: #{graph_autoencoder_forward.10} parent=35 // pred_check_branch
        %302 = sbr.rel (%p300) target = $region44
      $region43: #{graph_autoencoder_forward.10} parent=35 // pred_region
        %v303 = vld [vmem:[%s228] sm:$0xff]
        %v304 = vld [vmem:[#allocation2] sm:$0xff]
        %306 = vset.pattern.permute.xlu0 0
        %307 = vperm.xlu0 %306, %v303
        %v308 = vpop.permute.xlu0 %307
        %v310 = vmul.f32 %v308, %v304
        %v311 = vld [vmem:[%s3] sm:$0x1]
        %v313 = vlaneseq
        %v314 = vshrl.u32 %v313, 7
        %v315 = vsub.s32 0, %v314
        %v316 = vrot.slane %v311, %v315
        %v318 = vadd.f32 %v310, %v316
        %v319 = vmax.f32 %v318, 0.0
        %v320 = vpack.c.bf16 %v319, %v319
        %321 = vst [vmem:[%s232] sm:$0xf] %v320
      $region44: #{graph_autoencoder_forward.10} parent=35 // pred_fallthru
        _
      %p322 = scmp.lt.s32.totalorder %s19, 1
      %s323 = scalar_select %p322, %s19, 1
      %s324 = smul.addr %s323, 4
      %s325 = scalar_lea.vmem %s4, %s324
      // Predicated region
      $region45: #{graph_autoencoder_forward.10} parent=35 // pred_check
        %p326 = pneg %p141
      $region46: #{graph_autoencoder_forward.10} parent=35 // pred_check_branch
        %328 = sbr.rel (%p326) target = $region48
      $region47: #{graph_autoencoder_forward.10} parent=35 // pred_region
        _
      $region48: #{graph_autoencoder_forward.10} parent=35 // pred_fallthru
        _
    $region36: #{graph_autoencoder_forward.10} parent=5 // pred_fallthru
      _
    %p329 = scmp.le.s32.totalorder 2, %s10
    // Predicated region
    $region49: #{graph_autoencoder_forward.10} parent=5 // pred_check
      %p330 = pneg %p329
    $region50: #{graph_autoencoder_forward.10} parent=5 // pred_check_branch
      %332 = sbr.rel (%p330) target = $region52
    $region51: #{graph_autoencoder_forward.10} parent=5 // pred_region
      %s333 = ssub.s32 %s10, 2
      // Predicated region
      $region53: #{graph_autoencoder_forward.10} parent=51 // pred_check
        %p334 = pneg %p147
      $region54: #{graph_autoencoder_forward.10} parent=51 // pred_check_branch
        %336 = sbr.rel (%p334) target = $region56
      $region55: #{graph_autoencoder_forward.10} parent=51 // pred_region
        %p337 = scmp.lt.s32.totalorder %s21, 1
        %s338 = scalar_select %p337, %s21, 1
        %s339 = smul.addr %s338, 4
        %s340 = scalar_lea.vmem %s4, %s339
      $region56: #{graph_autoencoder_forward.10} parent=51 // pred_fallthru
        _
    $region52: #{graph_autoencoder_forward.10} parent=5 // pred_fallthru
      _
  $region6: #{graph_autoencoder_forward.10} parent=0 // loop_footer
    %s14 = sadd.s32 1, %s10
  $region7: #{graph_autoencoder_forward.10} parent=0 // loop_footer_branch
    %9 = sbr.rel target = $region3
  $region8: #{graph_autoencoder_forward.10} parent=0 // loop_exit
    _

// kernel: graph_autoencoder_forward.9
$region0: #{graph_autoencoder_forward.9}
  #allocation0 [shape = 'u32[]', space=smem, size = 0x4, offset = 0x4, fixed_abs, tag = 'smem constant byte address 0x4 - core index']
  #allocation1 [shape = 'u32[144,128]{1,0:T(1,128)}', space=vmem, size = 0x12000, scoped, tag = 'internal scratch']
  %s0 = inlined_call_operand.vmem [shape: bf16[16,128], index: 0, kind: input, shape index: {}]
  %s1 = inlined_call_operand.vmem [shape: bf16[128,128], index: 1, kind: input, shape index: {}]
  %s2 = inlined_call_operand.vmem [shape: f32[16,1], index: 2, kind: input, shape index: {}]
  %s3 = inlined_call_operand.vmem [shape: bf16[16,128], index: 3, kind: output, shape index: {}]
  %s4 = sld [smem:[#allocation0]]
  $region45: #{graph_autoencoder_forward.9} parent=0
    _
  %s6 = ssub.s32 1, %s4
  %s7 = scalar_select 0, %s6, %s4
  loop: start=0, step=1, limit=4
  $region2: #{graph_autoencoder_forward.9} parent=0 // loop_pre_header
    _
  $region3: #{graph_autoencoder_forward.9} parent=0 // loop_header
    %s9 = sphi 0, %s13
    %p10 = scmp.ge.s32.totalorder %s9, 4
    %s19 = sphi 0, %s21
    %s22 = sphi 0, %s19
    %s23 = sphi 0, %s22
    %s39 = sphi 0, %s23
    %s43 = sphi 0, %s43
    %s45 = sphi 0, %s43
    %s46 = sphi 0, %s45
    %s60 = sphi 0, %s46
    %s66 = sphi 0, %s68
    %s69 = sphi 0, %s66
    %s70 = sphi 0, %s69
    %s86 = sphi 0, %s70
    %s92 = sphi 0, %s94
    %s95 = sphi 0, %s92
    %s96 = sphi 0, %s95
    %s112 = sphi 0, %s96
  $region4: #{graph_autoencoder_forward.9} parent=0 // loop_header_branch
    %12 = sbr.rel (%p10) target = $region8
  $region5: #{graph_autoencoder_forward.9} parent=0 // loop_body
    %s14 = ssub.s32 %s9, 1
    %s15 = ssub.s32 %s9, 2
    %s16 = sadd.s32 %s9, 1
    %s17 = ssub.s32 %s9, %s16
    %p18 = scmp.eq.s32.totalorder %s17, 0
    %s20 = sadd.s32 %s19, 1
    %s21 = scalar_select %p18, %s19, %s20
    %p24 = pneg %p18
    %p25 = scmp.eq.s32.totalorder %s9, 1
    %p26 = por %p24, %p25
    %p27 = scmp.ne.s32.totalorder %s19, %s22
    %p28 = scmp.eq.s32.totalorder %s9, 0
    %p29 = por %p27, %p28
    %p30 = scmp.ne.s32.totalorder %s19, %s22
    %p31 = scmp.eq.s32.totalorder %s14, 1
    %p32 = por %p30, %p31
    %p33 = scmp.ne.s32.totalorder %s22, %s23
    %p34 = scmp.eq.s32.totalorder %s14, 0
    %p35 = por %p33, %p34
    %p36 = scmp.ne.s32.totalorder %s22, %s23
    %p37 = scmp.eq.s32.totalorder %s15, 1
    %p38 = por %p36, %p37
    %p40 = scmp.ne.s32.totalorder %s23, %s39
    %p41 = scmp.eq.s32.totalorder %s15, 0
    %p42 = por %p40, %p41
    %s44 = sadd.s32 %s43, 1
    %p47 = scmp.eq.s32.totalorder %s9, 1
    %p48 = scmp.ne.s32.totalorder %s43, %s45
    %p49 = scmp.eq.s32.totalorder %s9, 0
    %p50 = por %p48, %p49
    %p51 = scmp.ne.s32.totalorder %s43, %s45
    %p52 = scmp.eq.s32.totalorder %s14, 1
    %p53 = por %p51, %p52
    %p54 = scmp.ne.s32.totalorder %s45, %s46
    %p55 = scmp.eq.s32.totalorder %s14, 0
    %p56 = por %p54, %p55
    %p57 = scmp.ne.s32.totalorder %s45, %s46
    %p58 = scmp.eq.s32.totalorder %s15, 1
    %p59 = por %p57, %p58
    %p61 = scmp.ne.s32.totalorder %s46, %s60
    %p62 = scmp.eq.s32.totalorder %s15, 0
    %p63 = por %p61, %p62
    %s64 = ssub.s32 %s9, %s16
    %p65 = scmp.eq.s32.totalorder %s64, 0
    %s67 = sadd.s32 %s66, 1
    %s68 = scalar_select %p65, %s66, %s67
    %p71 = pneg %p65
    %p72 = scmp.eq.s32.totalorder %s9, 1
    %p73 = por %p71, %p72
    %p74 = scmp.ne.s32.totalorder %s66, %s69
    %p75 = scmp.eq.s32.totalorder %s9, 0
    %p76 = por %p74, %p75
    %p77 = scmp.ne.s32.totalorder %s66, %s69
    %p78 = scmp.eq.s32.totalorder %s14, 1
    %p79 = por %p77, %p78
    %p80 = scmp.ne.s32.totalorder %s69, %s70
    %p81 = scmp.eq.s32.totalorder %s14, 0
    %p82 = por %p80, %p81
    %p83 = scmp.ne.s32.totalorder %s69, %s70
    %p84 = scmp.eq.s32.totalorder %s15, 1
    %p85 = por %p83, %p84
    %p87 = scmp.ne.s32.totalorder %s70, %s86
    %p88 = scmp.eq.s32.totalorder %s15, 0
    %p89 = por %p87, %p88
    %s90 = ssub.s32 %s9, %s16
    %p91 = scmp.eq.s32.totalorder %s90, 0
    %s93 = sadd.s32 %s92, 1
    %s94 = scalar_select %p91, %s92, %s93
    %p97 = pneg %p91
    %p98 = scmp.eq.s32.totalorder %s9, 1
    %p99 = por %p97, %p98
    %p100 = scmp.ne.s32.totalorder %s92, %s95
    %p101 = scmp.eq.s32.totalorder %s9, 0
    %p102 = por %p100, %p101
    %p103 = scmp.ne.s32.totalorder %s92, %s95
    %p104 = scmp.eq.s32.totalorder %s14, 1
    %p105 = por %p103, %p104
    %p106 = scmp.ne.s32.totalorder %s95, %s96
    %p107 = scmp.eq.s32.totalorder %s14, 0
    %p108 = por %p106, %p107
    %p109 = scmp.ne.s32.totalorder %s95, %s96
    %p110 = scmp.eq.s32.totalorder %s15, 1
    %p111 = por %p109, %p110
    %p113 = scmp.ne.s32.totalorder %s96, %s112
    %p114 = scmp.eq.s32.totalorder %s15, 0
    %p115 = por %p113, %p114
    %p116 = scmp.le.s32.totalorder 1, %s9
    %p117 = scmp.lt.s32.totalorder %s9, 3
    %p118 = pnand %p116, %p117
    %p119 = pneg %p118
    // Predicated region
    $region9: #{graph_autoencoder_forward.9} parent=5 // pred_check
      _
    $region10: #{graph_autoencoder_forward.9} parent=5 // pred_check_branch
      %121 = sbr.rel (%p118) target = $region12
    $region11: #{graph_autoencoder_forward.9} parent=5 // pred_region
      %s122 = ssub.s32 %s9, 1
      // Predicated region
      $region13: #{graph_autoencoder_forward.9} parent=11 // pred_check
        %p123 = pneg %p56
      $region14: #{graph_autoencoder_forward.9} parent=11 // pred_check_branch
        %125 = sbr.rel (%p123) target = $region16
      $region15: #{graph_autoencoder_forward.9} parent=11 // pred_region
        _
      $region16: #{graph_autoencoder_forward.9} parent=11 // pred_fallthru
        _
    $region12: #{graph_autoencoder_forward.9} parent=5 // pred_fallthru
      _
    %p126 = scmp.lt.s32.totalorder %s9, 2
    // Predicated region
    $region17: #{graph_autoencoder_forward.9} parent=5 // pred_check
      %p127 = pneg %p126
    $region18: #{graph_autoencoder_forward.9} parent=5 // pred_check_branch
      %129 = sbr.rel (%p127) target = $region20
    $region19: #{graph_autoencoder_forward.9} parent=5 // pred_region
      // Predicated region
      $region21: #{graph_autoencoder_forward.9} parent=19 // pred_check
        %p130 = pneg %p29
      $region22: #{graph_autoencoder_forward.9} parent=19 // pred_check_branch
        %132 = sbr.rel (%p130) target = $region24
      $region23: #{graph_autoencoder_forward.9} parent=19 // pred_region
        %p133 = scmp.lt.s32.totalorder %s9, 1
        %s134 = scalar_select %p133, %s9, 1
        %s135 = smul.addr %s134, 4
        %s136 = scalar_lea.vmem %s0, %s135
      $region24: #{graph_autoencoder_forward.9} parent=19 // pred_fallthru
        _
      // Predicated region
      $region25: #{graph_autoencoder_forward.9} parent=19 // pred_check
        %p137 = pneg %p76
      $region26: #{graph_autoencoder_forward.9} parent=19 // pred_check_branch
        %139 = sbr.rel (%p137) target = $region28
      $region27: #{graph_autoencoder_forward.9} parent=19 // pred_region
        %p140 = scmp.lt.s32.totalorder %s9, 1
        %s141 = scalar_select %p140, %s9, 1
        %s142 = smul.addr %s141, 8
        %s143 = scalar_lea.vmem %s2, %s142
      $region28: #{graph_autoencoder_forward.9} parent=19 // pred_fallthru
        _
    $region20: #{graph_autoencoder_forward.9} parent=5 // pred_fallthru
      _
    %p144 = scmp.le.s32.totalorder 1, %s9
    %p145 = scmp.lt.s32.totalorder %s9, 3
    %p146 = pnand %p144, %p145
    %p147 = pneg %p146
    // Predicated region
    $region29: #{graph_autoencoder_forward.9} parent=5 // pred_check
      _
    $region30: #{graph_autoencoder_forward.9} parent=5 // pred_check_branch
      %149 = sbr.rel (%p146) target = $region32
    $region31: #{graph_autoencoder_forward.9} parent=5 // pred_region
      %s150 = ssub.s32 %s9, 1
      %p151 = scmp.lt.s32.totalorder %s14, 1
      %s152 = scalar_select %p151, %s14, 1
      %s153 = smul.addr %s152, 4
      %s154 = scalar_lea.vmem %s0, %s153
      %p155 = pneg %p35
      %p156 = pneg %p32
      %p157 = pneg %p56
      %p158 = pneg %p53
      %p159 = scmp.lt.s32.totalorder %s14, 1
      %s160 = scalar_select %p159, %s14, 1
      %s161 = smul.addr %s160, 8
      %s162 = scalar_lea.vmem %s2, %s161
      %p163 = pneg %p82
      %p164 = pneg %p79
      %p165 = pneg %p108
      %p166 = pneg %p105
      %p167 = scmp.lt.s32.totalorder %s14, 1
      %s168 = scalar_select %p167, %s14, 1
      %s169 = smul.addr %s168, 4
      %s170 = scalar_lea.vmem %s3, %s169
      %p171 = scmp.lt.s32.totalorder %s14, 1
      %s172 = scalar_select %p171, %s14, 1
      %s173 = smul.addr %s172, 4
      %s174 = scalar_lea.vmem %s0, %s173
      %p175 = scmp.lt.s32.totalorder %s14, 1
      %s176 = scalar_select %p175, %s14, 1
      %s177 = smul.addr %s176, 8
      %s178 = scalar_lea.vmem %s2, %s177
      %p179 = scmp.lt.s32.totalorder %s14, 1
      %s180 = scalar_select %p179, %s14, 1
      %s181 = smul.addr %s180, 4
      %s182 = scalar_lea.vmem %s3, %s181
      %v184 = vld [vmem:[%s174] sm:$0xf]
      %v185 = vld [vmem:[%s1] sm:$0xf]
      %v186 = vld [vmem:[%s1 + $0x4] sm:$0xf]
      %v187 = vld [vmem:[%s1 + $0x8] sm:$0xf]
      %v188 = vld [vmem:[%s1 + $0xc] sm:$0xf]
      %v189 = vld [vmem:[%s1 + $0x10] sm:$0xf]
      %v190 = vld [vmem:[%s1 + $0x14] sm:$0xf]
      %v191 = vld [vmem:[%s1 + $0x18] sm:$0xf]
      %v192 = vld [vmem:[%s1 + $0x1c] sm:$0xf]
      %v193 = vld [vmem:[%s1 + $0x20] sm:$0xf]
      %v194 = vld [vmem:[%s1 + $0x24] sm:$0xf]
      %v195 = vld [vmem:[%s1 + $0x28] sm:$0xf]
      %v196 = vld [vmem:[%s1 + $0x2c] sm:$0xf]
      %v197 = vld [vmem:[%s1 + $0x30] sm:$0xf]
      %v198 = vld [vmem:[%s1 + $0x34] sm:$0xf]
      %v199 = vld [vmem:[%s1 + $0x38] sm:$0xf]
      %v200 = vld [vmem:[%s1 + $0x3c] sm:$0xf]
      %v217 = vunpack.c.l.b16 %v185
      %v218 = vunpack.c.l.b16 %v186
      %v219 = vunpack.c.l.b16 %v187
      %v220 = vunpack.c.l.b16 %v188
      %v221 = vunpack.c.l.b16 %v189
      %v222 = vunpack.c.l.b16 %v190
      %v223 = vunpack.c.l.b16 %v191
      %v224 = vunpack.c.l.b16 %v192
      %v225 = vunpack.c.l.b16 %v193
      %v226 = vunpack.c.l.b16 %v194
      %v227 = vunpack.c.l.b16 %v195
      %v228 = vunpack.c.l.b16 %v196
      %v229 = vunpack.c.l.b16 %v197
      %v230 = vunpack.c.l.b16 %v198
      %v231 = vunpack.c.l.b16 %v199
      %v232 = vunpack.c.l.b16 %v200
      %v233 = vpack.c.b16 %v218, %v217
      %v234 = vpack.c.b16 %v220, %v219
      %v235 = vpack.c.b16 %v222, %v221
      %v236 = vpack.c.b16 %v224, %v223
      %v237 = vpack.c.b16 %v226, %v225
      %v238 = vpack.c.b16 %v228, %v227
      %v239 = vpack.c.b16 %v230, %v229
      %v240 = vpack.c.b16 %v232, %v231
      %249 = vmatprep.subr.bf16.mxu0 0
      %250 = vmatpush1.bf16.msra.mxu0 %v233
      %251 = vmatprep.subr.bf16.mxu0 0
      %252 = vmatpush1.bf16.msra.mxu0 %v234
      %253 = vmatprep.subr.bf16.mxu0 0
      %254 = vmatpush1.bf16.msra.mxu0 %v235
      %255 = vmatprep.subr.bf16.mxu0 0
      %256 = vmatpush1.bf16.msra.mxu0 %v236
      %257 = vmatprep.subr.bf16.mxu0 0
      %258 = vmatpush1.bf16.msra.mxu0 %v237
      %259 = vmatprep.subr.bf16.mxu0 0
      %260 = vmatpush1.bf16.msra.mxu0 %v238
      %261 = vmatprep.subr.bf16.mxu0 0
      %262 = vmatpush1.bf16.msra.mxu0 %v239
      %263 = vmatprep.subr.bf16.mxu0 0
      %264 = vmatpush1.bf16.msra.mxu0 %v240
      %265 = vmatprep.subr.bf16.mxu0 0
      %266 = vmatpush1.bf16.msra.mxu0 0
      %267 = vmatprep.subr.bf16.mxu0 0
      %268 = vmatpush1.bf16.msra.mxu0 0
      %269 = vmatprep.subr.bf16.mxu0 0
      %270 = vmatpush1.bf16.msra.mxu0 0
      %271 = vmatprep.subr.bf16.mxu0 0
      %272 = vmatpush1.bf16.msra.mxu0 0
      %273 = vmatprep.subr.bf16.mxu0 0
      %274 = vmatpush1.bf16.msra.mxu0 0
      %275 = vmatprep.subr.bf16.mxu0 0
      %276 = vmatpush1.bf16.msra.mxu0 0
      %277 = vmatprep.subr.bf16.mxu0 0
      %278 = vmatpush1.bf16.msra.mxu0 0
      %279 = vmatprep.subr.bf16.mxu0 0
      %280 = vmatpush1.bf16.msra.mxu0 0
      %281 = vmatprep.mubr.bf16.mxu0 0
      %282 = vmatmul.mubr.bf16.gmra.mrb[0].mxu0 %v184
      %v283 = vpop.f32.mrb[0].mxu0
      %v284 = vadd.f32 0.0, %v283
      %v285 = vpop.f32.mrb[0].mxu0
      %v286 = vpop.f32.mrb[0].mxu0
      %v287 = vpop.f32.mrb[0].mxu0
      %288 = vdwg.mxu0
      %v289 = vld [vmem:[%s178] sm:$0xff]
      %291 = vset.pattern.permute.xlu0 0
      %292 = vperm.xlu0 %291, %v289
      %v293 = vpop.permute.xlu0 %292
      %v295 = vmul.f32 %v293, %v284
      %v296 = vpack.c.bf16 %v295, %v295
      %297 = vst [vmem:[%s182] sm:$0xf] %v296
      %p298 = scmp.lt.s32.totalorder %s14, 1
      %s299 = scalar_select %p298, %s14, 1
      %s300 = smul.addr %s299, 4
      %s301 = scalar_lea.vmem %s3, %s300
      // Predicated region
      $region33: #{graph_autoencoder_forward.9} parent=31 // pred_check
        %p302 = pneg %p105
      $region34: #{graph_autoencoder_forward.9} parent=31 // pred_check_branch
        %304 = sbr.rel (%p302) target = $region36
      $region35: #{graph_autoencoder_forward.9} parent=31 // pred_region
        _
      $region36: #{graph_autoencoder_forward.9} parent=31 // pred_fallthru
        _
    $region32: #{graph_autoencoder_forward.9} parent=5 // pred_fallthru
      _
    %p305 = scmp.le.s32.totalorder 2, %s9
    // Predicated region
    $region37: #{graph_autoencoder_forward.9} parent=5 // pred_check
      %p306 = pneg %p305
    $region38: #{graph_autoencoder_forward.9} parent=5 // pred_check_branch
      %308 = sbr.rel (%p306) target = $region40
    $region39: #{graph_autoencoder_forward.9} parent=5 // pred_region
      %s309 = ssub.s32 %s9, 2
      // Predicated region
      $region41: #{graph_autoencoder_forward.9} parent=39 // pred_check
        %p310 = pneg %p111
      $region42: #{graph_autoencoder_forward.9} parent=39 // pred_check_branch
        %312 = sbr.rel (%p310) target = $region44
      $region43: #{graph_autoencoder_forward.9} parent=39 // pred_region
        %p313 = scmp.lt.s32.totalorder %s15, 1
        %s314 = scalar_select %p313, %s15, 1
        %s315 = smul.addr %s314, 4
        %s316 = scalar_lea.vmem %s3, %s315
      $region44: #{graph_autoencoder_forward.9} parent=39 // pred_fallthru
        _
    $region40: #{graph_autoencoder_forward.9} parent=5 // pred_fallthru
      _
  $region6: #{graph_autoencoder_forward.9} parent=0 // loop_footer
    %s13 = sadd.s32 1, %s9
  $region7: #{graph_autoencoder_forward.9} parent=0 // loop_footer_branch
    %8 = sbr.rel target = $region3
  $region8: #{graph_autoencoder_forward.9} parent=0 // loop_exit
    _

// kernel: graph_autoencoder_forward.13
$region0: #{graph_autoencoder_forward.13}
  #allocation0 [shape = 'u32[]', space=smem, size = 0x4, offset = 0x4, fixed_abs, tag = 'smem constant byte address 0x4 - core index']
  #allocation1 [shape = 'u32[144,128]{1,0:T(1,128)}', space=vmem, size = 0x12000, scoped, tag = 'internal scratch']
  %s0 = inlined_call_operand.vmem [shape: bf16[16,128], index: 0, kind: input, shape index: {}]
  %s1 = inlined_call_operand.vmem [shape: bf16[128,256], index: 1, kind: input, shape index: {}]
  %s2 = inlined_call_operand.vmem [shape: f32[16,1], index: 2, kind: input, shape index: {}]
  %s3 = inlined_call_operand.vmem [shape: bf16[16,256], index: 3, kind: output, shape index: {}]
  %s4 = sld [smem:[#allocation0]]
  $region45: #{graph_autoencoder_forward.13} parent=0
    _
  %s6 = ssub.s32 1, %s4
  %s7 = scalar_select 0, %s6, %s4
  loop: start=0, step=1, limit=4
  $region2: #{graph_autoencoder_forward.13} parent=0 // loop_pre_header
    _
  $region3: #{graph_autoencoder_forward.13} parent=0 // loop_header
    %s9 = sphi 0, %s13
    %p10 = scmp.ge.s32.totalorder %s9, 4
    %s19 = sphi 0, %s21
    %s22 = sphi 0, %s19
    %s23 = sphi 0, %s22
    %s39 = sphi 0, %s23
    %s43 = sphi 0, %s43
    %s45 = sphi 0, %s43
    %s46 = sphi 0, %s45
    %s60 = sphi 0, %s46
    %s66 = sphi 0, %s68
    %s69 = sphi 0, %s66
    %s70 = sphi 0, %s69
    %s86 = sphi 0, %s70
    %s92 = sphi 0, %s94
    %s95 = sphi 0, %s92
    %s96 = sphi 0, %s95
    %s112 = sphi 0, %s96
  $region4: #{graph_autoencoder_forward.13} parent=0 // loop_header_branch
    %12 = sbr.rel (%p10) target = $region8
  $region5: #{graph_autoencoder_forward.13} parent=0 // loop_body
    %s14 = ssub.s32 %s9, 1
    %s15 = ssub.s32 %s9, 2
    %s16 = sadd.s32 %s9, 1
    %s17 = ssub.s32 %s9, %s16
    %p18 = scmp.eq.s32.totalorder %s17, 0
    %s20 = sadd.s32 %s19, 1
    %s21 = scalar_select %p18, %s19, %s20
    %p24 = pneg %p18
    %p25 = scmp.eq.s32.totalorder %s9, 1
    %p26 = por %p24, %p25
    %p27 = scmp.ne.s32.totalorder %s19, %s22
    %p28 = scmp.eq.s32.totalorder %s9, 0
    %p29 = por %p27, %p28
    %p30 = scmp.ne.s32.totalorder %s19, %s22
    %p31 = scmp.eq.s32.totalorder %s14, 1
    %p32 = por %p30, %p31
    %p33 = scmp.ne.s32.totalorder %s22, %s23
    %p34 = scmp.eq.s32.totalorder %s14, 0
    %p35 = por %p33, %p34
    %p36 = scmp.ne.s32.totalorder %s22, %s23
    %p37 = scmp.eq.s32.totalorder %s15, 1
    %p38 = por %p36, %p37
    %p40 = scmp.ne.s32.totalorder %s23, %s39
    %p41 = scmp.eq.s32.totalorder %s15, 0
    %p42 = por %p40, %p41
    %s44 = sadd.s32 %s43, 1
    %p47 = scmp.eq.s32.totalorder %s9, 1
    %p48 = scmp.ne.s32.totalorder %s43, %s45
    %p49 = scmp.eq.s32.totalorder %s9, 0
    %p50 = por %p48, %p49
    %p51 = scmp.ne.s32.totalorder %s43, %s45
    %p52 = scmp.eq.s32.totalorder %s14, 1
    %p53 = por %p51, %p52
    %p54 = scmp.ne.s32.totalorder %s45, %s46
    %p55 = scmp.eq.s32.totalorder %s14, 0
    %p56 = por %p54, %p55
    %p57 = scmp.ne.s32.totalorder %s45, %s46
    %p58 = scmp.eq.s32.totalorder %s15, 1
    %p59 = por %p57, %p58
    %p61 = scmp.ne.s32.totalorder %s46, %s60
    %p62 = scmp.eq.s32.totalorder %s15, 0
    %p63 = por %p61, %p62
    %s64 = ssub.s32 %s9, %s16
    %p65 = scmp.eq.s32.totalorder %s64, 0
    %s67 = sadd.s32 %s66, 1
    %s68 = scalar_select %p65, %s66, %s67
    %p71 = pneg %p65
    %p72 = scmp.eq.s32.totalorder %s9, 1
    %p73 = por %p71, %p72
    %p74 = scmp.ne.s32.totalorder %s66, %s69
    %p75 = scmp.eq.s32.totalorder %s9, 0
    %p76 = por %p74, %p75
    %p77 = scmp.ne.s32.totalorder %s66, %s69
    %p78 = scmp.eq.s32.totalorder %s14, 1
    %p79 = por %p77, %p78
    %p80 = scmp.ne.s32.totalorder %s69, %s70
    %p81 = scmp.eq.s32.totalorder %s14, 0
    %p82 = por %p80, %p81
    %p83 = scmp.ne.s32.totalorder %s69, %s70
    %p84 = scmp.eq.s32.totalorder %s15, 1
    %p85 = por %p83, %p84
    %p87 = scmp.ne.s32.totalorder %s70, %s86
    %p88 = scmp.eq.s32.totalorder %s15, 0
    %p89 = por %p87, %p88
    %s90 = ssub.s32 %s9, %s16
    %p91 = scmp.eq.s32.totalorder %s90, 0
    %s93 = sadd.s32 %s92, 1
    %s94 = scalar_select %p91, %s92, %s93
    %p97 = pneg %p91
    %p98 = scmp.eq.s32.totalorder %s9, 1
    %p99 = por %p97, %p98
    %p100 = scmp.ne.s32.totalorder %s92, %s95
    %p101 = scmp.eq.s32.totalorder %s9, 0
    %p102 = por %p100, %p101
    %p103 = scmp.ne.s32.totalorder %s92, %s95
    %p104 = scmp.eq.s32.totalorder %s14, 1
    %p105 = por %p103, %p104
    %p106 = scmp.ne.s32.totalorder %s95, %s96
    %p107 = scmp.eq.s32.totalorder %s14, 0
    %p108 = por %p106, %p107
    %p109 = scmp.ne.s32.totalorder %s95, %s96
    %p110 = scmp.eq.s32.totalorder %s15, 1
    %p111 = por %p109, %p110
    %p113 = scmp.ne.s32.totalorder %s96, %s112
    %p114 = scmp.eq.s32.totalorder %s15, 0
    %p115 = por %p113, %p114
    %p116 = scmp.le.s32.totalorder 1, %s9
    %p117 = scmp.lt.s32.totalorder %s9, 3
    %p118 = pnand %p116, %p117
    %p119 = pneg %p118
    // Predicated region
    $region9: #{graph_autoencoder_forward.13} parent=5 // pred_check
      _
    $region10: #{graph_autoencoder_forward.13} parent=5 // pred_check_branch
      %121 = sbr.rel (%p118) target = $region12
    $region11: #{graph_autoencoder_forward.13} parent=5 // pred_region
      %s122 = ssub.s32 %s9, 1
      // Predicated region
      $region13: #{graph_autoencoder_forward.13} parent=11 // pred_check
        %p123 = pneg %p56
      $region14: #{graph_autoencoder_forward.13} parent=11 // pred_check_branch
        %125 = sbr.rel (%p123) target = $region16
      $region15: #{graph_autoencoder_forward.13} parent=11 // pred_region
        _
      $region16: #{graph_autoencoder_forward.13} parent=11 // pred_fallthru
        _
    $region12: #{graph_autoencoder_forward.13} parent=5 // pred_fallthru
      _
    %p126 = scmp.lt.s32.totalorder %s9, 2
    // Predicated region
    $region17: #{graph_autoencoder_forward.13} parent=5 // pred_check
      %p127 = pneg %p126
    $region18: #{graph_autoencoder_forward.13} parent=5 // pred_check_branch
      %129 = sbr.rel (%p127) target = $region20
    $region19: #{graph_autoencoder_forward.13} parent=5 // pred_region
      // Predicated region
      $region21: #{graph_autoencoder_forward.13} parent=19 // pred_check
        %p130 = pneg %p29
      $region22: #{graph_autoencoder_forward.13} parent=19 // pred_check_branch
        %132 = sbr.rel (%p130) target = $region24
      $region23: #{graph_autoencoder_forward.13} parent=19 // pred_region
        %p133 = scmp.lt.s32.totalorder %s9, 1
        %s134 = scalar_select %p133, %s9, 1
        %s135 = smul.addr %s134, 4
        %s136 = scalar_lea.vmem %s0, %s135
      $region24: #{graph_autoencoder_forward.13} parent=19 // pred_fallthru
        _
      // Predicated region
      $region25: #{graph_autoencoder_forward.13} parent=19 // pred_check
        %p137 = pneg %p76
      $region26: #{graph_autoencoder_forward.13} parent=19 // pred_check_branch
        %139 = sbr.rel (%p137) target = $region28
      $region27: #{graph_autoencoder_forward.13} parent=19 // pred_region
        %p140 = scmp.lt.s32.totalorder %s9, 1
        %s141 = scalar_select %p140, %s9, 1
        %s142 = smul.addr %s141, 8
        %s143 = scalar_lea.vmem %s2, %s142
      $region28: #{graph_autoencoder_forward.13} parent=19 // pred_fallthru
        _
    $region20: #{graph_autoencoder_forward.13} parent=5 // pred_fallthru
      _
    %p144 = scmp.le.s32.totalorder 1, %s9
    %p145 = scmp.lt.s32.totalorder %s9, 3
    %p146 = pnand %p144, %p145
    %p147 = pneg %p146
    // Predicated region
    $region29: #{graph_autoencoder_forward.13} parent=5 // pred_check
      _
    $region30: #{graph_autoencoder_forward.13} parent=5 // pred_check_branch
      %149 = sbr.rel (%p146) target = $region32
    $region31: #{graph_autoencoder_forward.13} parent=5 // pred_region
      %s150 = ssub.s32 %s9, 1
      %p151 = scmp.lt.s32.totalorder %s14, 1
      %s152 = scalar_select %p151, %s14, 1
      %s153 = smul.addr %s152, 4
      %s154 = scalar_lea.vmem %s0, %s153
      %p155 = pneg %p35
      %p156 = pneg %p32
      %p157 = pneg %p56
      %p158 = pneg %p53
      %p159 = scmp.lt.s32.totalorder %s14, 1
      %s160 = scalar_select %p159, %s14, 1
      %s161 = smul.addr %s160, 8
      %s162 = scalar_lea.vmem %s2, %s161
      %p163 = pneg %p82
      %p164 = pneg %p79
      %p165 = pneg %p108
      %p166 = pneg %p105
      %p167 = scmp.lt.s32.totalorder %s14, 1
      %s168 = scalar_select %p167, %s14, 1
      %s169 = smul.addr %s168, 2
      %s170 = smul.addr %s169, 4
      %s171 = scalar_lea.vmem %s3, %s170
      %p172 = scmp.lt.s32.totalorder %s14, 1
      %s173 = scalar_select %p172, %s14, 1
      %s174 = smul.addr %s173, 4
      %s175 = scalar_lea.vmem %s0, %s174
      %p176 = scmp.lt.s32.totalorder %s14, 1
      %s177 = scalar_select %p176, %s14, 1
      %s178 = smul.addr %s177, 8
      %s179 = scalar_lea.vmem %s2, %s178
      %p180 = scmp.lt.s32.totalorder %s14, 1
      %s181 = scalar_select %p180, %s14, 1
      %s182 = smul.addr %s181, 2
      %s183 = smul.addr %s182, 4
      %s184 = scalar_lea.vmem %s3, %s183
      %v186 = vld [vmem:[%s175] sm:$0xf]
      %v187 = vld [vmem:[%s1] sm:$0xff]
      %v188 = vld [vmem:[%s1 + $0x8] sm:$0xff]
      %v189 = vld [vmem:[%s1 + $0x10] sm:$0xff]
      %v190 = vld [vmem:[%s1 + $0x18] sm:$0xff]
      %v191 = vld [vmem:[%s1 + $0x20] sm:$0xff]
      %v192 = vld [vmem:[%s1 + $0x28] sm:$0xff]
      %v193 = vld [vmem:[%s1 + $0x30] sm:$0xff]
      %v194 = vld [vmem:[%s1 + $0x38] sm:$0xff]
      %v195 = vld [vmem:[%s1 + $0x40] sm:$0xff]
      %v196 = vld [vmem:[%s1 + $0x48] sm:$0xff]
      %v197 = vld [vmem:[%s1 + $0x50] sm:$0xff]
      %v198 = vld [vmem:[%s1 + $0x58] sm:$0xff]
      %v199 = vld [vmem:[%s1 + $0x60] sm:$0xff]
      %v200 = vld [vmem:[%s1 + $0x68] sm:$0xff]
      %v201 = vld [vmem:[%s1 + $0x70] sm:$0xff]
      %v202 = vld [vmem:[%s1 + $0x78] sm:$0xff]
      %v219 = vunpack.c.l.b16 %v187
      %v220 = vunpack.c.h.b16 %v187
      %v221 = vunpack.c.l.b16 %v188
      %v222 = vunpack.c.h.b16 %v188
      %v223 = vunpack.c.l.b16 %v189
      %v224 = vunpack.c.h.b16 %v189
      %v225 = vunpack.c.l.b16 %v190
      %v226 = vunpack.c.h.b16 %v190
      %v227 = vunpack.c.l.b16 %v191
      %v228 = vunpack.c.h.b16 %v191
      %v229 = vunpack.c.l.b16 %v192
      %v230 = vunpack.c.h.b16 %v192
      %v231 = vunpack.c.l.b16 %v193
      %v232 = vunpack.c.h.b16 %v193
      %v233 = vunpack.c.l.b16 %v194
      %v234 = vunpack.c.h.b16 %v194
      %v235 = vunpack.c.l.b16 %v195
      %v236 = vunpack.c.h.b16 %v195
      %v237 = vunpack.c.l.b16 %v196
      %v238 = vunpack.c.h.b16 %v196
      %v239 = vunpack.c.l.b16 %v197
      %v240 = vunpack.c.h.b16 %v197
      %v241 = vunpack.c.l.b16 %v198
      %v242 = vunpack.c.h.b16 %v198
      %v243 = vunpack.c.l.b16 %v199
      %v244 = vunpack.c.h.b16 %v199
      %v245 = vunpack.c.l.b16 %v200
      %v246 = vunpack.c.h.b16 %v200
      %v247 = vunpack.c.l.b16 %v201
      %v248 = vunpack.c.h.b16 %v201
      %v249 = vunpack.c.l.b16 %v202
      %v250 = vunpack.c.h.b16 %v202
      %v251 = vpack.c.b16 %v221, %v219
      %v252 = vpack.c.b16 %v222, %v220
      %v253 = vpack.c.b16 %v225, %v223
      %v254 = vpack.c.b16 %v226, %v224
      %v255 = vpack.c.b16 %v229, %v227
      %v256 = vpack.c.b16 %v230, %v228
      %v257 = vpack.c.b16 %v233, %v231
      %v258 = vpack.c.b16 %v234, %v232
      %v259 = vpack.c.b16 %v237, %v235
      %v260 = vpack.c.b16 %v238, %v236
      %v261 = vpack.c.b16 %v241, %v239
      %v262 = vpack.c.b16 %v242, %v240
      %v263 = vpack.c.b16 %v245, %v243
      %v264 = vpack.c.b16 %v246, %v244
      %v265 = vpack.c.b16 %v249, %v247
      %v266 = vpack.c.b16 %v250, %v248
      %283 = vmatprep.subr.bf16.mxu0 %v252
      %284 = vmatpush1.bf16.msra.mxu0 %v251
      %285 = vmatprep.subr.bf16.mxu0 %v254
      %286 = vmatpush1.bf16.msra.mxu0 %v253
      %287 = vmatprep.subr.bf16.mxu0 %v256
      %288 = vmatpush1.bf16.msra.mxu0 %v255
      %289 = vmatprep.subr.bf16.mxu0 %v258
      %290 = vmatpush1.bf16.msra.mxu0 %v257
      %291 = vmatprep.subr.bf16.mxu0 %v260
      %292 = vmatpush1.bf16.msra.mxu0 %v259
      %293 = vmatprep.subr.bf16.mxu0 %v262
      %294 = vmatpush1.bf16.msra.mxu0 %v261
      %295 = vmatprep.subr.bf16.mxu0 %v264
      %296 = vmatpush1.bf16.msra.mxu0 %v263
      %297 = vmatprep.subr.bf16.mxu0 %v266
      %298 = vmatpush1.bf16.msra.mxu0 %v265
      %299 = vmatprep.subr.bf16.mxu0 0
      %300 = vmatpush1.bf16.msra.mxu0 0
      %301 = vmatprep.subr.bf16.mxu0 0
      %302 = vmatpush1.bf16.msra.mxu0 0
      %303 = vmatprep.subr.bf16.mxu0 0
      %304 = vmatpush1.bf16.msra.mxu0 0
      %305 = vmatprep.subr.bf16.mxu0 0
      %306 = vmatpush1.bf16.msra.mxu0 0
      %307 = vmatprep.subr.bf16.mxu0 0
      %308 = vmatpush1.bf16.msra.mxu0 0
      %309 = vmatprep.subr.bf16.mxu0 0
      %310 = vmatpush1.bf16.msra.mxu0 0
      %311 = vmatprep.subr.bf16.mxu0 0
      %312 = vmatpush1.bf16.msra.mxu0 0
      %313 = vmatprep.subr.bf16.mxu0 0
      %314 = vmatpush1.bf16.msra.mxu0 0
      %315 = vmatprep.mubr.bf16.mxu0 0
      %316 = vmatmul.mubr.bf16.gmra.mrb[0].mxu0 %v186
      %v317 = vpop.f32.mrb[0].mxu0
      %v318 = vadd.f32 0.0, %v317
      %v319 = vpop.f32.mrb[0].mxu0
      %v320 = vadd.f32 0.0, %v319
      %v321 = vpop.f32.mrb[0].mxu0
      %v322 = vpop.f32.mrb[0].mxu0
      %323 = vdwg.mxu0
      %v324 = vld [vmem:[%s179] sm:$0xff]
      %326 = vset.pattern.permute.xlu0 0
      %327 = vperm.xlu0 %326, %v324
      %v328 = vpop.permute.xlu0 %327
      %v330 = vmul.f32 %v328, %v318
      %v331 = vmul.f32 %v328, %v320
      %v332 = vpack.c.bf16 %v330, %v330
      %v333 = vpack.c.bf16 %v331, %v331
      %v336 = vunpack.c.l.b16 %v332
      %v337 = vunpack.c.l.b16 %v333
      %v338 = vpack.c.b16 %v337, %v336
      %340 = vst [vmem:[%s184] sm:$0xff] %v338
      %p341 = scmp.lt.s32.totalorder %s14, 1
      %s342 = scalar_select %p341, %s14, 1
      %s343 = smul.addr %s342, 2
      %s344 = smul.addr %s343, 4
      %s345 = scalar_lea.vmem %s3, %s344
      // Predicated region
      $region33: #{graph_autoencoder_forward.13} parent=31 // pred_check
        %p346 = pneg %p105
      $region34: #{graph_autoencoder_forward.13} parent=31 // pred_check_branch
        %348 = sbr.rel (%p346) target = $region36
      $region35: #{graph_autoencoder_forward.13} parent=31 // pred_region
        _
      $region36: #{graph_autoencoder_forward.13} parent=31 // pred_fallthru
        _
    $region32: #{graph_autoencoder_forward.13} parent=5 // pred_fallthru
      _
    %p349 = scmp.le.s32.totalorder 2, %s9
    // Predicated region
    $region37: #{graph_autoencoder_forward.13} parent=5 // pred_check
      %p350 = pneg %p349
    $region38: #{graph_autoencoder_forward.13} parent=5 // pred_check_branch
      %352 = sbr.rel (%p350) target = $region40
    $region39: #{graph_autoencoder_forward.13} parent=5 // pred_region
      %s353 = ssub.s32 %s9, 2
      // Predicated region
      $region41: #{graph_autoencoder_forward.13} parent=39 // pred_check
        %p354 = pneg %p111
      $region42: #{graph_autoencoder_forward.13} parent=39 // pred_check_branch
        %356 = sbr.rel (%p354) target = $region44
      $region43: #{graph_autoencoder_forward.13} parent=39 // pred_region
        %p357 = scmp.lt.s32.totalorder %s15, 1
        %s358 = scalar_select %p357, %s15, 1
        %s359 = smul.addr %s358, 2
        %s360 = smul.addr %s359, 4
        %s361 = scalar_lea.vmem %s3, %s360
      $region44: #{graph_autoencoder_forward.13} parent=39 // pred_fallthru
        _
    $region40: #{graph_autoencoder_forward.13} parent=5 // pred_fallthru
      _
  $region6: #{graph_autoencoder_forward.13} parent=0 // loop_footer
    %s13 = sadd.s32 1, %s9
  $region7: #{graph_autoencoder_forward.13} parent=0 // loop_footer_branch
    %8 = sbr.rel target = $region3
  $region8: #{graph_autoencoder_forward.13} parent=0 // loop_exit
    _

// kernel: graph_autoencoder_forward.15
$region0: #{graph_autoencoder_forward.15}
  #allocation0 [shape = 'u32[]', space=smem, size = 0x4, offset = 0x4, fixed_abs, tag = 'smem constant byte address 0x4 - core index']
  #allocation1 [shape = 'u32[144,128]{1,0:T(1,128)}', space=vmem, size = 0x12000, scoped, tag = 'internal scratch']
  %s0 = inlined_call_operand.vmem [shape: bf16[16,256], index: 0, kind: input, shape index: {}]
  %s1 = inlined_call_operand.vmem [shape: bf16[128,128], index: 1, kind: input, shape index: {}]
  %s2 = inlined_call_operand.vmem [shape: f32[16,1], index: 2, kind: input, shape index: {}]
  %s3 = inlined_call_operand.vmem [shape: bf16[16,128], index: 3, kind: output, shape index: {}]
  %s4 = sld [smem:[#allocation0]]
  $region45: #{graph_autoencoder_forward.15} parent=0
    _
  %s6 = ssub.s32 1, %s4
  %s7 = scalar_select 0, %s6, %s4
  loop: start=0, step=1, limit=4
  $region2: #{graph_autoencoder_forward.15} parent=0 // loop_pre_header
    _
  $region3: #{graph_autoencoder_forward.15} parent=0 // loop_header
    %s9 = sphi 0, %s13
    %p10 = scmp.ge.s32.totalorder %s9, 4
    %s19 = sphi 0, %s21
    %s22 = sphi 0, %s19
    %s23 = sphi 0, %s22
    %s39 = sphi 0, %s23
    %s43 = sphi 0, %s43
    %s45 = sphi 0, %s43
    %s46 = sphi 0, %s45
    %s60 = sphi 0, %s46
    %s66 = sphi 0, %s68
    %s69 = sphi 0, %s66
    %s70 = sphi 0, %s69
    %s86 = sphi 0, %s70
    %s92 = sphi 0, %s94
    %s95 = sphi 0, %s92
    %s96 = sphi 0, %s95
    %s112 = sphi 0, %s96
  $region4: #{graph_autoencoder_forward.15} parent=0 // loop_header_branch
    %12 = sbr.rel (%p10) target = $region8
  $region5: #{graph_autoencoder_forward.15} parent=0 // loop_body
    %s14 = ssub.s32 %s9, 1
    %s15 = ssub.s32 %s9, 2
    %s16 = sadd.s32 %s9, 1
    %s17 = ssub.s32 %s9, %s16
    %p18 = scmp.eq.s32.totalorder %s17, 0
    %s20 = sadd.s32 %s19, 1
    %s21 = scalar_select %p18, %s19, %s20
    %p24 = pneg %p18
    %p25 = scmp.eq.s32.totalorder %s9, 1
    %p26 = por %p24, %p25
    %p27 = scmp.ne.s32.totalorder %s19, %s22
    %p28 = scmp.eq.s32.totalorder %s9, 0
    %p29 = por %p27, %p28
    %p30 = scmp.ne.s32.totalorder %s19, %s22
    %p31 = scmp.eq.s32.totalorder %s14, 1
    %p32 = por %p30, %p31
    %p33 = scmp.ne.s32.totalorder %s22, %s23
    %p34 = scmp.eq.s32.totalorder %s14, 0
    %p35 = por %p33, %p34
    %p36 = scmp.ne.s32.totalorder %s22, %s23
    %p37 = scmp.eq.s32.totalorder %s15, 1
    %p38 = por %p36, %p37
    %p40 = scmp.ne.s32.totalorder %s23, %s39
    %p41 = scmp.eq.s32.totalorder %s15, 0
    %p42 = por %p40, %p41
    %s44 = sadd.s32 %s43, 1
    %p47 = scmp.eq.s32.totalorder %s9, 1
    %p48 = scmp.ne.s32.totalorder %s43, %s45
    %p49 = scmp.eq.s32.totalorder %s9, 0
    %p50 = por %p48, %p49
    %p51 = scmp.ne.s32.totalorder %s43, %s45
    %p52 = scmp.eq.s32.totalorder %s14, 1
    %p53 = por %p51, %p52
    %p54 = scmp.ne.s32.totalorder %s45, %s46
    %p55 = scmp.eq.s32.totalorder %s14, 0
    %p56 = por %p54, %p55
    %p57 = scmp.ne.s32.totalorder %s45, %s46
    %p58 = scmp.eq.s32.totalorder %s15, 1
    %p59 = por %p57, %p58
    %p61 = scmp.ne.s32.totalorder %s46, %s60
    %p62 = scmp.eq.s32.totalorder %s15, 0
    %p63 = por %p61, %p62
    %s64 = ssub.s32 %s9, %s16
    %p65 = scmp.eq.s32.totalorder %s64, 0
    %s67 = sadd.s32 %s66, 1
    %s68 = scalar_select %p65, %s66, %s67
    %p71 = pneg %p65
    %p72 = scmp.eq.s32.totalorder %s9, 1
    %p73 = por %p71, %p72
    %p74 = scmp.ne.s32.totalorder %s66, %s69
    %p75 = scmp.eq.s32.totalorder %s9, 0
    %p76 = por %p74, %p75
    %p77 = scmp.ne.s32.totalorder %s66, %s69
    %p78 = scmp.eq.s32.totalorder %s14, 1
    %p79 = por %p77, %p78
    %p80 = scmp.ne.s32.totalorder %s69, %s70
    %p81 = scmp.eq.s32.totalorder %s14, 0
    %p82 = por %p80, %p81
    %p83 = scmp.ne.s32.totalorder %s69, %s70
    %p84 = scmp.eq.s32.totalorder %s15, 1
    %p85 = por %p83, %p84
    %p87 = scmp.ne.s32.totalorder %s70, %s86
    %p88 = scmp.eq.s32.totalorder %s15, 0
    %p89 = por %p87, %p88
    %s90 = ssub.s32 %s9, %s16
    %p91 = scmp.eq.s32.totalorder %s90, 0
    %s93 = sadd.s32 %s92, 1
    %s94 = scalar_select %p91, %s92, %s93
    %p97 = pneg %p91
    %p98 = scmp.eq.s32.totalorder %s9, 1
    %p99 = por %p97, %p98
    %p100 = scmp.ne.s32.totalorder %s92, %s95
    %p101 = scmp.eq.s32.totalorder %s9, 0
    %p102 = por %p100, %p101
    %p103 = scmp.ne.s32.totalorder %s92, %s95
    %p104 = scmp.eq.s32.totalorder %s14, 1
    %p105 = por %p103, %p104
    %p106 = scmp.ne.s32.totalorder %s95, %s96
    %p107 = scmp.eq.s32.totalorder %s14, 0
    %p108 = por %p106, %p107
    %p109 = scmp.ne.s32.totalorder %s95, %s96
    %p110 = scmp.eq.s32.totalorder %s15, 1
    %p111 = por %p109, %p110
    %p113 = scmp.ne.s32.totalorder %s96, %s112
    %p114 = scmp.eq.s32.totalorder %s15, 0
    %p115 = por %p113, %p114
    %p116 = scmp.le.s32.totalorder 1, %s9
    %p117 = scmp.lt.s32.totalorder %s9, 3
    %p118 = pnand %p116, %p117
    %p119 = pneg %p118
    // Predicated region
    $region9: #{graph_autoencoder_forward.15} parent=5 // pred_check
      _
    $region10: #{graph_autoencoder_forward.15} parent=5 // pred_check_branch
      %121 = sbr.rel (%p118) target = $region12
    $region11: #{graph_autoencoder_forward.15} parent=5 // pred_region
      %s122 = ssub.s32 %s9, 1
      // Predicated region
      $region13: #{graph_autoencoder_forward.15} parent=11 // pred_check
        %p123 = pneg %p56
      $region14: #{graph_autoencoder_forward.15} parent=11 // pred_check_branch
        %125 = sbr.rel (%p123) target = $region16
      $region15: #{graph_autoencoder_forward.15} parent=11 // pred_region
        _
      $region16: #{graph_autoencoder_forward.15} parent=11 // pred_fallthru
        _
    $region12: #{graph_autoencoder_forward.15} parent=5 // pred_fallthru
      _
    %p126 = scmp.lt.s32.totalorder %s9, 2
    // Predicated region
    $region17: #{graph_autoencoder_forward.15} parent=5 // pred_check
      %p127 = pneg %p126
    $region18: #{graph_autoencoder_forward.15} parent=5 // pred_check_branch
      %129 = sbr.rel (%p127) target = $region20
    $region19: #{graph_autoencoder_forward.15} parent=5 // pred_region
      // Predicated region
      $region21: #{graph_autoencoder_forward.15} parent=19 // pred_check
        %p130 = pneg %p29
      $region22: #{graph_autoencoder_forward.15} parent=19 // pred_check_branch
        %132 = sbr.rel (%p130) target = $region24
      $region23: #{graph_autoencoder_forward.15} parent=19 // pred_region
        %p133 = scmp.lt.s32.totalorder %s9, 1
        %s134 = scalar_select %p133, %s9, 1
        %s135 = smul.addr %s134, 2
        %s136 = smul.addr %s135, 4
        %s137 = scalar_lea.vmem %s0, %s136
      $region24: #{graph_autoencoder_forward.15} parent=19 // pred_fallthru
        _
      // Predicated region
      $region25: #{graph_autoencoder_forward.15} parent=19 // pred_check
        %p138 = pneg %p76
      $region26: #{graph_autoencoder_forward.15} parent=19 // pred_check_branch
        %140 = sbr.rel (%p138) target = $region28
      $region27: #{graph_autoencoder_forward.15} parent=19 // pred_region
        %p141 = scmp.lt.s32.totalorder %s9, 1
        %s142 = scalar_select %p141, %s9, 1
        %s143 = smul.addr %s142, 8
        %s144 = scalar_lea.vmem %s2, %s143
      $region28: #{graph_autoencoder_forward.15} parent=19 // pred_fallthru
        _
    $region20: #{graph_autoencoder_forward.15} parent=5 // pred_fallthru
      _
    %p145 = scmp.le.s32.totalorder 1, %s9
    %p146 = scmp.lt.s32.totalorder %s9, 3
    %p147 = pnand %p145, %p146
    %p148 = pneg %p147
    // Predicated region
    $region29: #{graph_autoencoder_forward.15} parent=5 // pred_check
      _
    $region30: #{graph_autoencoder_forward.15} parent=5 // pred_check_branch
      %150 = sbr.rel (%p147) target = $region32
    $region31: #{graph_autoencoder_forward.15} parent=5 // pred_region
      %s151 = ssub.s32 %s9, 1
      %p152 = scmp.lt.s32.totalorder %s14, 1
      %s153 = scalar_select %p152, %s14, 1
      %s154 = smul.addr %s153, 2
      %s155 = smul.addr %s154, 4
      %s156 = scalar_lea.vmem %s0, %s155
      %p157 = pneg %p35
      %p158 = pneg %p32
      %p159 = pneg %p56
      %p160 = pneg %p53
      %p161 = scmp.lt.s32.totalorder %s14, 1
      %s162 = scalar_select %p161, %s14, 1
      %s163 = smul.addr %s162, 8
      %s164 = scalar_lea.vmem %s2, %s163
      %p165 = pneg %p82
      %p166 = pneg %p79
      %p167 = pneg %p108
      %p168 = pneg %p105
      %p169 = scmp.lt.s32.totalorder %s14, 1
      %s170 = scalar_select %p169, %s14, 1
      %s171 = smul.addr %s170, 4
      %s172 = scalar_lea.vmem %s3, %s171
      %p173 = scmp.lt.s32.totalorder %s14, 1
      %s174 = scalar_select %p173, %s14, 1
      %s175 = smul.addr %s174, 2
      %s176 = smul.addr %s175, 4
      %s177 = scalar_lea.vmem %s0, %s176
      %p178 = scmp.lt.s32.totalorder %s14, 1
      %s179 = scalar_select %p178, %s14, 1
      %s180 = smul.addr %s179, 8
      %s181 = scalar_lea.vmem %s2, %s180
      %p182 = scmp.lt.s32.totalorder %s14, 1
      %s183 = scalar_select %p182, %s14, 1
      %s184 = smul.addr %s183, 4
      %s185 = scalar_lea.vmem %s3, %s184
      %v187 = vld [vmem:[%s177] sm:$0xf]
      %v188 = vld [vmem:[%s1] sm:$0xf]
      %v189 = vld [vmem:[%s1 + $0x4] sm:$0xf]
      %v190 = vld [vmem:[%s1 + $0x8] sm:$0xf]
      %v191 = vld [vmem:[%s1 + $0xc] sm:$0xf]
      %v192 = vld [vmem:[%s1 + $0x10] sm:$0xf]
      %v193 = vld [vmem:[%s1 + $0x14] sm:$0xf]
      %v194 = vld [vmem:[%s1 + $0x18] sm:$0xf]
      %v195 = vld [vmem:[%s1 + $0x1c] sm:$0xf]
      %v196 = vld [vmem:[%s1 + $0x20] sm:$0xf]
      %v197 = vld [vmem:[%s1 + $0x24] sm:$0xf]
      %v198 = vld [vmem:[%s1 + $0x28] sm:$0xf]
      %v199 = vld [vmem:[%s1 + $0x2c] sm:$0xf]
      %v200 = vld [vmem:[%s1 + $0x30] sm:$0xf]
      %v201 = vld [vmem:[%s1 + $0x34] sm:$0xf]
      %v202 = vld [vmem:[%s1 + $0x38] sm:$0xf]
      %v203 = vld [vmem:[%s1 + $0x3c] sm:$0xf]
      %v220 = vunpack.c.l.b16 %v188
      %v221 = vunpack.c.l.b16 %v189
      %v222 = vunpack.c.l.b16 %v190
      %v223 = vunpack.c.l.b16 %v191
      %v224 = vunpack.c.l.b16 %v192
      %v225 = vunpack.c.l.b16 %v193
      %v226 = vunpack.c.l.b16 %v194
      %v227 = vunpack.c.l.b16 %v195
      %v228 = vunpack.c.l.b16 %v196
      %v229 = vunpack.c.l.b16 %v197
      %v230 = vunpack.c.l.b16 %v198
      %v231 = vunpack.c.l.b16 %v199
      %v232 = vunpack.c.l.b16 %v200
      %v233 = vunpack.c.l.b16 %v201
      %v234 = vunpack.c.l.b16 %v202
      %v235 = vunpack.c.l.b16 %v203
      %v236 = vpack.c.b16 %v221, %v220
      %v237 = vpack.c.b16 %v223, %v222
      %v238 = vpack.c.b16 %v225, %v224
      %v239 = vpack.c.b16 %v227, %v226
      %v240 = vpack.c.b16 %v229, %v228
      %v241 = vpack.c.b16 %v231, %v230
      %v242 = vpack.c.b16 %v233, %v232
      %v243 = vpack.c.b16 %v235, %v234
      %252 = vmatprep.subr.bf16.mxu0 0
      %253 = vmatpush1.bf16.msra.mxu0 %v236
      %254 = vmatprep.subr.bf16.mxu0 0
      %255 = vmatpush1.bf16.msra.mxu0 %v237
      %256 = vmatprep.subr.bf16.mxu0 0
      %257 = vmatpush1.bf16.msra.mxu0 %v238
      %258 = vmatprep.subr.bf16.mxu0 0
      %259 = vmatpush1.bf16.msra.mxu0 %v239
      %260 = vmatprep.subr.bf16.mxu0 0
      %261 = vmatpush1.bf16.msra.mxu0 %v240
      %262 = vmatprep.subr.bf16.mxu0 0
      %263 = vmatpush1.bf16.msra.mxu0 %v241
      %264 = vmatprep.subr.bf16.mxu0 0
      %265 = vmatpush1.bf16.msra.mxu0 %v242
      %266 = vmatprep.subr.bf16.mxu0 0
      %267 = vmatpush1.bf16.msra.mxu0 %v243
      %268 = vmatprep.subr.bf16.mxu0 0
      %269 = vmatpush1.bf16.msra.mxu0 0
      %270 = vmatprep.subr.bf16.mxu0 0
      %271 = vmatpush1.bf16.msra.mxu0 0
      %272 = vmatprep.subr.bf16.mxu0 0
      %273 = vmatpush1.bf16.msra.mxu0 0
      %274 = vmatprep.subr.bf16.mxu0 0
      %275 = vmatpush1.bf16.msra.mxu0 0
      %276 = vmatprep.subr.bf16.mxu0 0
      %277 = vmatpush1.bf16.msra.mxu0 0
      %278 = vmatprep.subr.bf16.mxu0 0
      %279 = vmatpush1.bf16.msra.mxu0 0
      %280 = vmatprep.subr.bf16.mxu0 0
      %281 = vmatpush1.bf16.msra.mxu0 0
      %282 = vmatprep.subr.bf16.mxu0 0
      %283 = vmatpush1.bf16.msra.mxu0 0
      %284 = vmatprep.mubr.bf16.mxu0 0
      %285 = vmatmul.mubr.bf16.gmra.mrb[0].mxu0 %v187
      %v286 = vpop.f32.mrb[0].mxu0
      %v287 = vadd.f32 0.0, %v286
      %v288 = vpop.f32.mrb[0].mxu0
      %v289 = vpop.f32.mrb[0].mxu0
      %v290 = vpop.f32.mrb[0].mxu0
      %291 = vdwg.mxu0
      %v292 = vld [vmem:[%s181] sm:$0xff]
      %294 = vset.pattern.permute.xlu0 0
      %295 = vperm.xlu0 %294, %v292
      %v296 = vpop.permute.xlu0 %295
      %v298 = vmul.f32 %v296, %v287
      %v299 = vpack.c.bf16 %v298, %v298
      %300 = vst [vmem:[%s185] sm:$0xf] %v299
      %p301 = scmp.lt.s32.totalorder %s14, 1
      %s302 = scalar_select %p301, %s14, 1
      %s303 = smul.addr %s302, 4
      %s304 = scalar_lea.vmem %s3, %s303
      // Predicated region
      $region33: #{graph_autoencoder_forward.15} parent=31 // pred_check
        %p305 = pneg %p105
      $region34: #{graph_autoencoder_forward.15} parent=31 // pred_check_branch
        %307 = sbr.rel (%p305) target = $region36
      $region35: #{graph_autoencoder_forward.15} parent=31 // pred_region
        _
      $region36: #{graph_autoencoder_forward.15} parent=31 // pred_fallthru
        _
    $region32: #{graph_autoencoder_forward.15} parent=5 // pred_fallthru
      _
    %p308 = scmp.le.s32.totalorder 2, %s9
    // Predicated region
    $region37: #{graph_autoencoder_forward.15} parent=5 // pred_check
      %p309 = pneg %p308
    $region38: #{graph_autoencoder_forward.15} parent=5 // pred_check_branch
      %311 = sbr.rel (%p309) target = $region40
    $region39: #{graph_autoencoder_forward.15} parent=5 // pred_region
      %s312 = ssub.s32 %s9, 2
      // Predicated region
      $region41: #{graph_autoencoder_forward.15} parent=39 // pred_check
        %p313 = pneg %p111
      $region42: #{graph_autoencoder_forward.15} parent=39 // pred_check_branch
        %315 = sbr.rel (%p313) target = $region44
      $region43: #{graph_autoencoder_forward.15} parent=39 // pred_region
        %p316 = scmp.lt.s32.totalorder %s15, 1
        %s317 = scalar_select %p316, %s15, 1
        %s318 = smul.addr %s317, 4
        %s319 = scalar_lea.vmem %s3, %s318
      $region44: #{graph_autoencoder_forward.15} parent=39 // pred_fallthru
        _
    $region40: #{graph_autoencoder_forward.15} parent=5 // pred_fallthru
      _
  $region6: #{graph_autoencoder_forward.15} parent=0 // loop_footer
    %s13 = sadd.s32 1, %s9
  $region7: #{graph_autoencoder_forward.15} parent=0 // loop_footer_branch
    %8 = sbr.rel target = $region3
  $region8: #{graph_autoencoder_forward.15} parent=0 // loop_exit
    _

// kernel: graph_autoencoder_forward.14
$region0: #{graph_autoencoder_forward.14}
  #allocation0 [shape = 'u32[]', space=smem, size = 0x4, offset = 0x4, fixed_abs, tag = 'smem constant byte address 0x4 - core index']
  #allocation1 [shape = 'u32[144,128]{1,0:T(1,128)}', space=vmem, size = 0x12000, scoped, tag = 'internal scratch']
  #allocation2 [shape = 'f32[8,256]{1,0:T(8,128)}', space=vmem, size = 0x2000, scoped, tag = 'scratch operand']
  %s0 = inlined_call_operand.vmem [shape: bf16[16,16], index: 0, kind: input, shape index: {}]
  %s1 = inlined_call_operand.vmem [shape: bf16[16,256], index: 1, kind: input, shape index: {}]
  %s2 = inlined_call_operand.vmem [shape: f32[16,1], index: 2, kind: input, shape index: {}]
  %s3 = inlined_call_operand.vmem [shape: f32[1,256], index: 3, kind: input, shape index: {}]
  %s4 = inlined_call_operand.vmem [shape: bf16[16,256], index: 4, kind: output, shape index: {}]
  %s5 = sld [smem:[#allocation0]]
  $region57: #{graph_autoencoder_forward.14} parent=0
    _
  %s7 = ssub.s32 1, %s5
  %s8 = scalar_select 0, %s7, %s5
  loop: start=0, step=1, limit=4
  $region2: #{graph_autoencoder_forward.14} parent=0 // loop_pre_header
    _
  $region3: #{graph_autoencoder_forward.14} parent=0 // loop_header
    %s10 = sphi 0, %s14
    %p11 = scmp.ge.s32.totalorder %s10, 4
    %s17 = sphi 0, %s29
    %s18 = sphi 0, %s25
    %s19 = sphi 0, %s17
    %s20 = sphi 0, %s18
    %s21 = sphi 0, %s19
    %s22 = sphi 0, %s20
    %s34 = sphi 0, %s36
    %s37 = sphi 0, %s34
    %s38 = sphi 0, %s37
    %s54 = sphi 0, %s38
    %s58 = sphi 0, %s58
    %s60 = sphi 0, %s58
    %s61 = sphi 0, %s60
    %s75 = sphi 0, %s61
    %s81 = sphi 0, %s83
    %s84 = sphi 0, %s81
    %s85 = sphi 0, %s84
    %s101 = sphi 0, %s85
    %s105 = sphi 0, %s105
    %s107 = sphi 0, %s105
    %s108 = sphi 0, %s107
    %s122 = sphi 0, %s108
    %s128 = sphi 0, %s130
    %s131 = sphi 0, %s128
    %s132 = sphi 0, %s131
    %s148 = sphi 0, %s132
  $region4: #{graph_autoencoder_forward.14} parent=0 // loop_header_branch
    %13 = sbr.rel (%p11) target = $region8
  $region5: #{graph_autoencoder_forward.14} parent=0 // loop_body
    %s15 = ssub.s32 %s10, 1
    %s16 = ssub.s32 %s10, 2
    %s23 = sadd.s32 1, %s18
    %p24 = scmp.ge.s32.totalorder %s23, 1
    %s25 = scalar_select %p24, 0, %s23
    %s26 = sadd.s32 1, %s17
    %s27 = scalar_select %p24, %s26, %s17
    %p28 = scmp.ge.s32.totalorder %s27, 2
    %s29 = scalar_select %p28, 0, %s27
    %s30 = ssub.s32 %s17, %s29
    %s31 = ssub.s32 %s18, %s25
    %s32 = sor.u32 %s30, %s31
    %p33 = scmp.eq.s32.totalorder %s32, 0
    %s35 = sadd.s32 %s34, 1
    %s36 = scalar_select %p33, %s34, %s35
    %p39 = pneg %p33
    %p40 = scmp.eq.s32.totalorder %s10, 1
    %p41 = por %p39, %p40
    %p42 = scmp.ne.s32.totalorder %s34, %s37
    %p43 = scmp.eq.s32.totalorder %s10, 0
    %p44 = por %p42, %p43
    %p45 = scmp.ne.s32.totalorder %s34, %s37
    %p46 = scmp.eq.s32.totalorder %s15, 1
    %p47 = por %p45, %p46
    %p48 = scmp.ne.s32.totalorder %s37, %s38
    %p49 = scmp.eq.s32.totalorder %s15, 0
    %p50 = por %p48, %p49
    %p51 = scmp.ne.s32.totalorder %s37, %s38
    %p52 = scmp.eq.s32.totalorder %s16, 1
    %p53 = por %p51, %p52
    %p55 = scmp.ne.s32.totalorder %s38, %s54
    %p56 = scmp.eq.s32.totalorder %s16, 0
    %p57 = por %p55, %p56
    %s59 = sadd.s32 %s58, 1
    %p62 = scmp.eq.s32.totalorder %s10, 1
    %p63 = scmp.ne.s32.totalorder %s58, %s60
    %p64 = scmp.eq.s32.totalorder %s10, 0
    %p65 = por %p63, %p64
    %p66 = scmp.ne.s32.totalorder %s58, %s60
    %p67 = scmp.eq.s32.totalorder %s15, 1
    %p68 = por %p66, %p67
    %p69 = scmp.ne.s32.totalorder %s60, %s61
    %p70 = scmp.eq.s32.totalorder %s15, 0
    %p71 = por %p69, %p70
    %p72 = scmp.ne.s32.totalorder %s60, %s61
    %p73 = scmp.eq.s32.totalorder %s16, 1
    %p74 = por %p72, %p73
    %p76 = scmp.ne.s32.totalorder %s61, %s75
    %p77 = scmp.eq.s32.totalorder %s16, 0
    %p78 = por %p76, %p77
    %s79 = ssub.s32 %s17, %s29
    %p80 = scmp.eq.s32.totalorder %s79, 0
    %s82 = sadd.s32 %s81, 1
    %s83 = scalar_select %p80, %s81, %s82
    %p86 = pneg %p80
    %p87 = scmp.eq.s32.totalorder %s10, 1
    %p88 = por %p86, %p87
    %p89 = scmp.ne.s32.totalorder %s81, %s84
    %p90 = scmp.eq.s32.totalorder %s10, 0
    %p91 = por %p89, %p90
    %p92 = scmp.ne.s32.totalorder %s81, %s84
    %p93 = scmp.eq.s32.totalorder %s15, 1
    %p94 = por %p92, %p93
    %p95 = scmp.ne.s32.totalorder %s84, %s85
    %p96 = scmp.eq.s32.totalorder %s15, 0
    %p97 = por %p95, %p96
    %p98 = scmp.ne.s32.totalorder %s84, %s85
    %p99 = scmp.eq.s32.totalorder %s16, 1
    %p100 = por %p98, %p99
    %p102 = scmp.ne.s32.totalorder %s85, %s101
    %p103 = scmp.eq.s32.totalorder %s16, 0
    %p104 = por %p102, %p103
    %s106 = sadd.s32 %s105, 1
    %p109 = scmp.eq.s32.totalorder %s10, 1
    %p110 = scmp.ne.s32.totalorder %s105, %s107
    %p111 = scmp.eq.s32.totalorder %s10, 0
    %p112 = por %p110, %p111
    %p113 = scmp.ne.s32.totalorder %s105, %s107
    %p114 = scmp.eq.s32.totalorder %s15, 1
    %p115 = por %p113, %p114
    %p116 = scmp.ne.s32.totalorder %s107, %s108
    %p117 = scmp.eq.s32.totalorder %s15, 0
    %p118 = por %p116, %p117
    %p119 = scmp.ne.s32.totalorder %s107, %s108
    %p120 = scmp.eq.s32.totalorder %s16, 1
    %p121 = por %p119, %p120
    %p123 = scmp.ne.s32.totalorder %s108, %s122
    %p124 = scmp.eq.s32.totalorder %s16, 0
    %p125 = por %p123, %p124
    %s126 = ssub.s32 %s17, %s29
    %p127 = scmp.eq.s32.totalorder %s126, 0
    %s129 = sadd.s32 %s128, 1
    %s130 = scalar_select %p127, %s128, %s129
    %p133 = pneg %p127
    %p134 = scmp.eq.s32.totalorder %s10, 1
    %p135 = por %p133, %p134
    %p136 = scmp.ne.s32.totalorder %s128, %s131
    %p137 = scmp.eq.s32.totalorder %s10, 0
    %p138 = por %p136, %p137
    %p139 = scmp.ne.s32.totalorder %s128, %s131
    %p140 = scmp.eq.s32.totalorder %s15, 1
    %p141 = por %p139, %p140
    %p142 = scmp.ne.s32.totalorder %s131, %s132
    %p143 = scmp.eq.s32.totalorder %s15, 0
    %p144 = por %p142, %p143
    %p145 = scmp.ne.s32.totalorder %s131, %s132
    %p146 = scmp.eq.s32.totalorder %s16, 1
    %p147 = por %p145, %p146
    %p149 = scmp.ne.s32.totalorder %s132, %s148
    %p150 = scmp.eq.s32.totalorder %s16, 0
    %p151 = por %p149, %p150
    %p152 = scmp.le.s32.totalorder 1, %s10
    %p153 = scmp.lt.s32.totalorder %s10, 3
    %p154 = pnand %p152, %p153
    %p155 = pneg %p154
    // Predicated region
    $region9: #{graph_autoencoder_forward.14} parent=5 // pred_check
      _
    $region10: #{graph_autoencoder_forward.14} parent=5 // pred_check_branch
      %157 = sbr.rel (%p154) target = $region12
    $region11: #{graph_autoencoder_forward.14} parent=5 // pred_region
      %s158 = ssub.s32 %s10, 1
      // Predicated region
      $region13: #{graph_autoencoder_forward.14} parent=11 // pred_check
        %p159 = pneg %p71
      $region14: #{graph_autoencoder_forward.14} parent=11 // pred_check_branch
        %161 = sbr.rel (%p159) target = $region16
      $region15: #{graph_autoencoder_forward.14} parent=11 // pred_region
        _
      $region16: #{graph_autoencoder_forward.14} parent=11 // pred_fallthru
        _
      // Predicated region
      $region17: #{graph_autoencoder_forward.14} parent=11 // pred_check
        %p162 = pneg %p118
      $region18: #{graph_autoencoder_forward.14} parent=11 // pred_check_branch
        %164 = sbr.rel (%p162) target = $region20
      $region19: #{graph_autoencoder_forward.14} parent=11 // pred_region
        _
      $region20: #{graph_autoencoder_forward.14} parent=11 // pred_fallthru
        _
    $region12: #{graph_autoencoder_forward.14} parent=5 // pred_fallthru
      _
    %p165 = scmp.lt.s32.totalorder %s10, 2
    // Predicated region
    $region21: #{graph_autoencoder_forward.14} parent=5 // pred_check
      %p166 = pneg %p165
    $region22: #{graph_autoencoder_forward.14} parent=5 // pred_check_branch
      %168 = sbr.rel (%p166) target = $region24
    $region23: #{graph_autoencoder_forward.14} parent=5 // pred_region
      // Predicated region
      $region25: #{graph_autoencoder_forward.14} parent=23 // pred_check
        %p169 = pneg %p44
      $region26: #{graph_autoencoder_forward.14} parent=23 // pred_check_branch
        %171 = sbr.rel (%p169) target = $region28
      $region27: #{graph_autoencoder_forward.14} parent=23 // pred_region
        %p172 = scmp.lt.s32.totalorder %s17, 1
        %s173 = scalar_select %p172, %s17, 1
        %p174 = scmp.lt.s32.totalorder %s18, 0
        %s175 = scalar_select %p174, %s18, 0
        %s176 = sadd.s32 %s175, %s173
        %s177 = smul.addr %s176, 4
        %s178 = scalar_lea.vmem %s0, %s177
      $region28: #{graph_autoencoder_forward.14} parent=23 // pred_fallthru
        _
      // Predicated region
      $region29: #{graph_autoencoder_forward.14} parent=23 // pred_check
        %p179 = pneg %p91
      $region30: #{graph_autoencoder_forward.14} parent=23 // pred_check_branch
        %181 = sbr.rel (%p179) target = $region32
      $region31: #{graph_autoencoder_forward.14} parent=23 // pred_region
        %p182 = scmp.lt.s32.totalorder %s17, 1
        %s183 = scalar_select %p182, %s17, 1
        %s184 = smul.addr %s183, 8
        %s185 = scalar_lea.vmem %s2, %s184
      $region32: #{graph_autoencoder_forward.14} parent=23 // pred_fallthru
        _
    $region24: #{graph_autoencoder_forward.14} parent=5 // pred_fallthru
      _
    %p186 = scmp.le.s32.totalorder 1, %s10
    %p187 = scmp.lt.s32.totalorder %s10, 3
    %p188 = pnand %p186, %p187
    %p189 = pneg %p188
    // Predicated region
    $region33: #{graph_autoencoder_forward.14} parent=5 // pred_check
      _
    $region34: #{graph_autoencoder_forward.14} parent=5 // pred_check_branch
      %191 = sbr.rel (%p188) target = $region36
    $region35: #{graph_autoencoder_forward.14} parent=5 // pred_region
      %s192 = ssub.s32 %s10, 1
      %p193 = scmp.lt.s32.totalorder %s19, 1
      %s194 = scalar_select %p193, %s19, 1
      %p195 = scmp.lt.s32.totalorder %s20, 0
      %s196 = scalar_select %p195, %s20, 0
      %s197 = sadd.s32 %s196, %s194
      %s198 = smul.addr %s197, 4
      %s199 = scalar_lea.vmem %s0, %s198
      %p200 = pneg %p50
      %p201 = pneg %p47
      %p202 = pneg %p71
      %p203 = pneg %p68
      %p204 = scmp.lt.s32.totalorder %s19, 1
      %s205 = scalar_select %p204, %s19, 1
      %s206 = smul.addr %s205, 8
      %s207 = scalar_lea.vmem %s2, %s206
      %p208 = pneg %p97
      %p209 = pneg %p94
      %p210 = pneg %p118
      %p211 = pneg %p115
      %p212 = pneg %p144
      %p213 = pneg %p141
      %p214 = scmp.lt.s32.totalorder %s19, 1
      %s215 = scalar_select %p214, %s19, 1
      %s216 = smul.addr %s215, 2
      %s217 = smul.addr %s216, 4
      %s218 = scalar_lea.vmem %s4, %s217
      %p219 = scmp.lt.s32.totalorder %s19, 1
      %s220 = scalar_select %p219, %s19, 1
      %p221 = scmp.lt.s32.totalorder %s20, 0
      %s222 = scalar_select %p221, %s20, 0
      %s223 = sadd.s32 %s222, %s220
      %s224 = smul.addr %s223, 4
      %s225 = scalar_lea.vmem %s0, %s224
      %p226 = scmp.lt.s32.totalorder %s19, 1
      %s227 = scalar_select %p226, %s19, 1
      %s228 = smul.addr %s227, 8
      %s229 = scalar_lea.vmem %s2, %s228
      %p230 = scmp.lt.s32.totalorder %s19, 1
      %s231 = scalar_select %p230, %s19, 1
      %s232 = smul.addr %s231, 2
      %s233 = smul.addr %s232, 4
      %s234 = scalar_lea.vmem %s4, %s233
      %p236 = scmp.eq.s32.totalorder %s20, 0
      // Predicated region
      $region37: #{graph_autoencoder_forward.14} parent=35 // pred_check
        %p237 = pneg %p236
      $region38: #{graph_autoencoder_forward.14} parent=35 // pred_check_branch
        %239 = sbr.rel (%p237) target = $region40
      $region39: #{graph_autoencoder_forward.14} parent=35 // pred_region
        %240 = vst [vmem:[#allocation2] sm:$0xff] 0.0
        %241 = vst [vmem:[#allocation2 + $0x8] sm:$0xff] 0.0
      $region40: #{graph_autoencoder_forward.14} parent=35 // pred_fallthru
        _
      %s242 = smul.u32 %s20, 16
      %s243 = sshra.s32 %s242, 3
      %s244 = sand.u32 %s242, 7
      %s245 = smul.u32 %s243, 2
      %s246 = smul.addr %s245, 4
      %s247 = scalar_lea.vmem %s1, %s246
      %v248 = vld [vmem:[%s247] sm:$0xff]
      %v249 = vld [vmem:[%s247 + $0x8] sm:$0xff]
      %v250 = vld [vmem:[#allocation2] sm:$0xff]
      %v251 = vld [vmem:[#allocation2 + $0x8] sm:$0xff]
      %v252 = vld [vmem:[%s225] sm:$0xf]
      %v255 = vunpack.c.l.b16 %v248
      %v256 = vunpack.c.h.b16 %v248
      %v257 = vunpack.c.l.b16 %v249
      %v258 = vunpack.c.h.b16 %v249
      %v259 = vpack.c.b16 %v257, %v255
      %v260 = vpack.c.b16 %v258, %v256
      %vm263 = vcmask 130048
      %v265 = vsel %vm263, %v252, 0
      %267 = vmatprep.subr.bf16.mxu0 %v260
      %268 = vmatpush1.bf16.msra.mxu0 %v259
      %269 = vmatprep.subr.bf16.mxu0 0
      %270 = vmatpush1.bf16.msra.mxu0 0
      %271 = vmatprep.subr.bf16.mxu0 0
      %272 = vmatpush1.bf16.msra.mxu0 0
      %273 = vmatprep.subr.bf16.mxu0 0
      %274 = vmatpush1.bf16.msra.mxu0 0
      %275 = vmatprep.subr.bf16.mxu0 0
      %276 = vmatpush1.bf16.msra.mxu0 0
      %277 = vmatprep.subr.bf16.mxu0 0
      %278 = vmatpush1.bf16.msra.mxu0 0
      %279 = vmatprep.subr.bf16.mxu0 0
      %280 = vmatpush1.bf16.msra.mxu0 0
      %281 = vmatprep.subr.bf16.mxu0 0
      %282 = vmatpush1.bf16.msra.mxu0 0
      %283 = vmatprep.subr.bf16.mxu0 0
      %284 = vmatpush1.bf16.msra.mxu0 0
      %285 = vmatprep.subr.bf16.mxu0 0
      %286 = vmatpush1.bf16.msra.mxu0 0
      %287 = vmatprep.subr.bf16.mxu0 0
      %288 = vmatpush1.bf16.msra.mxu0 0
      %289 = vmatprep.subr.bf16.mxu0 0
      %290 = vmatpush1.bf16.msra.mxu0 0
      %291 = vmatprep.subr.bf16.mxu0 0
      %292 = vmatpush1.bf16.msra.mxu0 0
      %293 = vmatprep.subr.bf16.mxu0 0
      %294 = vmatpush1.bf16.msra.mxu0 0
      %295 = vmatprep.subr.bf16.mxu0 0
      %296 = vmatpush1.bf16.msra.mxu0 0
      %297 = vmatprep.subr.bf16.mxu0 0
      %298 = vmatpush1.bf16.msra.mxu0 0
      %299 = vmatprep.mubr.bf16.mxu0 0
      %300 = vmatmul.mubr.bf16.gmra.mrb[0].mxu0 %v265
      %v301 = vpop.f32.mrb[0].mxu0
      %v302 = vadd.f32 0.0, %v301
      %v303 = vpop.f32.mrb[0].mxu0
      %v304 = vadd.f32 0.0, %v303
      %v305 = vpop.f32.mrb[0].mxu0
      %v306 = vpop.f32.mrb[0].mxu0
      %307 = vdwg.mxu0
      %v308 = vadd.f32 %v250, %v302
      %v309 = vadd.f32 %v251, %v304
      %310 = vst [vmem:[#allocation2] sm:$0xff] %v308
      %311 = vst [vmem:[#allocation2 + $0x8] sm:$0xff] %v309
      // Predicated region
      $region41: #{graph_autoencoder_forward.14} parent=35 // pred_check
        %p312 = pneg %p236
      $region42: #{graph_autoencoder_forward.14} parent=35 // pred_check_branch
        %314 = sbr.rel (%p312) target = $region44
      $region43: #{graph_autoencoder_forward.14} parent=35 // pred_region
        %v315 = vld [vmem:[%s229] sm:$0xff]
        %v316 = vld [vmem:[#allocation2] sm:$0xff]
        %v317 = vld [vmem:[#allocation2 + $0x8] sm:$0xff]
        %319 = vset.pattern.permute.xlu0 0
        %320 = vperm.xlu0 %319, %v315
        %v321 = vpop.permute.xlu0 %320
        %v323 = vmul.f32 %v321, %v316
        %v324 = vmul.f32 %v321, %v317
        %v325 = vld [vmem:[%s3] sm:$0x3]
        %v327 = vlaneseq
        %v328 = vshrl.u32 %v327, 7
        %v329 = vsub.s32 0, %v328
        %v330 = vrot.slane %v325, %v329
        %v331 = vlaneseq
        %v332 = vshrl.u32 %v331, 7
        %v333 = vsub.s32 1, %v332
        %v334 = vrot.slane %v325, %v333
        %v337 = vadd.f32 %v323, %v330
        %v338 = vadd.f32 %v324, %v334
        %v339 = vmax.f32 %v337, 0.0
        %v340 = vmax.f32 %v338, 0.0
        %v341 = vpack.c.bf16 %v339, %v339
        %v342 = vpack.c.bf16 %v340, %v340
        %v345 = vunpack.c.l.b16 %v341
        %v346 = vunpack.c.l.b16 %v342
        %v347 = vpack.c.b16 %v346, %v345
        %349 = vst [vmem:[%s234] sm:$0xff] %v347
      $region44: #{graph_autoencoder_forward.14} parent=35 // pred_fallthru
        _
      %p350 = scmp.lt.s32.totalorder %s19, 1
      %s351 = scalar_select %p350, %s19, 1
      %s352 = smul.addr %s351, 2
      %s353 = smul.addr %s352, 4
      %s354 = scalar_lea.vmem %s4, %s353
      // Predicated region
      $region45: #{graph_autoencoder_forward.14} parent=35 // pred_check
        %p355 = pneg %p141
      $region46: #{graph_autoencoder_forward.14} parent=35 // pred_check_branch
        %357 = sbr.rel (%p355) target = $region48
      $region47: #{graph_autoencoder_forward.14} parent=35 // pred_region
        _
      $region48: #{graph_autoencoder_forward.14} parent=35 // pred_fallthru
        _
    $region36: #{graph_autoencoder_forward.14} parent=5 // pred_fallthru
      _
    %p358 = scmp.le.s32.totalorder 2, %s10
    // Predicated region
    $region49: #{graph_autoencoder_forward.14} parent=5 // pred_check
      %p359 = pneg %p358
    $region50: #{graph_autoencoder_forward.14} parent=5 // pred_check_branch
      %361 = sbr.rel (%p359) target = $region52
    $region51: #{graph_autoencoder_forward.14} parent=5 // pred_region
      %s362 = ssub.s32 %s10, 2
      // Predicated region
      $region53: #{graph_autoencoder_forward.14} parent=51 // pred_check
        %p363 = pneg %p147
      $region54: #{graph_autoencoder_forward.14} parent=51 // pred_check_branch
        %365 = sbr.rel (%p363) target = $region56
      $region55: #{graph_autoencoder_forward.14} parent=51 // pred_region
        %p366 = scmp.lt.s32.totalorder %s21, 1
        %s367 = scalar_select %p366, %s21, 1
        %s368 = smul.addr %s367, 2
        %s369 = smul.addr %s368, 4
        %s370 = scalar_lea.vmem %s4, %s369
      $region56: #{graph_autoencoder_forward.14} parent=51 // pred_fallthru
        _
    $region52: #{graph_autoencoder_forward.14} parent=5 // pred_fallthru
      _
  $region6: #{graph_autoencoder_forward.14} parent=0 // loop_footer
    %s14 = sadd.s32 1, %s10
  $region7: #{graph_autoencoder_forward.14} parent=0 // loop_footer_branch
    %9 = sbr.rel target = $region3
  $region8: #{graph_autoencoder_forward.14} parent=0 // loop_exit
    _

// kernel: graph_autoencoder_forward.17
$region0: #{graph_autoencoder_forward.17}
  #allocation0 [shape = 'u32[]', space=smem, size = 0x4, offset = 0x4, fixed_abs, tag = 'smem constant byte address 0x4 - core index']
  #allocation1 [shape = 'u32[144,128]{1,0:T(1,128)}', space=vmem, size = 0x12000, scoped, tag = 'internal scratch']
  %s0 = inlined_call_operand.vmem [shape: bf16[16,256], index: 0, kind: input, shape index: {}, may-alias: {0,1}]
  %s1 = inlined_call_operand.vmem [shape: bf16[16,256], index: 1, kind: input, shape index: {}, may-alias: {0,1}]
  %s2 = inlined_call_operand.vmem [shape: f32[16,16], index: 2, kind: output, shape index: {}]
  %s3 = sld [smem:[#allocation0]]
  $region82: #{graph_autoencoder_forward.17} parent=0
    _
  %s5 = ssub.s32 1, %s3
  %s6 = scalar_select 0, %s5, %s3
  $region1: #{graph_autoencoder_forward.17} parent=0
    #allocation2 [shape = 'u8[4096]{0}', space=vmem, size = 0x1000, scoped, tag = 'input window, operand 1, single buffered']
    loop: start=0, step=1, limit=4
    $region2: #{graph_autoencoder_forward.17} parent=1 // loop_pre_header
      _
    $region3: #{graph_autoencoder_forward.17} parent=1 // loop_header
      %s8 = sphi 0, %s12
      %p9 = scmp.ge.s32.totalorder %s8, 4
      %s15 = sphi 0, %s27
      %s16 = sphi 0, %s23
      %s17 = sphi 0, %s15
      %s18 = sphi 0, %s16
      %s19 = sphi 0, %s17
      %s20 = sphi 0, %s18
      %s30 = sphi 0, %s32
      %s33 = sphi 0, %s30
      %s34 = sphi 0, %s33
      %s50 = sphi 0, %s34
      %s56 = sphi 0, %s58
      %s59 = sphi 0, %s56
      %s60 = sphi 0, %s59
      %s76 = sphi 0, %s60
      %s84 = sphi 0, %s86
      %s87 = sphi 0, %s84
      %s88 = sphi 0, %s87
      %s104 = sphi 0, %s88
    $region4: #{graph_autoencoder_forward.17} parent=1 // loop_header_branch
      %11 = sbr.rel (%p9) target = $region8
    $region5: #{graph_autoencoder_forward.17} parent=1 // loop_body
      %s13 = ssub.s32 %s8, 1
      %s14 = ssub.s32 %s8, 2
      %s21 = sadd.s32 1, %s16
      %p22 = scmp.ge.s32.totalorder %s21, 1
      %s23 = scalar_select %p22, 0, %s21
      %s24 = sadd.s32 1, %s15
      %s25 = scalar_select %p22, %s24, %s15
      %p26 = scmp.ge.s32.totalorder %s25, 2
      %s27 = scalar_select %p26, 0, %s25
      %s28 = ssub.s32 %s15, %s27
      %p29 = scmp.eq.s32.totalorder %s28, 0
      %s31 = sadd.s32 %s30, 1
      %s32 = scalar_select %p29, %s30, %s31
      %p35 = pneg %p29
      %p36 = scmp.eq.s32.totalorder %s8, 1
      %p37 = por %p35, %p36
      %p38 = scmp.ne.s32.totalorder %s30, %s33
      %p39 = scmp.eq.s32.totalorder %s8, 0
      %p40 = por %p38, %p39
      %p41 = scmp.ne.s32.totalorder %s30, %s33
      %p42 = scmp.eq.s32.totalorder %s13, 1
      %p43 = por %p41, %p42
      %p44 = scmp.ne.s32.totalorder %s33, %s34
      %p45 = scmp.eq.s32.totalorder %s13, 0
      %p46 = por %p44, %p45
      %p47 = scmp.ne.s32.totalorder %s33, %s34
      %p48 = scmp.eq.s32.totalorder %s14, 1
      %p49 = por %p47, %p48
      %p51 = scmp.ne.s32.totalorder %s34, %s50
      %p52 = scmp.eq.s32.totalorder %s14, 0
      %p53 = por %p51, %p52
      %s54 = ssub.s32 %s16, %s23
      %p55 = scmp.eq.s32.totalorder %s54, 0
      %s57 = sadd.s32 %s56, 1
      %s58 = scalar_select %p55, %s56, %s57
      %p61 = pneg %p55
      %p62 = scmp.eq.s32.totalorder %s8, 1
      %p63 = por %p61, %p62
      %p64 = scmp.ne.s32.totalorder %s56, %s59
      %p65 = scmp.eq.s32.totalorder %s8, 0
      %p66 = por %p64, %p65
      %p67 = scmp.ne.s32.totalorder %s56, %s59
      %p68 = scmp.eq.s32.totalorder %s13, 1
      %p69 = por %p67, %p68
      %p70 = scmp.ne.s32.totalorder %s59, %s60
      %p71 = scmp.eq.s32.totalorder %s13, 0
      %p72 = por %p70, %p71
      %p73 = scmp.ne.s32.totalorder %s59, %s60
      %p74 = scmp.eq.s32.totalorder %s14, 1
      %p75 = por %p73, %p74
      %p77 = scmp.ne.s32.totalorder %s60, %s76
      %p78 = scmp.eq.s32.totalorder %s14, 0
      %p79 = por %p77, %p78
      %s80 = ssub.s32 %s15, %s27
      %s81 = ssub.s32 %s16, %s23
      %s82 = sor.u32 %s80, %s81
      %p83 = scmp.eq.s32.totalorder %s82, 0
      %s85 = sadd.s32 %s84, 1
      %s86 = scalar_select %p83, %s84, %s85
      %p89 = pneg %p83
      %p90 = scmp.eq.s32.totalorder %s8, 1
      %p91 = por %p89, %p90
      %p92 = scmp.ne.s32.totalorder %s84, %s87
      %p93 = scmp.eq.s32.totalorder %s8, 0
      %p94 = por %p92, %p93
      %p95 = scmp.ne.s32.totalorder %s84, %s87
      %p96 = scmp.eq.s32.totalorder %s13, 1
      %p97 = por %p95, %p96
      %p98 = scmp.ne.s32.totalorder %s87, %s88
      %p99 = scmp.eq.s32.totalorder %s13, 0
      %p100 = por %p98, %p99
      %p101 = scmp.ne.s32.totalorder %s87, %s88
      %p102 = scmp.eq.s32.totalorder %s14, 1
      %p103 = por %p101, %p102
      %p105 = scmp.ne.s32.totalorder %s88, %s104
      %p106 = scmp.eq.s32.totalorder %s14, 0
      %p107 = por %p105, %p106
      %p108 = scmp.le.s32.totalorder 1, %s8
      %p109 = scmp.lt.s32.totalorder %s8, 3
      %p110 = pnand %p108, %p109
      %p111 = pneg %p110
      // Predicated region
      $region9: #{graph_autoencoder_forward.17} parent=5 // pred_check
        _
      $region10: #{graph_autoencoder_forward.17} parent=5 // pred_check_branch
        %113 = sbr.rel (%p110) target = $region12
      $region11: #{graph_autoencoder_forward.17} parent=5 // pred_region
        %s114 = ssub.s32 %s8, 1
        // Predicated region
        $region13: #{graph_autoencoder_forward.17} parent=11 // pred_check
          %p115 = pneg %p72
        $region14: #{graph_autoencoder_forward.17} parent=11 // pred_check_branch
          %117 = sbr.rel (%p115) target = $region16
        $region15: #{graph_autoencoder_forward.17} parent=11 // pred_region
          %s118 = smul.u32 2, %s18
          %s119 = smul.addr %s118, 2
          %s120 = sadd.s32 1, %s119
          %s121 = smul.addr %s120, 4
          %s122 = scalar_lea.vmem %s1, %s121
          // Predicated region
          $region17: #{graph_autoencoder_forward.17} parent=15 // pred_check
            _
          $region18: #{graph_autoencoder_forward.17} parent=15 // pred_check_branch
            %124 = sbr.rel (0) target = $region20
          $region19: #{graph_autoencoder_forward.17} parent=15 // pred_region
            // Predicated region
            $region21: #{graph_autoencoder_forward.17} parent=19 // pred_check
              _
            $region22: #{graph_autoencoder_forward.17} parent=19 // pred_check_branch
              %126 = sbr.rel target = $region24
            $region23: #{graph_autoencoder_forward.17} parent=19 // pred_region
              // Predicated region
              $region36: #{graph_autoencoder_forward.17} parent=23 // pred_check
                _
              $region37: #{graph_autoencoder_forward.17} parent=23 // pred_check_branch
                %143 = sbr.rel (0) target = $region39
              $region38: #{graph_autoencoder_forward.17} parent=23 // pred_region
                loop: start=0, step=1, limit=1
                $region40: #{graph_autoencoder_forward.17} parent=38 // loop_pre_header
                  _
                $region41: #{graph_autoencoder_forward.17} parent=38 // loop_header
                  %s145 = sphi 0, %s149
                  %p146 = scmp.ge.s32.totalorder %s145, 1
                  %s150 = sphi %s122, %s122
                  %s151 = sphi [#allocation2], [#allocation2]
                $region42: #{graph_autoencoder_forward.17} parent=38 // loop_header_branch
                  %148 = sbr.rel (%p146) target = $region46
                $region43: #{graph_autoencoder_forward.17} parent=38 // loop_body
                  _
                $region44: #{graph_autoencoder_forward.17} parent=38 // loop_footer
                  %s149 = sadd.s32 1, %s145
                $region45: #{graph_autoencoder_forward.17} parent=38 // loop_footer_branch
                  %144 = sbr.rel target = $region41
                $region46: #{graph_autoencoder_forward.17} parent=38 // loop_exit
                  _
                loop: start=0, step=1, limit=1
                $region47: #{graph_autoencoder_forward.17} parent=38 // loop_pre_header
                  _
                $region48: #{graph_autoencoder_forward.17} parent=38 // loop_header
                  %s154 = sphi 0, %s158
                  %p155 = scmp.ge.s32.totalorder %s154, 1
                  %s159 = sphi %s122, %s122
                  %s160 = sphi [#allocation2], [#allocation2]
                $region49: #{graph_autoencoder_forward.17} parent=38 // loop_header_branch
                  %157 = sbr.rel (%p155) target = $region53
                $region50: #{graph_autoencoder_forward.17} parent=38 // loop_body
                  %v161 = vld [vmem:[%s159] sm:$0xf]
                  %162 = vst [vmem:[%s160] sm:$0xf] %v161
                  %v163 = vld [vmem:[%s159 + $0x8] sm:$0xf]
                  %164 = vst [vmem:[%s160 + $0x4] sm:$0xf] %v163
                $region51: #{graph_autoencoder_forward.17} parent=38 // loop_footer
                  %s158 = sadd.s32 1, %s154
                $region52: #{graph_autoencoder_forward.17} parent=38 // loop_footer_branch
                  %153 = sbr.rel target = $region48
                $region53: #{graph_autoencoder_forward.17} parent=38 // loop_exit
                  _
              $region39: #{graph_autoencoder_forward.17} parent=23 // pred_fallthru
                _
            $region24: #{graph_autoencoder_forward.17} parent=19 // pred_fallthru
              _
            // Predicated region
            $region25: #{graph_autoencoder_forward.17} parent=19 // pred_check
              _
            $region26: #{graph_autoencoder_forward.17} parent=19 // pred_check_branch
              %128 = sbr.rel (0) target = $region28
            $region27: #{graph_autoencoder_forward.17} parent=19 // pred_region
              loop: start=0, step=1, limit=1
              $region29: #{graph_autoencoder_forward.17} parent=27 // loop_pre_header
                _
              $region30: #{graph_autoencoder_forward.17} parent=27 // loop_header
                %s131 = sphi 0, %s135
                %p132 = scmp.ge.s32.totalorder %s131, 1
                %s136 = sphi %s122, %s122
                %s137 = sphi [#allocation2], [#allocation2]
              $region31: #{graph_autoencoder_forward.17} parent=27 // loop_header_branch
                %134 = sbr.rel (%p132) target = $region35
              $region32: #{graph_autoencoder_forward.17} parent=27 // loop_body
                %v138 = vld [vmem:[%s136] sm:$0xf]
                %139 = vst [vmem:[%s137] sm:$0xf] %v138
                %v140 = vld [vmem:[%s136 + $0x8] sm:$0xf]
                %141 = vst [vmem:[%s137 + $0x4] sm:$0xf] %v140
              $region33: #{graph_autoencoder_forward.17} parent=27 // loop_footer
                %s135 = sadd.s32 1, %s131
              $region34: #{graph_autoencoder_forward.17} parent=27 // loop_footer_branch
                %130 = sbr.rel target = $region30
              $region35: #{graph_autoencoder_forward.17} parent=27 // loop_exit
                _
            $region28: #{graph_autoencoder_forward.17} parent=19 // pred_fallthru
              _
          $region20: #{graph_autoencoder_forward.17} parent=15 // pred_fallthru
            _
          %165 = vnop
        $region16: #{graph_autoencoder_forward.17} parent=11 // pred_fallthru
          _
      $region12: #{graph_autoencoder_forward.17} parent=5 // pred_fallthru
        _
      %p166 = scmp.lt.s32.totalorder %s8, 2
      // Predicated region
      $region54: #{graph_autoencoder_forward.17} parent=5 // pred_check
        %p167 = pneg %p166
      $region55: #{graph_autoencoder_forward.17} parent=5 // pred_check_branch
        %169 = sbr.rel (%p167) target = $region57
      $region56: #{graph_autoencoder_forward.17} parent=5 // pred_region
        // Predicated region
        $region58: #{graph_autoencoder_forward.17} parent=56 // pred_check
          %p170 = pneg %p40
        $region59: #{graph_autoencoder_forward.17} parent=56 // pred_check_branch
          %172 = sbr.rel (%p170) target = $region61
        $region60: #{graph_autoencoder_forward.17} parent=56 // pred_region
          %p173 = scmp.lt.s32.totalorder %s15, 1
          %s174 = scalar_select %p173, %s15, 1
          %s175 = smul.addr %s174, 2
          %s176 = sadd.s32 1, %s175
          %s177 = smul.addr %s176, 4
          %s178 = scalar_lea.vmem %s0, %s177
        $region61: #{graph_autoencoder_forward.17} parent=56 // pred_fallthru
          _
      $region57: #{graph_autoencoder_forward.17} parent=5 // pred_fallthru
        _
      %p179 = scmp.le.s32.totalorder 1, %s8
      %p180 = scmp.lt.s32.totalorder %s8, 3
      %p181 = pnand %p179, %p180
      %p182 = pneg %p181
      // Predicated region
      $region62: #{graph_autoencoder_forward.17} parent=5 // pred_check
        _
      $region63: #{graph_autoencoder_forward.17} parent=5 // pred_check_branch
        %184 = sbr.rel (%p181) target = $region65
      $region64: #{graph_autoencoder_forward.17} parent=5 // pred_region
        %s185 = ssub.s32 %s8, 1
        // Predicated region
        $region66: #{graph_autoencoder_forward.17} parent=64 // pred_check
          %p186 = pneg %p72
        $region67: #{graph_autoencoder_forward.17} parent=64 // pred_check_branch
          %188 = sbr.rel (%p186) target = $region69
        $region68: #{graph_autoencoder_forward.17} parent=64 // pred_region
          _
        $region69: #{graph_autoencoder_forward.17} parent=64 // pred_fallthru
          _
        %p189 = scmp.lt.s32.totalorder %s17, 1
        %s190 = scalar_select %p189, %s17, 1
        %s191 = smul.addr %s190, 2
        %s192 = sadd.s32 1, %s191
        %s193 = smul.addr %s192, 4
        %s194 = scalar_lea.vmem %s0, %s193
        %p195 = pneg %p46
        %p196 = pneg %p43
        %p197 = pneg %p72
        %p198 = pneg %p69
        %p199 = pneg %p100
        %p200 = pneg %p97
        %p201 = scmp.lt.s32.totalorder %s17, 1
        %s202 = scalar_select %p201, %s17, 1
        %p203 = scmp.lt.s32.totalorder %s18, 0
        %s204 = scalar_select %p203, %s18, 0
        %s205 = sadd.s32 %s204, %s202
        %s206 = smul.addr %s205, 8
        %s207 = scalar_lea.vmem %s2, %s206
        %p208 = scmp.lt.s32.totalorder %s17, 1
        %s209 = scalar_select %p208, %s17, 1
        %s210 = smul.addr %s209, 2
        %s211 = sadd.s32 1, %s210
        %s212 = smul.addr %s211, 4
        %s213 = scalar_lea.vmem %s0, %s212
        %s214 = smul.u32 2, %s18
        %p215 = scmp.lt.s32.totalorder %s17, 1
        %s216 = scalar_select %p215, %s17, 1
        %p217 = scmp.lt.s32.totalorder %s18, 0
        %s218 = scalar_select %p217, %s18, 0
        %s219 = sadd.s32 %s218, %s216
        %s220 = smul.addr %s219, 8
        %s221 = scalar_lea.vmem %s2, %s220
        %v223 = vld [vmem:[%s213] sm:$0xf]
        %v224 = vld [vmem:[#allocation2] sm:$0xf]
        %v225 = vld [vmem:[#allocation2 + $0x4] sm:$0xf]
        %v228 = vunpack.c.l.b16 %v224
        %v229 = vunpack.c.l.b16 %v225
        %v230 = vpack.c.b16 %v229, %v228
        %232 = vmatprep.subr.bf16.mxu0 0
        %233 = vmatpush1.bf16.xpose.msra.mxu0 %v230
        %234 = vmatprep.subr.bf16.mxu0 0
        %235 = vmatpush1.bf16.xpose.msra.mxu0 0
        %236 = vmatprep.subr.bf16.mxu0 0
        %237 = vmatpush1.bf16.xpose.msra.mxu0 0
        %238 = vmatprep.subr.bf16.mxu0 0
        %239 = vmatpush1.bf16.xpose.msra.mxu0 0
        %240 = vmatprep.subr.bf16.mxu0 0
        %241 = vmatpush1.bf16.xpose.msra.mxu0 0
        %242 = vmatprep.subr.bf16.mxu0 0
        %243 = vmatpush1.bf16.xpose.msra.mxu0 0
        %244 = vmatprep.subr.bf16.mxu0 0
        %245 = vmatpush1.bf16.xpose.msra.mxu0 0
        %246 = vmatprep.subr.bf16.mxu0 0
        %247 = vmatpush1.bf16.xpose.msra.mxu0 0
        %248 = vmatprep.subr.bf16.mxu0 0
        %249 = vmatpush1.bf16.xpose.msra.mxu0 0
        %250 = vmatprep.subr.bf16.mxu0 0
        %251 = vmatpush1.bf16.xpose.msra.mxu0 0
        %252 = vmatprep.subr.bf16.mxu0 0
        %253 = vmatpush1.bf16.xpose.msra.mxu0 0
        %254 = vmatprep.subr.bf16.mxu0 0
        %255 = vmatpush1.bf16.xpose.msra.mxu0 0
        %256 = vmatprep.subr.bf16.mxu0 0
        %257 = vmatpush1.bf16.xpose.msra.mxu0 0
        %258 = vmatprep.subr.bf16.mxu0 0
        %259 = vmatpush1.bf16.xpose.msra.mxu0 0
        %260 = vmatprep.subr.bf16.mxu0 0
        %261 = vmatpush1.bf16.xpose.msra.mxu0 0
        %262 = vmatprep.subr.bf16.mxu0 0
        %263 = vmatpush1.bf16.xpose.msra.mxu0 0
        %264 = vmatprep.mubr.bf16.mxu0 0
        %265 = vmatmul.mubr.bf16.gmra.mrb[0].mxu0 %v223
        %v266 = vpop.f32.mrb[0].mxu0
        %v267 = vadd.f32 0.0, %v266
        %v268 = vpop.f32.mrb[0].mxu0
        %v269 = vpop.f32.mrb[0].mxu0
        %v270 = vpop.f32.mrb[0].mxu0
        %271 = vdwg.mxu0
        %vm272 = vcmask 130048
        %273 = vst.msk [vmem:[%s221] sm:$0xff] %vm272, %v267
        %p274 = scmp.lt.s32.totalorder %s17, 1
        %s275 = scalar_select %p274, %s17, 1
        %p276 = scmp.lt.s32.totalorder %s18, 0
        %s277 = scalar_select %p276, %s18, 0
        %s278 = sadd.s32 %s277, %s275
        %s279 = smul.addr %s278, 8
        %s280 = scalar_lea.vmem %s2, %s279
        // Predicated region
        $region70: #{graph_autoencoder_forward.17} parent=64 // pred_check
          %p281 = pneg %p97
        $region71: #{graph_autoencoder_forward.17} parent=64 // pred_check_branch
          %283 = sbr.rel (%p281) target = $region73
        $region72: #{graph_autoencoder_forward.17} parent=64 // pred_region
          _
        $region73: #{graph_autoencoder_forward.17} parent=64 // pred_fallthru
          _
      $region65: #{graph_autoencoder_forward.17} parent=5 // pred_fallthru
        _
      %p284 = scmp.le.s32.totalorder 2, %s8
      // Predicated region
      $region74: #{graph_autoencoder_forward.17} parent=5 // pred_check
        %p285 = pneg %p284
      $region75: #{graph_autoencoder_forward.17} parent=5 // pred_check_branch
        %287 = sbr.rel (%p285) target = $region77
      $region76: #{graph_autoencoder_forward.17} parent=5 // pred_region
        %s288 = ssub.s32 %s8, 2
        // Predicated region
        $region78: #{graph_autoencoder_forward.17} parent=76 // pred_check
          %p289 = pneg %p103
        $region79: #{graph_autoencoder_forward.17} parent=76 // pred_check_branch
          %291 = sbr.rel (%p289) target = $region81
        $region80: #{graph_autoencoder_forward.17} parent=76 // pred_region
          %p292 = scmp.lt.s32.totalorder %s19, 1
          %s293 = scalar_select %p292, %s19, 1
          %p294 = scmp.lt.s32.totalorder %s20, 0
          %s295 = scalar_select %p294, %s20, 0
          %s296 = sadd.s32 %s295, %s293
          %s297 = smul.addr %s296, 8
          %s298 = scalar_lea.vmem %s2, %s297
        $region81: #{graph_autoencoder_forward.17} parent=76 // pred_fallthru
          _
      $region77: #{graph_autoencoder_forward.17} parent=5 // pred_fallthru
        _
    $region6: #{graph_autoencoder_forward.17} parent=1 // loop_footer
      %s12 = sadd.s32 1, %s8
    $region7: #{graph_autoencoder_forward.17} parent=1 // loop_footer_branch
      %7 = sbr.rel target = $region3
    $region8: #{graph_autoencoder_forward.17} parent=1 // loop_exit
      _

// kernel: graph_autoencoder_forward.16
$region0: #{graph_autoencoder_forward.16}
  #allocation0 [shape = 'u32[]', space=smem, size = 0x4, offset = 0x4, fixed_abs, tag = 'smem constant byte address 0x4 - core index']
  #allocation1 [shape = 'u32[144,128]{1,0:T(1,128)}', space=vmem, size = 0x12000, scoped, tag = 'internal scratch']
  #allocation2 [shape = 'f32[8,128]{1,0:T(8,128)}', space=vmem, size = 0x1000, scoped, tag = 'scratch operand']
  %s0 = inlined_call_operand.vmem [shape: bf16[16,16], index: 0, kind: input, shape index: {}]
  %s1 = inlined_call_operand.vmem [shape: bf16[16,128], index: 1, kind: input, shape index: {}]
  %s2 = inlined_call_operand.vmem [shape: f32[16,1], index: 2, kind: input, shape index: {}]
  %s3 = inlined_call_operand.vmem [shape: f32[1,128], index: 3, kind: input, shape index: {}]
  %s4 = inlined_call_operand.vmem [shape: f32[16,128], index: 4, kind: output, shape index: {}]
  %s5 = sld [smem:[#allocation0]]
  $region57: #{graph_autoencoder_forward.16} parent=0
    _
  %s7 = ssub.s32 1, %s5
  %s8 = scalar_select 0, %s7, %s5
  loop: start=0, step=1, limit=4
  $region2: #{graph_autoencoder_forward.16} parent=0 // loop_pre_header
    _
  $region3: #{graph_autoencoder_forward.16} parent=0 // loop_header
    %s10 = sphi 0, %s14
    %p11 = scmp.ge.s32.totalorder %s10, 4
    %s17 = sphi 0, %s29
    %s18 = sphi 0, %s25
    %s19 = sphi 0, %s17
    %s20 = sphi 0, %s18
    %s21 = sphi 0, %s19
    %s22 = sphi 0, %s20
    %s34 = sphi 0, %s36
    %s37 = sphi 0, %s34
    %s38 = sphi 0, %s37
    %s54 = sphi 0, %s38
    %s58 = sphi 0, %s58
    %s60 = sphi 0, %s58
    %s61 = sphi 0, %s60
    %s75 = sphi 0, %s61
    %s81 = sphi 0, %s83
    %s84 = sphi 0, %s81
    %s85 = sphi 0, %s84
    %s101 = sphi 0, %s85
    %s105 = sphi 0, %s105
    %s107 = sphi 0, %s105
    %s108 = sphi 0, %s107
    %s122 = sphi 0, %s108
    %s128 = sphi 0, %s130
    %s131 = sphi 0, %s128
    %s132 = sphi 0, %s131
    %s148 = sphi 0, %s132
  $region4: #{graph_autoencoder_forward.16} parent=0 // loop_header_branch
    %13 = sbr.rel (%p11) target = $region8
  $region5: #{graph_autoencoder_forward.16} parent=0 // loop_body
    %s15 = ssub.s32 %s10, 1
    %s16 = ssub.s32 %s10, 2
    %s23 = sadd.s32 1, %s18
    %p24 = scmp.ge.s32.totalorder %s23, 1
    %s25 = scalar_select %p24, 0, %s23
    %s26 = sadd.s32 1, %s17
    %s27 = scalar_select %p24, %s26, %s17
    %p28 = scmp.ge.s32.totalorder %s27, 2
    %s29 = scalar_select %p28, 0, %s27
    %s30 = ssub.s32 %s17, %s29
    %s31 = ssub.s32 %s18, %s25
    %s32 = sor.u32 %s30, %s31
    %p33 = scmp.eq.s32.totalorder %s32, 0
    %s35 = sadd.s32 %s34, 1
    %s36 = scalar_select %p33, %s34, %s35
    %p39 = pneg %p33
    %p40 = scmp.eq.s32.totalorder %s10, 1
    %p41 = por %p39, %p40
    %p42 = scmp.ne.s32.totalorder %s34, %s37
    %p43 = scmp.eq.s32.totalorder %s10, 0
    %p44 = por %p42, %p43
    %p45 = scmp.ne.s32.totalorder %s34, %s37
    %p46 = scmp.eq.s32.totalorder %s15, 1
    %p47 = por %p45, %p46
    %p48 = scmp.ne.s32.totalorder %s37, %s38
    %p49 = scmp.eq.s32.totalorder %s15, 0
    %p50 = por %p48, %p49
    %p51 = scmp.ne.s32.totalorder %s37, %s38
    %p52 = scmp.eq.s32.totalorder %s16, 1
    %p53 = por %p51, %p52
    %p55 = scmp.ne.s32.totalorder %s38, %s54
    %p56 = scmp.eq.s32.totalorder %s16, 0
    %p57 = por %p55, %p56
    %s59 = sadd.s32 %s58, 1
    %p62 = scmp.eq.s32.totalorder %s10, 1
    %p63 = scmp.ne.s32.totalorder %s58, %s60
    %p64 = scmp.eq.s32.totalorder %s10, 0
    %p65 = por %p63, %p64
    %p66 = scmp.ne.s32.totalorder %s58, %s60
    %p67 = scmp.eq.s32.totalorder %s15, 1
    %p68 = por %p66, %p67
    %p69 = scmp.ne.s32.totalorder %s60, %s61
    %p70 = scmp.eq.s32.totalorder %s15, 0
    %p71 = por %p69, %p70
    %p72 = scmp.ne.s32.totalorder %s60, %s61
    %p73 = scmp.eq.s32.totalorder %s16, 1
    %p74 = por %p72, %p73
    %p76 = scmp.ne.s32.totalorder %s61, %s75
    %p77 = scmp.eq.s32.totalorder %s16, 0
    %p78 = por %p76, %p77
    %s79 = ssub.s32 %s17, %s29
    %p80 = scmp.eq.s32.totalorder %s79, 0
    %s82 = sadd.s32 %s81, 1
    %s83 = scalar_select %p80, %s81, %s82
    %p86 = pneg %p80
    %p87 = scmp.eq.s32.totalorder %s10, 1
    %p88 = por %p86, %p87
    %p89 = scmp.ne.s32.totalorder %s81, %s84
    %p90 = scmp.eq.s32.totalorder %s10, 0
    %p91 = por %p89, %p90
    %p92 = scmp.ne.s32.totalorder %s81, %s84
    %p93 = scmp.eq.s32.totalorder %s15, 1
    %p94 = por %p92, %p93
    %p95 = scmp.ne.s32.totalorder %s84, %s85
    %p96 = scmp.eq.s32.totalorder %s15, 0
    %p97 = por %p95, %p96
    %p98 = scmp.ne.s32.totalorder %s84, %s85
    %p99 = scmp.eq.s32.totalorder %s16, 1
    %p100 = por %p98, %p99
    %p102 = scmp.ne.s32.totalorder %s85, %s101
    %p103 = scmp.eq.s32.totalorder %s16, 0
    %p104 = por %p102, %p103
    %s106 = sadd.s32 %s105, 1
    %p109 = scmp.eq.s32.totalorder %s10, 1
    %p110 = scmp.ne.s32.totalorder %s105, %s107
    %p111 = scmp.eq.s32.totalorder %s10, 0
    %p112 = por %p110, %p111
    %p113 = scmp.ne.s32.totalorder %s105, %s107
    %p114 = scmp.eq.s32.totalorder %s15, 1
    %p115 = por %p113, %p114
    %p116 = scmp.ne.s32.totalorder %s107, %s108
    %p117 = scmp.eq.s32.totalorder %s15, 0
    %p118 = por %p116, %p117
    %p119 = scmp.ne.s32.totalorder %s107, %s108
    %p120 = scmp.eq.s32.totalorder %s16, 1
    %p121 = por %p119, %p120
    %p123 = scmp.ne.s32.totalorder %s108, %s122
    %p124 = scmp.eq.s32.totalorder %s16, 0
    %p125 = por %p123, %p124
    %s126 = ssub.s32 %s17, %s29
    %p127 = scmp.eq.s32.totalorder %s126, 0
    %s129 = sadd.s32 %s128, 1
    %s130 = scalar_select %p127, %s128, %s129
    %p133 = pneg %p127
    %p134 = scmp.eq.s32.totalorder %s10, 1
    %p135 = por %p133, %p134
    %p136 = scmp.ne.s32.totalorder %s128, %s131
    %p137 = scmp.eq.s32.totalorder %s10, 0
    %p138 = por %p136, %p137
    %p139 = scmp.ne.s32.totalorder %s128, %s131
    %p140 = scmp.eq.s32.totalorder %s15, 1
    %p141 = por %p139, %p140
    %p142 = scmp.ne.s32.totalorder %s131, %s132
    %p143 = scmp.eq.s32.totalorder %s15, 0
    %p144 = por %p142, %p143
    %p145 = scmp.ne.s32.totalorder %s131, %s132
    %p146 = scmp.eq.s32.totalorder %s16, 1
    %p147 = por %p145, %p146
    %p149 = scmp.ne.s32.totalorder %s132, %s148
    %p150 = scmp.eq.s32.totalorder %s16, 0
    %p151 = por %p149, %p150
    %p152 = scmp.le.s32.totalorder 1, %s10
    %p153 = scmp.lt.s32.totalorder %s10, 3
    %p154 = pnand %p152, %p153
    %p155 = pneg %p154
    // Predicated region
    $region9: #{graph_autoencoder_forward.16} parent=5 // pred_check
      _
    $region10: #{graph_autoencoder_forward.16} parent=5 // pred_check_branch
      %157 = sbr.rel (%p154) target = $region12
    $region11: #{graph_autoencoder_forward.16} parent=5 // pred_region
      %s158 = ssub.s32 %s10, 1
      // Predicated region
      $region13: #{graph_autoencoder_forward.16} parent=11 // pred_check
        %p159 = pneg %p71
      $region14: #{graph_autoencoder_forward.16} parent=11 // pred_check_branch
        %161 = sbr.rel (%p159) target = $region16
      $region15: #{graph_autoencoder_forward.16} parent=11 // pred_region
        _
      $region16: #{graph_autoencoder_forward.16} parent=11 // pred_fallthru
        _
      // Predicated region
      $region17: #{graph_autoencoder_forward.16} parent=11 // pred_check
        %p162 = pneg %p118
      $region18: #{graph_autoencoder_forward.16} parent=11 // pred_check_branch
        %164 = sbr.rel (%p162) target = $region20
      $region19: #{graph_autoencoder_forward.16} parent=11 // pred_region
        _
      $region20: #{graph_autoencoder_forward.16} parent=11 // pred_fallthru
        _
    $region12: #{graph_autoencoder_forward.16} parent=5 // pred_fallthru
      _
    %p165 = scmp.lt.s32.totalorder %s10, 2
    // Predicated region
    $region21: #{graph_autoencoder_forward.16} parent=5 // pred_check
      %p166 = pneg %p165
    $region22: #{graph_autoencoder_forward.16} parent=5 // pred_check_branch
      %168 = sbr.rel (%p166) target = $region24
    $region23: #{graph_autoencoder_forward.16} parent=5 // pred_region
      // Predicated region
      $region25: #{graph_autoencoder_forward.16} parent=23 // pred_check
        %p169 = pneg %p44
      $region26: #{graph_autoencoder_forward.16} parent=23 // pred_check_branch
        %171 = sbr.rel (%p169) target = $region28
      $region27: #{graph_autoencoder_forward.16} parent=23 // pred_region
        %p172 = scmp.lt.s32.totalorder %s17, 1
        %s173 = scalar_select %p172, %s17, 1
        %p174 = scmp.lt.s32.totalorder %s18, 0
        %s175 = scalar_select %p174, %s18, 0
        %s176 = sadd.s32 %s175, %s173
        %s177 = smul.addr %s176, 4
        %s178 = scalar_lea.vmem %s0, %s177
      $region28: #{graph_autoencoder_forward.16} parent=23 // pred_fallthru
        _
      // Predicated region
      $region29: #{graph_autoencoder_forward.16} parent=23 // pred_check
        %p179 = pneg %p91
      $region30: #{graph_autoencoder_forward.16} parent=23 // pred_check_branch
        %181 = sbr.rel (%p179) target = $region32
      $region31: #{graph_autoencoder_forward.16} parent=23 // pred_region
        %p182 = scmp.lt.s32.totalorder %s17, 1
        %s183 = scalar_select %p182, %s17, 1
        %s184 = smul.addr %s183, 8
        %s185 = scalar_lea.vmem %s2, %s184
      $region32: #{graph_autoencoder_forward.16} parent=23 // pred_fallthru
        _
    $region24: #{graph_autoencoder_forward.16} parent=5 // pred_fallthru
      _
    %p186 = scmp.le.s32.totalorder 1, %s10
    %p187 = scmp.lt.s32.totalorder %s10, 3
    %p188 = pnand %p186, %p187
    %p189 = pneg %p188
    // Predicated region
    $region33: #{graph_autoencoder_forward.16} parent=5 // pred_check
      _
    $region34: #{graph_autoencoder_forward.16} parent=5 // pred_check_branch
      %191 = sbr.rel (%p188) target = $region36
    $region35: #{graph_autoencoder_forward.16} parent=5 // pred_region
      %s192 = ssub.s32 %s10, 1
      %p193 = scmp.lt.s32.totalorder %s19, 1
      %s194 = scalar_select %p193, %s19, 1
      %p195 = scmp.lt.s32.totalorder %s20, 0
      %s196 = scalar_select %p195, %s20, 0
      %s197 = sadd.s32 %s196, %s194
      %s198 = smul.addr %s197, 4
      %s199 = scalar_lea.vmem %s0, %s198
      %p200 = pneg %p50
      %p201 = pneg %p47
      %p202 = pneg %p71
      %p203 = pneg %p68
      %p204 = scmp.lt.s32.totalorder %s19, 1
      %s205 = scalar_select %p204, %s19, 1
      %s206 = smul.addr %s205, 8
      %s207 = scalar_lea.vmem %s2, %s206
      %p208 = pneg %p97
      %p209 = pneg %p94
      %p210 = pneg %p118
      %p211 = pneg %p115
      %p212 = pneg %p144
      %p213 = pneg %p141
      %p214 = scmp.lt.s32.totalorder %s19, 1
      %s215 = scalar_select %p214, %s19, 1
      %s216 = smul.addr %s215, 8
      %s217 = scalar_lea.vmem %s4, %s216
      %p218 = scmp.lt.s32.totalorder %s19, 1
      %s219 = scalar_select %p218, %s19, 1
      %p220 = scmp.lt.s32.totalorder %s20, 0
      %s221 = scalar_select %p220, %s20, 0
      %s222 = sadd.s32 %s221, %s219
      %s223 = smul.addr %s222, 4
      %s224 = scalar_lea.vmem %s0, %s223
      %p225 = scmp.lt.s32.totalorder %s19, 1
      %s226 = scalar_select %p225, %s19, 1
      %s227 = smul.addr %s226, 8
      %s228 = scalar_lea.vmem %s2, %s227
      %p229 = scmp.lt.s32.totalorder %s19, 1
      %s230 = scalar_select %p229, %s19, 1
      %s231 = smul.addr %s230, 8
      %s232 = scalar_lea.vmem %s4, %s231
      %p234 = scmp.eq.s32.totalorder %s20, 0
      // Predicated region
      $region37: #{graph_autoencoder_forward.16} parent=35 // pred_check
        %p235 = pneg %p234
      $region38: #{graph_autoencoder_forward.16} parent=35 // pred_check_branch
        %237 = sbr.rel (%p235) target = $region40
      $region39: #{graph_autoencoder_forward.16} parent=35 // pred_region
        %238 = vst [vmem:[#allocation2] sm:$0xff] 0.0
      $region40: #{graph_autoencoder_forward.16} parent=35 // pred_fallthru
        _
      %s239 = smul.u32 %s20, 16
      %s240 = sshra.s32 %s239, 3
      %s241 = sand.u32 %s239, 7
      %s242 = smul.addr %s240, 4
      %s243 = scalar_lea.vmem %s1, %s242
      %v244 = vld [vmem:[%s243] sm:$0xf]
      %v245 = vld [vmem:[%s243 + $0x4] sm:$0xf]
      %v246 = vld [vmem:[#allocation2] sm:$0xff]
      %v247 = vld [vmem:[%s224] sm:$0xf]
      %v250 = vunpack.c.l.b16 %v244
      %v251 = vunpack.c.l.b16 %v245
      %v252 = vpack.c.b16 %v251, %v250
      %vm254 = vcmask 130048
      %v256 = vsel %vm254, %v247, 0
      %258 = vmatprep.subr.bf16.mxu0 0
      %259 = vmatpush1.bf16.msra.mxu0 %v252
      %260 = vmatprep.subr.bf16.mxu0 0
      %261 = vmatpush1.bf16.msra.mxu0 0
      %262 = vmatprep.subr.bf16.mxu0 0
      %263 = vmatpush1.bf16.msra.mxu0 0
      %264 = vmatprep.subr.bf16.mxu0 0
      %265 = vmatpush1.bf16.msra.mxu0 0
      %266 = vmatprep.subr.bf16.mxu0 0
      %267 = vmatpush1.bf16.msra.mxu0 0
      %268 = vmatprep.subr.bf16.mxu0 0
      %269 = vmatpush1.bf16.msra.mxu0 0
      %270 = vmatprep.subr.bf16.mxu0 0
      %271 = vmatpush1.bf16.msra.mxu0 0
      %272 = vmatprep.subr.bf16.mxu0 0
      %273 = vmatpush1.bf16.msra.mxu0 0
      %274 = vmatprep.subr.bf16.mxu0 0
      %275 = vmatpush1.bf16.msra.mxu0 0
      %276 = vmatprep.subr.bf16.mxu0 0
      %277 = vmatpush1.bf16.msra.mxu0 0
      %278 = vmatprep.subr.bf16.mxu0 0
      %279 = vmatpush1.bf16.msra.mxu0 0
      %280 = vmatprep.subr.bf16.mxu0 0
      %281 = vmatpush1.bf16.msra.mxu0 0
      %282 = vmatprep.subr.bf16.mxu0 0
      %283 = vmatpush1.bf16.msra.mxu0 0
      %284 = vmatprep.subr.bf16.mxu0 0
      %285 = vmatpush1.bf16.msra.mxu0 0
      %286 = vmatprep.subr.bf16.mxu0 0
      %287 = vmatpush1.bf16.msra.mxu0 0
      %288 = vmatprep.subr.bf16.mxu0 0
      %289 = vmatpush1.bf16.msra.mxu0 0
      %290 = vmatprep.mubr.bf16.mxu0 0
      %291 = vmatmul.mubr.bf16.gmra.mrb[0].mxu0 %v256
      %v292 = vpop.f32.mrb[0].mxu0
      %v293 = vadd.f32 0.0, %v292
      %v294 = vpop.f32.mrb[0].mxu0
      %v295 = vpop.f32.mrb[0].mxu0
      %v296 = vpop.f32.mrb[0].mxu0
      %297 = vdwg.mxu0
      %v298 = vadd.f32 %v246, %v293
      %299 = vst [vmem:[#allocation2] sm:$0xff] %v298
      // Predicated region
      $region41: #{graph_autoencoder_forward.16} parent=35 // pred_check
        %p300 = pneg %p234
      $region42: #{graph_autoencoder_forward.16} parent=35 // pred_check_branch
        %302 = sbr.rel (%p300) target = $region44
      $region43: #{graph_autoencoder_forward.16} parent=35 // pred_region
        %v303 = vld [vmem:[%s228] sm:$0xff]
        %v304 = vld [vmem:[#allocation2] sm:$0xff]
        %306 = vset.pattern.permute.xlu0 0
        %307 = vperm.xlu0 %306, %v303
        %v308 = vpop.permute.xlu0 %307
        %v310 = vmul.f32 %v308, %v304
        %v311 = vld [vmem:[%s3] sm:$0x1]
        %v313 = vlaneseq
        %v314 = vshrl.u32 %v313, 7
        %v315 = vsub.s32 0, %v314
        %v316 = vrot.slane %v311, %v315
        %v318 = vadd.f32 %v310, %v316
        %319 = vst [vmem:[%s232] sm:$0xff] %v318
      $region44: #{graph_autoencoder_forward.16} parent=35 // pred_fallthru
        _
      %p320 = scmp.lt.s32.totalorder %s19, 1
      %s321 = scalar_select %p320, %s19, 1
      %s322 = smul.addr %s321, 8
      %s323 = scalar_lea.vmem %s4, %s322
      // Predicated region
      $region45: #{graph_autoencoder_forward.16} parent=35 // pred_check
        %p324 = pneg %p141
      $region46: #{graph_autoencoder_forward.16} parent=35 // pred_check_branch
        %326 = sbr.rel (%p324) target = $region48
      $region47: #{graph_autoencoder_forward.16} parent=35 // pred_region
        _
      $region48: #{graph_autoencoder_forward.16} parent=35 // pred_fallthru
        _
    $region36: #{graph_autoencoder_forward.16} parent=5 // pred_fallthru
      _
    %p327 = scmp.le.s32.totalorder 2, %s10
    // Predicated region
    $region49: #{graph_autoencoder_forward.16} parent=5 // pred_check
      %p328 = pneg %p327
    $region50: #{graph_autoencoder_forward.16} parent=5 // pred_check_branch
      %330 = sbr.rel (%p328) target = $region52
    $region51: #{graph_autoencoder_forward.16} parent=5 // pred_region
      %s331 = ssub.s32 %s10, 2
      // Predicated region
      $region53: #{graph_autoencoder_forward.16} parent=51 // pred_check
        %p332 = pneg %p147
      $region54: #{graph_autoencoder_forward.16} parent=51 // pred_check_branch
        %334 = sbr.rel (%p332) target = $region56
      $region55: #{graph_autoencoder_forward.16} parent=51 // pred_region
        %p335 = scmp.lt.s32.totalorder %s21, 1
        %s336 = scalar_select %p335, %s21, 1
        %s337 = smul.addr %s336, 8
        %s338 = scalar_lea.vmem %s4, %s337
      $region56: #{graph_autoencoder_forward.16} parent=51 // pred_fallthru
        _
    $region52: #{graph_autoencoder_forward.16} parent=5 // pred_fallthru
      _
  $region6: #{graph_autoencoder_forward.16} parent=0 // loop_footer
    %s14 = sadd.s32 1, %s10
  $region7: #{graph_autoencoder_forward.16} parent=0 // loop_footer_branch
    %9 = sbr.rel target = $region3
  $region8: #{graph_autoencoder_forward.16} parent=0 // loop_exit
    _

</llo_original>
